<compile_context>
chip_gen: v7x
topology: tpu7x:2x2x1
jax: 0.10.0
libtpu: 0.0.40
codegen_flags: <defaults>
</compile_context>

<pallas_src>
import functools
import math

import jax
import jax.numpy as jnp
from jax import lax
from jax.experimental import pallas as pl
from jax.experimental.pallas import tpu as pltpu


NEG_INF = -1e30          # finite "minus infinity" -> no NaNs on masked rows
LN_EPS = 1e-5            # PyTorch nn.LayerNorm default
_VMEM_LIMIT = 32 * 1024 * 1024   # safe scoped-VMEM budget on v5e/v6e/v7x


def _round_up(x, m):
    return (x + m - 1) // m * m


def _pad2d(a, rows, cols):
    r, c = a.shape
    if r == rows and c == cols:
        return a
    return jnp.pad(a, ((0, rows - r), (0, cols - c)))


def _gelu_tanh(x):
    # TODO(synk): PyTorch nn.GELU() is the exact erf form; tanh approximation
    # is used in-kernel because erf lowering in Mosaic is not guaranteed
    # (max abs deviation ~1e-3, covered by the self-check tolerance).
    c = math.sqrt(2.0 / math.pi)
    return 0.5 * x * (1.0 + jnp.tanh(c * (x + 0.044715 * x * x * x)))


# --------------------------- tiled linear (MXU) ----------------------------- #

def _make_linear_kernel(has_residual, activation):
    def kernel(*refs):
        if has_residual:
            x_ref, w_ref, b_ref, r_ref, o_ref, acc_ref = refs
        else:
            x_ref, w_ref, b_ref, o_ref, acc_ref = refs
            r_ref = None
        k = pl.program_id(2)

        @pl.when(k == 0)
        def _init():
            acc_ref[...] = jnp.zeros_like(acc_ref)

        # bf16 x bf16 -> fp32 accumulate on the MXU
        acc_ref[...] += jnp.dot(x_ref[...], w_ref[...],
                                preferred_element_type=jnp.float32)

        @pl.when(k == pl.num_programs(2) - 1)
        def _finalize():
            out = acc_ref[...] + b_ref[...]
            if activation == "gelu":
                out = _gelu_tanh(out)
            if r_ref is not None:
                out = out + r_ref[...]
            o_ref[...] = out.astype(o_ref.dtype)

    return kernel


def linear(x, w, b, *, residual=None, activation=None,
           out_dtype=jnp.float32, tm=256, tk=512, tn=256):
    """out = activation(x @ w + b) [+ residual], tiled & pipelined.

    x: (M, K), w: (K, N), b: (N,).  Inputs are fed to the MXU as bfloat16;
    bias, residual and accumulation stay fp32.
    """
    M, K = x.shape
    Kw, N = w.shape
    assert K == Kw
    # bf16 blocks: keep sublane dims multiples of 16, lane dims multiples of 128
    tm = min(tm, _round_up(M, 16))
    tk = min(tk, _round_up(K, 128))
    tn = min(tn, _round_up(N, 128))
    Mp, Kp, Np = _round_up(M, tm), _round_up(K, tk), _round_up(N, tn)

    x_p = _pad2d(x.astype(jnp.bfloat16), Mp, Kp)
    w_p = _pad2d(w.astype(jnp.bfloat16), Kp, Np)
    b_p = _pad2d(b.reshape(1, N).astype(jnp.float32), 1, Np)

    inputs = [x_p, w_p, b_p]
    in_specs = [
        pl.BlockSpec((tm, tk), lambda i, j, k: (i, k)),
        pl.BlockSpec((tk, tn), lambda i, j, k: (k, j)),
        pl.BlockSpec((1, tn), lambda i, j, k: (0, j)),
    ]
    if residual is not None:
        inputs.append(_pad2d(residual.astype(jnp.float32), Mp, Np))
        in_specs.append(pl.BlockSpec((tm, tn), lambda i, j, k: (i, j)))

    out = pl.pallas_call(
        _make_linear_kernel(residual is not None, activation),
        out_shape=jax.ShapeDtypeStruct((Mp, Np), out_dtype),
        grid=(Mp // tm, Np // tn, Kp // tk),
        in_specs=in_specs,
        out_specs=pl.BlockSpec((tm, tn), lambda i, j, k: (i, j)),
        scratch_shapes=[pltpu.VMEM((tm, tn), jnp.float32)],
        compiler_params=pltpu.CompilerParams(
            dimension_semantics=("parallel", "parallel", "arbitrary"),
            vmem_limit_bytes=_VMEM_LIMIT),
    )(*inputs)
    if Mp != M or Np != N:
        out = out[:M, :N]
    return out


# -------------------------------- LayerNorm --------------------------------- #

def _layer_norm_kernel(x_ref, g_ref, b_ref, o_ref):
    x = x_ref[...].astype(jnp.float32)
    mu = jnp.mean(x, axis=-1, keepdims=True)
    xc = x - mu
    var = jnp.mean(xc * xc, axis=-1, keepdims=True)
    inv = lax.rsqrt(var + LN_EPS)
    o_ref[...] = (xc * inv * g_ref[...] + b_ref[...]).astype(o_ref.dtype)


def layer_norm(x, gamma, beta, *, out_dtype=jnp.float32, tr=256):
    M, D = x.shape
    tr = min(tr, _round_up(M, 16))
    Mp = _round_up(M, tr)
    x_p = _pad2d(x, Mp, D)
    out = pl.pallas_call(
        _layer_norm_kernel,
        out_shape=jax.ShapeDtypeStruct((Mp, D), out_dtype),
        grid=(Mp // tr,),
        in_specs=[pl.BlockSpec((tr, D), lambda i: (i, 0)),
                  pl.BlockSpec((1, D), lambda i: (0, 0)),
                  pl.BlockSpec((1, D), lambda i: (0, 0))],
        out_specs=pl.BlockSpec((tr, D), lambda i: (i, 0)),
        compiler_params=pltpu.CompilerParams(
            dimension_semantics=("parallel",),
            vmem_limit_bytes=_VMEM_LIMIT),
    )(x_p, gamma.reshape(1, D), beta.reshape(1, D))
    return out[:M] if Mp != M else out


# ------------------------- flash causal attention ---------------------------- #

def _make_flash_kernel(num_heads, head_dim, scale, tq):
    def kernel(q_ref, k_ref, v_ref, o_ref, m_ref, l_ref, acc_ref):
        qi = pl.program_id(1)
        ki = pl.program_id(2)

        @pl.when(ki == 0)
        def _init():
            m_ref[...] = jnp.full_like(m_ref, NEG_INF)
            l_ref[...] = jnp.zeros_like(l_ref)
            acc_ref[...] = jnp.zeros_like(acc_ref)

        @pl.when(ki <= qi)               # skip fully-masked kv blocks (causal)
        def _compute():
            q = q_ref[0]                 # (tq, D)  bf16
            k = k_ref[0]                 # (tkv, D) bf16
            v = v_ref[0]                 # (tkv, D) bf16
            # block-local mask (all-true on strictly sub-diagonal blocks)
            row = qi * tq + lax.broadcasted_iota(jnp.int32, (tq, tq), 0)
            col = ki * tq + lax.broadcasted_iota(jnp.int32, (tq, tq), 1)
            allowed = col <= row
            for h in range(num_heads):
                sl = slice(h * head_dim, (h + 1) * head_dim)
                s = lax.dot_general(
                    q[:, sl], k[:, sl], (((1,), (1,)), ((), ())),
                    preferred_element_type=jnp.float32) * scale
                s = jnp.where(allowed, s, NEG_INF)
                m_prev = m_ref[h]                                 # (tq, 1)
                m_new = jnp.maximum(m_prev,
                                    jnp.max(s, axis=-1, keepdims=True))
                alpha = jnp.exp(m_prev - m_new)
                p = jnp.exp(s - m_new)
                l_ref[h] = alpha * l_ref[h] + jnp.sum(p, axis=-1, keepdims=True)
                acc_ref[h] = alpha * acc_ref[h] + jnp.dot(
                    p.astype(v.dtype), v[:, sl],
                    preferred_element_type=jnp.float32)
                m_ref[h] = m_new

        @pl.when(ki == pl.num_programs(2) - 1)
        def _finalize():
            for h in range(num_heads):
                inv = pl.reciprocal(l_ref[h], approx=True)   # EUP slot, ~free
                o_ref[0, :, h * head_dim:(h + 1) * head_dim] = (
                    acc_ref[h] * inv).astype(o_ref.dtype)

    return kernel


def causal_attention(q, k, v, num_heads):
    """q, k, v: (B, T, D) bf16 -> (B, T, D) bf16 causal attention output."""
    B, T, D = q.shape
    assert D % num_heads == 0
    head_dim = D // num_heads
    scale = 1.0 / math.sqrt(head_dim)

    tq = min(128, _round_up(T, 16))
    Tp = _round_up(T, tq)
    if Tp != T:
        pad = ((0, 0), (0, Tp - T), (0, 0))
        q, k, v = jnp.pad(q, pad), jnp.pad(k, pad), jnp.pad(v, pad)
    nblk = Tp // tq

    q_spec = pl.BlockSpec((1, tq, D), lambda b, i, j: (b, i, 0))
    kv_spec = pl.BlockSpec((1, tq, D), lambda b, i, j: (b, j, 0))

    out = pl.pallas_call(
        _make_flash_kernel(num_heads, head_dim, scale, tq),
        out_shape=jax.ShapeDtypeStruct((B, Tp, D), jnp.bfloat16),
        grid=(B, nblk, nblk),
        in_specs=[q_spec, kv_spec, kv_spec],
        out_specs=q_spec,
        scratch_shapes=[pltpu.VMEM((num_heads, tq, 1), jnp.float32),
                        pltpu.VMEM((num_heads, tq, 1), jnp.float32),
                        pltpu.VMEM((num_heads, tq, head_dim), jnp.float32)],
        compiler_params=pltpu.CompilerParams(
            dimension_semantics=("parallel", "parallel", "arbitrary"),
            vmem_limit_bytes=_VMEM_LIMIT),
    )(q, k, v)
    return out[:, :T, :] if Tp != T else out


# ----------------------------- full Transformer ------------------------------ #

def transformer_forward(idx, params, num_heads):
    B, T = idx.shape
    D = params["tok_emb"].shape[1]

    # Embedding gathers in plain JAX (integer gather); dropout == identity (eval)
    x = params["tok_emb"][idx] + params["pos_emb"][:T][None, :, :]   # (B,T,D) f32
    x2 = x.reshape(B * T, D)

    for blk in params["blocks"]:
        # ---- attention sub-block: x = x + Wo . attn(ln1(x)) ----
        h = layer_norm(x2, blk["ln1_scale"], blk["ln1_bias"],
                       out_dtype=jnp.bfloat16)
        q = linear(h, blk["wq"], blk["bq"], out_dtype=jnp.bfloat16)
        k = linear(h, blk["wk"], blk["bk"], out_dtype=jnp.bfloat16)
        v = linear(h, blk["wv"], blk["bv"], out_dtype=jnp.bfloat16)
        attn = causal_attention(q.reshape(B, T, D), k.reshape(B, T, D),
                                v.reshape(B, T, D), num_heads)
        x2 = linear(attn.reshape(B * T, D), blk["wo"], blk["bo"],
                    residual=x2)                          # fused residual add

        # ---- MLP sub-block: x = x + W2 . gelu(W1 . ln2(x)) ----
        h2 = layer_norm(x2, blk["ln2_scale"], blk["ln2_bias"],
                        out_dtype=jnp.bfloat16)
        ff = linear(h2, blk["w_fc1"], blk["b_fc1"], activation="gelu",
                    out_dtype=jnp.bfloat16)               # fused GELU epilogue
        x2 = linear(ff, blk["w_fc2"], blk["b_fc2"], residual=x2)

    xf = layer_norm(x2, params["ln_f_scale"], params["ln_f_bias"])
    logits = linear(xf, params["w_head"], params["b_head"])
    vocab = params["w_head"].shape[1]
    return logits.reshape(B, T, vocab)


def init_params(key, vocab_size, model_dim, num_layers, max_seq_len):
    """Mimics Transformer._init_weights: N(0, 0.02) weights, zero biases,
    LayerNorm scale=1 / bias=0.  Weights stored as (in, out) so y = x @ W + b."""
    std = 0.02
    keys = jax.random.split(key, 3 + num_layers)

    def w(k, shape):
        return jax.random.normal(k, shape, jnp.float32) * std

    params = {
        "tok_emb": w(keys[0], (vocab_size, model_dim)),
        "pos_emb": w(keys[1], (max_seq_len, model_dim)),
        "ln_f_scale": jnp.ones((model_dim,), jnp.float32),
        "ln_f_bias": jnp.zeros((model_dim,), jnp.float32),
        "w_head": w(keys[2], (model_dim, vocab_size)),
        "b_head": jnp.zeros((vocab_size,), jnp.float32),
    }
    blocks = []
    for l in range(num_layers):
        bks = jax.random.split(keys[3 + l], 4)
        w_qkv = w(bks[0], (model_dim, 3 * model_dim))   # fused qkv Linear ...
        wq, wk, wv = jnp.split(w_qkv, 3, axis=1)        # ... split per tensor
        blocks.append({
            "ln1_scale": jnp.ones((model_dim,), jnp.float32),
            "ln1_bias": jnp.zeros((model_dim,), jnp.float32),
            "wq": wq, "wk": wk, "wv": wv,
            "bq": jnp.zeros((model_dim,), jnp.float32),
            "bk": jnp.zeros((model_dim,), jnp.float32),
            "bv": jnp.zeros((model_dim,), jnp.float32),
            "wo": w(bks[1], (model_dim, model_dim)),
            "bo": jnp.zeros((model_dim,), jnp.float32),
            "ln2_scale": jnp.ones((model_dim,), jnp.float32),
            "ln2_bias": jnp.zeros((model_dim,), jnp.float32),
            "w_fc1": w(bks[2], (model_dim, 4 * model_dim)),
            "b_fc1": jnp.zeros((4 * model_dim,), jnp.float32),
            "w_fc2": w(bks[3], (4 * model_dim, model_dim)),
            "b_fc2": jnp.zeros((model_dim,), jnp.float32),
        })
    params["blocks"] = blocks
    return params


# ------------------------------ pure-JAX reference --------------------------- #

def reference_forward(idx, params, num_heads):
    B, T = idx.shape
    D = params["tok_emb"].shape[1]
    Hd = D // num_heads

    def ln(x, g, b):
        mu = jnp.mean(x, axis=-1, keepdims=True)
        var = jnp.mean((x - mu) ** 2, axis=-1, keepdims=True)
        return (x - mu) / jnp.sqrt(var + LN_EPS) * g + b

    x = params["tok_emb"][idx] + params["pos_emb"][:T][None, :, :]
    for blk in params["blocks"]:
        h = ln(x, blk["ln1_scale"], blk["ln1_bias"])
        q = h @ blk["wq"] + blk["bq"]
        k = h @ blk["wk"] + blk["bk"]
        v = h @ blk["wv"] + blk["bv"]
        q = q.reshape(B, T, num_heads, Hd).transpose(0, 2, 1, 3)
        k = k.reshape(B, T, num_heads, Hd).transpose(0, 2, 1, 3)
        v = v.reshape(B, T, num_heads, Hd).transpose(0, 2, 1, 3)
        s = jnp.einsum("bhqd,bhkd->bhqk", q, k) / math.sqrt(Hd)
        mask = jnp.tril(jnp.ones((T, T), dtype=bool))
        s = jnp.where(mask[None, None], s, -jnp.inf)
        p = jax.nn.softmax(s, axis=-1)
        o = jnp.einsum("bhqk,bhkd->bhqd", p, v)
        o = o.transpose(0, 2, 1, 3).reshape(B, T, D)
        x = x + (o @ blk["wo"] + blk["bo"])
        h2 = ln(x, blk["ln2_scale"], blk["ln2_bias"])
        f = jax.nn.gelu(h2 @ blk["w_fc1"] + blk["b_fc1"], approximate=False)
        x = x + (f @ blk["w_fc2"] + blk["b_fc2"])
    x = ln(x, params["ln_f_scale"], params["ln_f_bias"])
    return x @ params["w_head"] + params["b_head"]


# ------------------------------------ main ----------------------------------- #

if __name__ == "__main__":
    VOCAB, MODEL_DIM, NUM_LAYERS, NUM_HEADS, MAX_SEQ = 128, 64, 2, 4, 32
    B, T = 2, 16

    root = jax.random.PRNGKey(0)
    k_param, k_idx = jax.random.split(root)
    params = init_params(k_param, VOCAB, MODEL_DIM, NUM_LAYERS, MAX_SEQ)
    idx = jax.random.randint(k_idx, (B, T), 0, VOCAB, dtype=jnp.int32)

    fwd = jax.jit(functools.partial(transformer_forward, num_heads=NUM_HEADS))
    logits = jax.block_until_ready(fwd(idx, params))

    ref = reference_forward(idx, params, NUM_HEADS)
    assert logits.shape == (B, T, VOCAB)
    assert bool(jnp.all(jnp.isfinite(logits)))
    # bf16 MXU matmuls + tanh-GELU + approx reciprocal vs. fp32/erf reference
    assert jnp.allclose(logits, ref, atol=2e-2, rtol=2e-2), (
        "mismatch vs reference, max abs err = "
        f"{float(jnp.max(jnp.abs(logits - ref)))}")

    print("KERNEL_OK")
</pallas_src>

<mosaic_0001>
module attributes {stable_mosaic.version = 11 : i64} {
  func.func @_layer_norm_kernel(%arg0: i32, %arg1: memref<32x64xf32, #tpu.memory_space<vmem>>, %arg2: memref<1x64xf32, #tpu.memory_space<vmem>>, %arg3: memref<1x64xf32, #tpu.memory_space<vmem>>, %arg4: memref<32x64xbf16, #tpu.memory_space<vmem>>) attributes {dimension_semantics = [#tpu.dimension_semantics<parallel>], iteration_bounds = array<i64: 1>, scalar_prefetch = 0 : i64, scratch_operands = 0 : i64, tpu.core_type = #tpu.core_type<tc>, window_params = [{transform_indices = @transform_0, window_bounds = array<i64: 32, 64>}, {pipeline_mode = #tpu.pipeline_mode<synchronous>, transform_indices = @transform_1, window_bounds = array<i64: 1, 64>}, {pipeline_mode = #tpu.pipeline_mode<synchronous>, transform_indices = @transform_2, window_bounds = array<i64: 1, 64>}, {transform_indices = @transform_3, window_bounds = array<i64: 32, 64>}]} {
    %c0 = arith.constant 0 : index
    %c0_0 = arith.constant 0 : index
    %0 = vector.load %arg1[%c0, %c0_0] : memref<32x64xf32, #tpu.memory_space<vmem>>, vector<32x64xf32>
    %cst = arith.constant dense<0.000000e+00> : vector<32xf32>
    %1 = vector.multi_reduction <add>, %0, %cst [1] : vector<32x64xf32> to vector<32xf32>
    %2 = vector.shape_cast %1 : vector<32xf32> to vector<32x1xf32>
    %cst_1 = arith.constant 6.400000e+01 : f32
    %3 = vector.broadcast %cst_1 : f32 to vector<32x1xf32>
    %4 = arith.divf %2, %3 : vector<32x1xf32>
    %5 = vector.broadcast %4 : vector<32x1xf32> to vector<32x64xf32>
    %6 = arith.subf %0, %5 : vector<32x64xf32>
    %7 = arith.mulf %6, %6 : vector<32x64xf32>
    %cst_2 = arith.constant dense<0.000000e+00> : vector<32xf32>
    %8 = vector.multi_reduction <add>, %7, %cst_2 [1] : vector<32x64xf32> to vector<32xf32>
    %9 = vector.shape_cast %8 : vector<32xf32> to vector<32x1xf32>
    %cst_3 = arith.constant 6.400000e+01 : f32
    %10 = vector.broadcast %cst_3 : f32 to vector<32x1xf32>
    %11 = arith.divf %9, %10 : vector<32x1xf32>
    %cst_4 = arith.constant 9.99999974E-6 : f32
    %12 = vector.broadcast %cst_4 : f32 to vector<32x1xf32>
    %13 = arith.addf %11, %12 : vector<32x1xf32>
    %14 = math.rsqrt %13 : vector<32x1xf32>
    %15 = vector.broadcast %14 : vector<32x1xf32> to vector<32x64xf32>
    %16 = arith.mulf %6, %15 : vector<32x64xf32>
    %c0_5 = arith.constant 0 : index
    %c0_6 = arith.constant 0 : index
    %17 = vector.load %arg2[%c0_5, %c0_6] : memref<1x64xf32, #tpu.memory_space<vmem>>, vector<1x64xf32>
    %18 = vector.broadcast %17 : vector<1x64xf32> to vector<32x64xf32>
    %19 = arith.mulf %16, %18 : vector<32x64xf32>
    %c0_7 = arith.constant 0 : index
    %c0_8 = arith.constant 0 : index
    %20 = vector.load %arg3[%c0_7, %c0_8] : memref<1x64xf32, #tpu.memory_space<vmem>>, vector<1x64xf32>
    %21 = vector.broadcast %20 : vector<1x64xf32> to vector<32x64xf32>
    %22 = arith.addf %19, %21 : vector<32x64xf32>
    %23 = arith.truncf %22 : vector<32x64xf32> to vector<32x64xbf16>
    %c0_9 = arith.constant 0 : index
    %c0_10 = arith.constant 0 : index
    %24 = vector.load %arg4[%c0_9, %c0_10] : memref<32x64xbf16, #tpu.memory_space<vmem>>, vector<32x64xbf16>
    tpu.vector_store %arg4[%c0_9, %c0_10], %23 {strides = array<i32>} : memref<32x64xbf16, #tpu.memory_space<vmem>>, vector<32x64xbf16>,
    return
  }
  func.func @transform_0(%arg0: i32) -> (i32, i32) {
    %c0_i32 = arith.constant 0 : i32
    %c0_i32_0 = arith.constant 0 : i32
    return %arg0, %c0_i32 : i32, i32
  }
  func.func @transform_1(%arg0: i32) -> (i32, i32) {
    %c0_i32 = arith.constant 0 : i32
    %c0_i32_0 = arith.constant 0 : i32
    %c0_i32_1 = arith.constant 0 : i32
    return %c0_i32, %c0_i32_0 : i32, i32
  }
  func.func @transform_2(%arg0: i32) -> (i32, i32) {
    %c0_i32 = arith.constant 0 : i32
    %c0_i32_0 = arith.constant 0 : i32
    %c0_i32_1 = arith.constant 0 : i32
    return %c0_i32, %c0_i32_0 : i32, i32
  }
  func.func @transform_3(%arg0: i32) -> (i32, i32) {
    %c0_i32 = arith.constant 0 : i32
    %c0_i32_0 = arith.constant 0 : i32
    return %arg0, %c0_i32 : i32, i32
  }
}

module attributes {stable_mosaic.version = 11 : i64} {
  func.func @kernel(%arg0: i32, %arg1: i32, %arg2: i32, %arg3: memref<32x128xbf16, #tpu.memory_space<vmem>>, %arg4: memref<128x128xbf16, #tpu.memory_space<vmem>>, %arg5: memref<1x128xf32, #tpu.memory_space<vmem>>, %arg6: memref<32x128xbf16, #tpu.memory_space<vmem>>, %arg7: memref<32x128xf32, #tpu.memory_space<vmem>>) attributes {dimension_semantics = [#tpu.dimension_semantics<parallel>, #tpu.dimension_semantics<parallel>, #tpu.dimension_semantics<arbitrary>], iteration_bounds = array<i64: 1, 1, 1>, scalar_prefetch = 0 : i64, scratch_operands = 1 : i64, tpu.core_type = #tpu.core_type<tc>, window_params = [{transform_indices = @transform_0, window_bounds = array<i64: 32, 128>}, {transform_indices = @transform_1, window_bounds = array<i64: 128, 128>}, {transform_indices = @transform_2, window_bounds = array<i64: 1, 128>}, {transform_indices = @transform_3, window_bounds = array<i64: 32, 128>}]} {
    %c0_i32 = arith.constant 0 : i32
    %0 = arith.cmpi eq, %arg2, %c0_i32 : i32
    %1 = arith.extui %0 : i1 to i32
    %c0_i32_0 = arith.constant 0 : i32
    %2 = arith.cmpi ne, %1, %c0_i32_0 : i32
    scf.if %2 {
      %cst_10 = arith.constant 0.000000e+00 : f32
      %12 = vector.broadcast %cst_10 : f32 to vector<32x128xf32>
      %c0_11 = arith.constant 0 : index
      %c0_12 = arith.constant 0 : index
      %13 = vector.load %arg7[%c0_11, %c0_12] : memref<32x128xf32, #tpu.memory_space<vmem>>, vector<32x128xf32>
      tpu.vector_store %arg7[%c0_11, %c0_12], %12 {strides = array<i32>} : memref<32x128xf32, #tpu.memory_space<vmem>>, vector<32x128xf32>,
    } else {
    }
    %c0 = arith.constant 0 : index
    %c0_1 = arith.constant 0 : index
    %3 = vector.load %arg7[%c0, %c0_1] : memref<32x128xf32, #tpu.memory_space<vmem>>, vector<32x128xf32>
    %c0_2 = arith.constant 0 : index
    %c0_3 = arith.constant 0 : index
    %4 = vector.load %arg3[%c0_2, %c0_3] : memref<32x128xbf16, #tpu.memory_space<vmem>>, vector<32x128xbf16>
    %c0_4 = arith.constant 0 : index
    %c0_5 = arith.constant 0 : index
    %5 = vector.load %arg4[%c0_4, %c0_5] : memref<128x128xbf16, #tpu.memory_space<vmem>>, vector<128x128xbf16>
    %cst = arith.constant dense<0.000000e+00> : vector<32x128xf32>
    %6 = tpu.matmul %4, %5, %cst {dimension_numbers = #tpu.dot_dimension_numbers<[1], [0], [0], [1], [0, 0, 1, 1], [], []>} : vector<32x128xbf16>, vector<128x128xbf16>, vector<32x128xf32> -> vector<32x128xf32>
    %7 = arith.addf %3, %6 : vector<32x128xf32>
    %c0_6 = arith.constant 0 : index
    %c0_7 = arith.constant 0 : index
    %8 = vector.load %arg7[%c0_6, %c0_7] : memref<32x128xf32, #tpu.memory_space<vmem>>, vector<32x128xf32>
    tpu.vector_store %arg7[%c0_6, %c0_7], %7 {strides = array<i32>} : memref<32x128xf32, #tpu.memory_space<vmem>>, vector<32x128xf32>,
    %c0_i32_8 = arith.constant 0 : i32
    %9 = arith.cmpi eq, %arg2, %c0_i32_8 : i32
    %10 = arith.extui %9 : i1 to i32
    %c0_i32_9 = arith.constant 0 : i32
    %11 = arith.cmpi ne, %10, %c0_i32_9 : i32
    scf.if %11 {
      %c0_10 = arith.constant 0 : index
      %c0_11 = arith.constant 0 : index
      %12 = vector.load %arg7[%c0_10, %c0_11] : memref<32x128xf32, #tpu.memory_space<vmem>>, vector<32x128xf32>
      %c0_12 = arith.constant 0 : index
      %c0_13 = arith.constant 0 : index
      %13 = vector.load %arg5[%c0_12, %c0_13] : memref<1x128xf32, #tpu.memory_space<vmem>>, vector<1x128xf32>
      %14 = vector.broadcast %13 : vector<1x128xf32> to vector<32x128xf32>
      %15 = arith.addf %12, %14 : vector<32x128xf32>
      %16 = arith.truncf %15 : vector<32x128xf32> to vector<32x128xbf16>
      %c0_14 = arith.constant 0 : index
      %c0_15 = arith.constant 0 : index
      %17 = vector.load %arg6[%c0_14, %c0_15] : memref<32x128xbf16, #tpu.memory_space<vmem>>, vector<32x128xbf16>
      tpu.vector_store %arg6[%c0_14, %c0_15], %16 {strides = array<i32>} : memref<32x128xbf16, #tpu.memory_space<vmem>>, vector<32x128xbf16>,
    } else {
    }
    return
  }
  func.func @transform_0(%arg0: i32, %arg1: i32, %arg2: i32) -> (i32, i32) {
    %c0_i32 = arith.constant 0 : i32
    return %arg0, %arg2 : i32, i32
  }
  func.func @transform_1(%arg0: i32, %arg1: i32, %arg2: i32) -> (i32, i32) {
    %c0_i32 = arith.constant 0 : i32
    return %arg2, %arg1 : i32, i32
  }
  func.func @transform_2(%arg0: i32, %arg1: i32, %arg2: i32) -> (i32, i32) {
    %c0_i32 = arith.constant 0 : i32
    %c0_i32_0 = arith.constant 0 : i32
    return %c0_i32, %arg1 : i32, i32
  }
  func.func @transform_3(%arg0: i32, %arg1: i32, %arg2: i32) -> (i32, i32) {
    %c0_i32 = arith.constant 0 : i32
    return %arg0, %arg1 : i32, i32
  }
}

module attributes {stable_mosaic.version = 11 : i64} {
  func.func @kernel(%arg0: i32, %arg1: i32, %arg2: i32, %arg3: memref<32x128xbf16, #tpu.memory_space<vmem>>, %arg4: memref<128x128xbf16, #tpu.memory_space<vmem>>, %arg5: memref<1x128xf32, #tpu.memory_space<vmem>>, %arg6: memref<32x128xf32, #tpu.memory_space<vmem>>, %arg7: memref<32x128xf32, #tpu.memory_space<vmem>>, %arg8: memref<32x128xf32, #tpu.memory_space<vmem>>) attributes {dimension_semantics = [#tpu.dimension_semantics<parallel>, #tpu.dimension_semantics<parallel>, #tpu.dimension_semantics<arbitrary>], iteration_bounds = array<i64: 1, 1, 1>, scalar_prefetch = 0 : i64, scratch_operands = 1 : i64, tpu.core_type = #tpu.core_type<tc>, window_params = [{transform_indices = @transform_0, window_bounds = array<i64: 32, 128>}, {transform_indices = @transform_1, window_bounds = array<i64: 128, 128>}, {transform_indices = @transform_2, window_bounds = array<i64: 1, 128>}, {transform_indices = @transform_3, window_bounds = array<i64: 32, 128>}, {transform_indices = @transform_4, window_bounds = array<i64: 32, 128>}]} {
    %c0_i32 = arith.constant 0 : i32
    %0 = arith.cmpi eq, %arg2, %c0_i32 : i32
    %1 = arith.extui %0 : i1 to i32
    %c0_i32_0 = arith.constant 0 : i32
    %2 = arith.cmpi ne, %1, %c0_i32_0 : i32
    scf.if %2 {
      %cst_10 = arith.constant 0.000000e+00 : f32
      %12 = vector.broadcast %cst_10 : f32 to vector<32x128xf32>
      %c0_11 = arith.constant 0 : index
      %c0_12 = arith.constant 0 : index
      %13 = vector.load %arg8[%c0_11, %c0_12] : memref<32x128xf32, #tpu.memory_space<vmem>>, vector<32x128xf32>
      tpu.vector_store %arg8[%c0_11, %c0_12], %12 {strides = array<i32>} : memref<32x128xf32, #tpu.memory_space<vmem>>, vector<32x128xf32>,
    } else {
    }
    %c0 = arith.constant 0 : index
    %c0_1 = arith.constant 0 : index
    %3 = vector.load %arg8[%c0, %c0_1] : memref<32x128xf32, #tpu.memory_space<vmem>>, vector<32x128xf32>
    %c0_2 = arith.constant 0 : index
    %c0_3 = arith.constant 0 : index
    %4 = vector.load %arg3[%c0_2, %c0_3] : memref<32x128xbf16, #tpu.memory_space<vmem>>, vector<32x128xbf16>
    %c0_4 = arith.constant 0 : index
    %c0_5 = arith.constant 0 : index
    %5 = vector.load %arg4[%c0_4, %c0_5] : memref<128x128xbf16, #tpu.memory_space<vmem>>, vector<128x128xbf16>
    %cst = arith.constant dense<0.000000e+00> : vector<32x128xf32>
    %6 = tpu.matmul %4, %5, %cst {dimension_numbers = #tpu.dot_dimension_numbers<[1], [0], [0], [1], [0, 0, 1, 1], [], []>} : vector<32x128xbf16>, vector<128x128xbf16>, vector<32x128xf32> -> vector<32x128xf32>
    %7 = arith.addf %3, %6 : vector<32x128xf32>
    %c0_6 = arith.constant 0 : index
    %c0_7 = arith.constant 0 : index
    %8 = vector.load %arg8[%c0_6, %c0_7] : memref<32x128xf32, #tpu.memory_space<vmem>>, vector<32x128xf32>
    tpu.vector_store %arg8[%c0_6, %c0_7], %7 {strides = array<i32>} : memref<32x128xf32, #tpu.memory_space<vmem>>, vector<32x128xf32>,
    %c0_i32_8 = arith.constant 0 : i32
    %9 = arith.cmpi eq, %arg2, %c0_i32_8 : i32
    %10 = arith.extui %9 : i1 to i32
    %c0_i32_9 = arith.constant 0 : i32
    %11 = arith.cmpi ne, %10, %c0_i32_9 : i32
    scf.if %11 {
      %c0_10 = arith.constant 0 : index
      %c0_11 = arith.constant 0 : index
      %12 = vector.load %arg8[%c0_10, %c0_11] : memref<32x128xf32, #tpu.memory_space<vmem>>, vector<32x128xf32>
      %c0_12 = arith.constant 0 : index
      %c0_13 = arith.constant 0 : index
      %13 = vector.load %arg5[%c0_12, %c0_13] : memref<1x128xf32, #tpu.memory_space<vmem>>, vector<1x128xf32>
      %14 = vector.broadcast %13 : vector<1x128xf32> to vector<32x128xf32>
      %15 = arith.addf %12, %14 : vector<32x128xf32>
      %c0_14 = arith.constant 0 : index
      %c0_15 = arith.constant 0 : index
      %16 = vector.load %arg6[%c0_14, %c0_15] : memref<32x128xf32, #tpu.memory_space<vmem>>, vector<32x128xf32>
      %17 = arith.addf %15, %16 : vector<32x128xf32>
      %c0_16 = arith.constant 0 : index
      %c0_17 = arith.constant 0 : index
      %18 = vector.load %arg7[%c0_16, %c0_17] : memref<32x128xf32, #tpu.memory_space<vmem>>, vector<32x128xf32>
      tpu.vector_store %arg7[%c0_16, %c0_17], %17 {strides = array<i32>} : memref<32x128xf32, #tpu.memory_space<vmem>>, vector<32x128xf32>,
    } else {
    }
    return
  }
  func.func @transform_0(%arg0: i32, %arg1: i32, %arg2: i32) -> (i32, i32) {
    %c0_i32 = arith.constant 0 : i32
    return %arg0, %arg2 : i32, i32
  }
  func.func @transform_1(%arg0: i32, %arg1: i32, %arg2: i32) -> (i32, i32) {
    %c0_i32 = arith.constant 0 : i32
    return %arg2, %arg1 : i32, i32
  }
  func.func @transform_2(%arg0: i32, %arg1: i32, %arg2: i32) -> (i32, i32) {
    %c0_i32 = arith.constant 0 : i32
    %c0_i32_0 = arith.constant 0 : i32
    return %c0_i32, %arg1 : i32, i32
  }
  func.func @transform_3(%arg0: i32, %arg1: i32, %arg2: i32) -> (i32, i32) {
    %c0_i32 = arith.constant 0 : i32
    return %arg0, %arg1 : i32, i32
  }
  func.func @transform_4(%arg0: i32, %arg1: i32, %arg2: i32) -> (i32, i32) {
    %c0_i32 = arith.constant 0 : i32
    return %arg0, %arg1 : i32, i32
  }
}

module attributes {stable_mosaic.version = 11 : i64} {
  func.func @kernel(%arg0: i32, %arg1: i32, %arg2: i32, %arg3: memref<1x16x64xbf16, #tpu.memory_space<vmem>>, %arg4: memref<1x16x64xbf16, #tpu.memory_space<vmem>>, %arg5: memref<1x16x64xbf16, #tpu.memory_space<vmem>>, %arg6: memref<1x16x64xbf16, #tpu.memory_space<vmem>>, %arg7: memref<4x16x1xf32, #tpu.memory_space<vmem>>, %arg8: memref<4x16x1xf32, #tpu.memory_space<vmem>>, %arg9: memref<4x16x16xf32, #tpu.memory_space<vmem>>) attributes {dimension_semantics = [#tpu.dimension_semantics<parallel>, #tpu.dimension_semantics<parallel>, #tpu.dimension_semantics<arbitrary>], iteration_bounds = array<i64: 2, 1, 1>, scalar_prefetch = 0 : i64, scratch_operands = 3 : i64, tpu.core_type = #tpu.core_type<tc>, window_params = [{transform_indices = @transform_0, window_bounds = array<i64: 1, 16, 64>}, {transform_indices = @transform_1, window_bounds = array<i64: 1, 16, 64>}, {transform_indices = @transform_2, window_bounds = array<i64: 1, 16, 64>}, {transform_indices = @transform_3, window_bounds = array<i64: 1, 16, 64>}]} {
    %c0_i32 = arith.constant 0 : i32
    %0 = arith.cmpi eq, %arg2, %c0_i32 : i32
    %1 = arith.extui %0 : i1 to i32
    %c0_i32_0 = arith.constant 0 : i32
    %2 = arith.cmpi ne, %1, %c0_i32_0 : i32
    scf.if %2 {
      %cst = arith.constant -1.000000e+30 : f32
      %9 = vector.broadcast %cst : f32 to vector<4x16x1xf32>
      %c0 = arith.constant 0 : index
      %c0_4 = arith.constant 0 : index
      %c0_5 = arith.constant 0 : index
      %10 = vector.load %arg7[%c0, %c0_4, %c0_5] : memref<4x16x1xf32, #tpu.memory_space<vmem>>, vector<4x16x1xf32>
      tpu.vector_store %arg7[%c0, %c0_4, %c0_5], %9 {strides = array<i32>} : memref<4x16x1xf32, #tpu.memory_space<vmem>>, vector<4x16x1xf32>,
      %cst_6 = arith.constant 0.000000e+00 : f32
      %11 = vector.broadcast %cst_6 : f32 to vector<4x16x1xf32>
      %c0_7 = arith.constant 0 : index
      %c0_8 = arith.constant 0 : index
      %c0_9 = arith.constant 0 : index
      %12 = vector.load %arg8[%c0_7, %c0_8, %c0_9] : memref<4x16x1xf32, #tpu.memory_space<vmem>>, vector<4x16x1xf32>
      tpu.vector_store %arg8[%c0_7, %c0_8, %c0_9], %11 {strides = array<i32>} : memref<4x16x1xf32, #tpu.memory_space<vmem>>, vector<4x16x1xf32>,
      %cst_10 = arith.constant 0.000000e+00 : f32
      %13 = vector.broadcast %cst_10 : f32 to vector<4x16x16xf32>
      %c0_11 = arith.constant 0 : index
      %c0_12 = arith.constant 0 : index
      %c0_13 = arith.constant 0 : index
      %14 = vector.load %arg9[%c0_11, %c0_12, %c0_13] : memref<4x16x16xf32, #tpu.memory_space<vmem>>, vector<4x16x16xf32>
      tpu.vector_store %arg9[%c0_11, %c0_12, %c0_13], %13 {strides = array<i32>} : memref<4x16x16xf32, #tpu.memory_space<vmem>>, vector<4x16x16xf32>,
    } else {
    }
    %3 = arith.cmpi sle, %arg2, %arg1 : i32
    %4 = arith.extui %3 : i1 to i32
    %c0_i32_1 = arith.constant 0 : i32
    %5 = arith.cmpi ne, %4, %c0_i32_1 : i32
    scf.if %5 {
      %c0 = arith.constant 0 : index
      %c0_4 = arith.constant 0 : index
      %c0_5 = arith.constant 0 : index
      %9 = vector.load %arg3[%c0, %c0_4, %c0_5] : memref<1x16x64xbf16, #tpu.memory_space<vmem>>, vector<1x16x64xbf16>
      %10 = vector.shape_cast %9 : vector<1x16x64xbf16> to vector<16x64xbf16>
      %c0_6 = arith.constant 0 : index
      %c0_7 = arith.constant 0 : index
      %c0_8 = arith.constant 0 : index
      %11 = vector.load %arg4[%c0_6, %c0_7, %c0_8] : memref<1x16x64xbf16, #tpu.memory_space<vmem>>, vector<1x16x64xbf16>
      %12 = vector.shape_cast %11 : vector<1x16x64xbf16> to vector<16x64xbf16>
      %c0_9 = arith.constant 0 : index
      %c0_10 = arith.constant 0 : index
      %c0_11 = arith.constant 0 : index
      %13 = vector.load %arg5[%c0_9, %c0_10, %c0_11] : memref<1x16x64xbf16, #tpu.memory_space<vmem>>, vector<1x16x64xbf16>
      %14 = vector.shape_cast %13 : vector<1x16x64xbf16> to vector<16x64xbf16>
      %c16_i32 = arith.constant 16 : i32
      %15 = arith.muli %arg1, %c16_i32 : i32
      %16 = tpu.iota {dimensions = array<i32: 0>} : vector<16x16xi32>
      %17 = vector.broadcast %15 : i32 to vector<16x16xi32>
      %18 = arith.addi %17, %16 : vector<16x16xi32>
      %c16_i32_12 = arith.constant 16 : i32
      %19 = arith.muli %arg2, %c16_i32_12 : i32
      %20 = tpu.iota {dimensions = array<i32: 1>} : vector<16x16xi32>
      %21 = vector.broadcast %19 : i32 to vector<16x16xi32>
      %22 = arith.addi %21, %20 : vector<16x16xi32>
      %23 = arith.cmpi sle, %22, %18 : vector<16x16xi32>
      %24 = vector.extract_strided_slice %10 {offsets = [0, 0], sizes = [16, 16], strides = [1, 1]} : vector<16x64xbf16> to vector<16x16xbf16>
      %25 = vector.extract_strided_slice %12 {offsets = [0, 0], sizes = [16, 16], strides = [1, 1]} : vector<16x64xbf16> to vector<16x16xbf16>
      %cst = arith.constant dense<0.000000e+00> : vector<16x16xf32>
      %26 = tpu.matmul %24, %25, %cst {dimension_numbers = #tpu.dot_dimension_numbers<[1], [1], [0], [0], [0, 0, 1, 0], [], []>} : vector<16x16xbf16>, vector<16x16xbf16>, vector<16x16xf32> -> vector<16x16xf32>
      %cst_13 = arith.constant 2.500000e-01 : f32
      %27 = vector.broadcast %cst_13 : f32 to vector<16x16xf32>
      %28 = arith.mulf %26, %27 : vector<16x16xf32>
      %cst_14 = arith.constant -1.000000e+30 : f32
      %29 = vector.broadcast %cst_14 : f32 to vector<16x16xf32>
      %30 = arith.select %23, %28, %29 : vector<16x16xi1>, vector<16x16xf32>
      %c0_15 = arith.constant 0 : index
      %c0_16 = arith.constant 0 : index
      %c0_17 = arith.constant 0 : index
      %31 = vector.load %arg7[%c0_15, %c0_16, %c0_17] : memref<4x16x1xf32, #tpu.memory_space<vmem>>, vector<1x16x1xf32>
      %32 = vector.shape_cast %31 : vector<1x16x1xf32> to vector<16x1xf32>
      %cst_18 = arith.constant dense<0xFF800000> : vector<16xf32>
      %33 = vector.multi_reduction <maximumf>, %30, %cst_18 [1] : vector<16x16xf32> to vector<16xf32>
      %34 = vector.shape_cast %33 : vector<16xf32> to vector<16x1xf32>
      %35 = arith.maximumf %32, %34 : vector<16x1xf32>
      %36 = arith.subf %32, %35 : vector<16x1xf32>
      %37 = math.exp %36 : vector<16x1xf32>
      %38 = vector.broadcast %35 : vector<16x1xf32> to vector<16x16xf32>
      %39 = arith.subf %30, %38 : vector<16x16xf32>
      %40 = math.exp %39 : vector<16x16xf32>
      %c0_19 = arith.constant 0 : index
      %c0_20 = arith.constant 0 : index
      %c0_21 = arith.constant 0 : index
      %41 = vector.load %arg8[%c0_19, %c0_20, %c0_21] : memref<4x16x1xf32, #tpu.memory_space<vmem>>, vector<1x16x1xf32>
      %42 = vector.shape_cast %41 : vector<1x16x1xf32> to vector<16x1xf32>
      %43 = arith.mulf %37, %42 : vector<16x1xf32>
      %cst_22 = arith.constant dense<0.000000e+00> : vector<16xf32>
      %44 = vector.multi_reduction <add>, %40, %cst_22 [1] : vector<16x16xf32> to vector<16xf32>
      %45 = vector.shape_cast %44 : vector<16xf32> to vector<16x1xf32>
      %46 = arith.addf %43, %45 : vector<16x1xf32>
      %c0_23 = arith.constant 0 : index
      %c0_24 = arith.constant 0 : index
      %c0_25 = arith.constant 0 : index
      %47 = vector.load %arg8[%c0_23, %c0_24, %c0_25] : memref<4x16x1xf32, #tpu.memory_space<vmem>>, vector<1x16x1xf32>
      %48 = vector.shape_cast %47 : vector<1x16x1xf32> to vector<16x1xf32>
      %49 = vector.shape_cast %46 : vector<16x1xf32> to vector<1x16x1xf32>
      tpu.vector_store %arg8[%c0_23, %c0_24, %c0_25], %49 {strides = array<i32>} : memref<4x16x1xf32, #tpu.memory_space<vmem>>, vector<1x16x1xf32>,
      %c0_26 = arith.constant 0 : index
      %c0_27 = arith.constant 0 : index
      %c0_28 = arith.constant 0 : index
      %50 = vector.load %arg9[%c0_26, %c0_27, %c0_28] : memref<4x16x16xf32, #tpu.memory_space<vmem>>, vector<1x16x16xf32>
      %51 = vector.shape_cast %50 : vector<1x16x16xf32> to vector<16x16xf32>
      %52 = vector.broadcast %37 : vector<16x1xf32> to vector<16x16xf32>
      %53 = arith.mulf %52, %51 : vector<16x16xf32>
      %54 = arith.truncf %40 : vector<16x16xf32> to vector<16x16xbf16>
      %55 = vector.extract_strided_slice %14 {offsets = [0, 0], sizes = [16, 16], strides = [1, 1]} : vector<16x64xbf16> to vector<16x16xbf16>
      %cst_29 = arith.constant dense<0.000000e+00> : vector<16x16xf32>
      %56 = tpu.matmul %54, %55, %cst_29 {dimension_numbers = #tpu.dot_dimension_numbers<[1], [0], [0], [1], [0, 0, 1, 1], [], []>} : vector<16x16xbf16>, vector<16x16xbf16>, vector<16x16xf32> -> vector<16x16xf32>
      %57 = arith.addf %53, %56 : vector<16x16xf32>
      %c0_30 = arith.constant 0 : index
      %c0_31 = arith.constant 0 : index
      %c0_32 = arith.constant 0 : index
      %58 = vector.load %arg9[%c0_30, %c0_31, %c0_32] : memref<4x16x16xf32, #tpu.memory_space<vmem>>, vector<1x16x16xf32>
      %59 = vector.shape_cast %58 : vector<1x16x16xf32> to vector<16x16xf32>
      %60 = vector.shape_cast %57 : vector<16x16xf32> to vector<1x16x16xf32>
      tpu.vector_store %arg9[%c0_30, %c0_31, %c0_32], %60 {strides = array<i32>} : memref<4x16x16xf32, #tpu.memory_space<vmem>>, vector<1x16x16xf32>,
      %c0_33 = arith.constant 0 : index
      %c0_34 = arith.constant 0 : index
      %c0_35 = arith.constant 0 : index
      %61 = vector.load %arg7[%c0_33, %c0_34, %c0_35] : memref<4x16x1xf32, #tpu.memory_space<vmem>>, vector<1x16x1xf32>
      %62 = vector.shape_cast %61 : vector<1x16x1xf32> to vector<16x1xf32>
      %63 = vector.shape_cast %35 : vector<16x1xf32> to vector<1x16x1xf32>
      tpu.vector_store %arg7[%c0_33, %c0_34, %c0_35], %63 {strides = array<i32>} : memref<4x16x1xf32, #tpu.memory_space<vmem>>, vector<1x16x1xf32>,
      %64 = vector.extract_strided_slice %10 {offsets = [0, 16], sizes = [16, 16], strides = [1, 1]} : vector<16x64xbf16> to vector<16x16xbf16>
      %65 = vector.extract_strided_slice %12 {offsets = [0, 16], sizes = [16, 16], strides = [1, 1]} : vector<16x64xbf16> to vector<16x16xbf16>
      %cst_36 = arith.constant dense<0.000000e+00> : vector<16x16xf32>
      %66 = tpu.matmul %64, %65, %cst_36 {dimension_numbers = #tpu.dot_dimension_numbers<[1], [1], [0], [0], [0, 0, 1, 0], [], []>} : vector<16x16xbf16>, vector<16x16xbf16>, vector<16x16xf32> -> vector<16x16xf32>
      %cst_37 = arith.constant 2.500000e-01 : f32
      %67 = vector.broadcast %cst_37 : f32 to vector<16x16xf32>
      %68 = arith.mulf %66, %67 : vector<16x16xf32>
      %cst_38 = arith.constant -1.000000e+30 : f32
      %69 = vector.broadcast %cst_38 : f32 to vector<16x16xf32>
      %70 = arith.select %23, %68, %69 : vector<16x16xi1>, vector<16x16xf32>
      %c1 = arith.constant 1 : index
      %c0_39 = arith.constant 0 : index
      %c0_40 = arith.constant 0 : index
      %71 = vector.load %arg7[%c1, %c0_39, %c0_40] : memref<4x16x1xf32, #tpu.memory_space<vmem>>, vector<1x16x1xf32>
      %72 = vector.shape_cast %71 : vector<1x16x1xf32> to vector<16x1xf32>
      %cst_41 = arith.constant dense<0xFF800000> : vector<16xf32>
      %73 = vector.multi_reduction <maximumf>, %70, %cst_41 [1] : vector<16x16xf32> to vector<16xf32>
      %74 = vector.shape_cast %73 : vector<16xf32> to vector<16x1xf32>
      %75 = arith.maximumf %72, %74 : vector<16x1xf32>
      %76 = arith.subf %72, %75 : vector<16x1xf32>
      %77 = math.exp %76 : vector<16x1xf32>
      %78 = vector.broadcast %75 : vector<16x1xf32> to vector<16x16xf32>
      %79 = arith.subf %70, %78 : vector<16x16xf32>
      %80 = math.exp %79 : vector<16x16xf32>
      %c1_42 = arith.constant 1 : index
      %c0_43 = arith.constant 0 : index
      %c0_44 = arith.constant 0 : index
      %81 = vector.load %arg8[%c1_42, %c0_43, %c0_44] : memref<4x16x1xf32, #tpu.memory_space<vmem>>, vector<1x16x1xf32>
      %82 = vector.shape_cast %81 : vector<1x16x1xf32> to vector<16x1xf32>
      %83 = arith.mulf %77, %82 : vector<16x1xf32>
      %cst_45 = arith.constant dense<0.000000e+00> : vector<16xf32>
      %84 = vector.multi_reduction <add>, %80, %cst_45 [1] : vector<16x16xf32> to vector<16xf32>
      %85 = vector.shape_cast %84 : vector<16xf32> to vector<16x1xf32>
      %86 = arith.addf %83, %85 : vector<16x1xf32>
      %c1_46 = arith.constant 1 : index
      %c0_47 = arith.constant 0 : index
      %c0_48 = arith.constant 0 : index
      %87 = vector.load %arg8[%c1_46, %c0_47, %c0_48] : memref<4x16x1xf32, #tpu.memory_space<vmem>>, vector<1x16x1xf32>
      %88 = vector.shape_cast %87 : vector<1x16x1xf32> to vector<16x1xf32>
      %89 = vector.shape_cast %86 : vector<16x1xf32> to vector<1x16x1xf32>
      tpu.vector_store %arg8[%c1_46, %c0_47, %c0_48], %89 {strides = array<i32>} : memref<4x16x1xf32, #tpu.memory_space<vmem>>, vector<1x16x1xf32>,
      %c1_49 = arith.constant 1 : index
      %c0_50 = arith.constant 0 : index
      %c0_51 = arith.constant 0 : index
      %90 = vector.load %arg9[%c1_49, %c0_50, %c0_51] : memref<4x16x16xf32, #tpu.memory_space<vmem>>, vector<1x16x16xf32>
      %91 = vector.shape_cast %90 : vector<1x16x16xf32> to vector<16x16xf32>
      %92 = vector.broadcast %77 : vector<16x1xf32> to vector<16x16xf32>
      %93 = arith.mulf %92, %91 : vector<16x16xf32>
      %94 = arith.truncf %80 : vector<16x16xf32> to vector<16x16xbf16>
      %95 = vector.extract_strided_slice %14 {offsets = [0, 16], sizes = [16, 16], strides = [1, 1]} : vector<16x64xbf16> to vector<16x16xbf16>
      %cst_52 = arith.constant dense<0.000000e+00> : vector<16x16xf32>
      %96 = tpu.matmul %94, %95, %cst_52 {dimension_numbers = #tpu.dot_dimension_numbers<[1], [0], [0], [1], [0, 0, 1, 1], [], []>} : vector<16x16xbf16>, vector<16x16xbf16>, vector<16x16xf32> -> vector<16x16xf32>
      %97 = arith.addf %93, %96 : vector<16x16xf32>
      %c1_53 = arith.constant 1 : index
      %c0_54 = arith.constant 0 : index
      %c0_55 = arith.constant 0 : index
      %98 = vector.load %arg9[%c1_53, %c0_54, %c0_55] : memref<4x16x16xf32, #tpu.memory_space<vmem>>, vector<1x16x16xf32>
      %99 = vector.shape_cast %98 : vector<1x16x16xf32> to vector<16x16xf32>
      %100 = vector.shape_cast %97 : vector<16x16xf32> to vector<1x16x16xf32>
      tpu.vector_store %arg9[%c1_53, %c0_54, %c0_55], %100 {strides = array<i32>} : memref<4x16x16xf32, #tpu.memory_space<vmem>>, vector<1x16x16xf32>,
      %c1_56 = arith.constant 1 : index
      %c0_57 = arith.constant 0 : index
      %c0_58 = arith.constant 0 : index
      %101 = vector.load %arg7[%c1_56, %c0_57, %c0_58] : memref<4x16x1xf32, #tpu.memory_space<vmem>>, vector<1x16x1xf32>
      %102 = vector.shape_cast %101 : vector<1x16x1xf32> to vector<16x1xf32>
      %103 = vector.shape_cast %75 : vector<16x1xf32> to vector<1x16x1xf32>
      tpu.vector_store %arg7[%c1_56, %c0_57, %c0_58], %103 {strides = array<i32>} : memref<4x16x1xf32, #tpu.memory_space<vmem>>, vector<1x16x1xf32>,
      %104 = vector.extract_strided_slice %10 {offsets = [0, 32], sizes = [16, 16], strides = [1, 1]} : vector<16x64xbf16> to vector<16x16xbf16>
      %105 = vector.extract_strided_slice %12 {offsets = [0, 32], sizes = [16, 16], strides = [1, 1]} : vector<16x64xbf16> to vector<16x16xbf16>
      %cst_59 = arith.constant dense<0.000000e+00> : vector<16x16xf32>
      %106 = tpu.matmul %104, %105, %cst_59 {dimension_numbers = #tpu.dot_dimension_numbers<[1], [1], [0], [0], [0, 0, 1, 0], [], []>} : vector<16x16xbf16>, vector<16x16xbf16>, vector<16x16xf32> -> vector<16x16xf32>
      %cst_60 = arith.constant 2.500000e-01 : f32
      %107 = vector.broadcast %cst_60 : f32 to vector<16x16xf32>
      %108 = arith.mulf %106, %107 : vector<16x16xf32>
      %cst_61 = arith.constant -1.000000e+30 : f32
      %109 = vector.broadcast %cst_61 : f32 to vector<16x16xf32>
      %110 = arith.select %23, %108, %109 : vector<16x16xi1>, vector<16x16xf32>
      %c2 = arith.constant 2 : index
      %c0_62 = arith.constant 0 : index
      %c0_63 = arith.constant 0 : index
      %111 = vector.load %arg7[%c2, %c0_62, %c0_63] : memref<4x16x1xf32, #tpu.memory_space<vmem>>, vector<1x16x1xf32>
      %112 = vector.shape_cast %111 : vector<1x16x1xf32> to vector<16x1xf32>
      %cst_64 = arith.constant dense<0xFF800000> : vector<16xf32>
      %113 = vector.multi_reduction <maximumf>, %110, %cst_64 [1] : vector<16x16xf32> to vector<16xf32>
      %114 = vector.shape_cast %113 : vector<16xf32> to vector<16x1xf32>
      %115 = arith.maximumf %112, %114 : vector<16x1xf32>
      %116 = arith.subf %112, %115 : vector<16x1xf32>
      %117 = math.exp %116 : vector<16x1xf32>
      %118 = vector.broadcast %115 : vector<16x1xf32> to vector<16x16xf32>
      %119 = arith.subf %110, %118 : vector<16x16xf32>
      %120 = math.exp %119 : vector<16x16xf32>
      %c2_65 = arith.constant 2 : index
      %c0_66 = arith.constant 0 : index
      %c0_67 = arith.constant 0 : index
      %121 = vector.load %arg8[%c2_65, %c0_66, %c0_67] : memref<4x16x1xf32, #tpu.memory_space<vmem>>, vector<1x16x1xf32>
      %122 = vector.shape_cast %121 : vector<1x16x1xf32> to vector<16x1xf32>
      %123 = arith.mulf %117, %122 : vector<16x1xf32>
      %cst_68 = arith.constant dense<0.000000e+00> : vector<16xf32>
      %124 = vector.multi_reduction <add>, %120, %cst_68 [1] : vector<16x16xf32> to vector<16xf32>
      %125 = vector.shape_cast %124 : vector<16xf32> to vector<16x1xf32>
      %126 = arith.addf %123, %125 : vector<16x1xf32>
      %c2_69 = arith.constant 2 : index
      %c0_70 = arith.constant 0 : index
      %c0_71 = arith.constant 0 : index
      %127 = vector.load %arg8[%c2_69, %c0_70, %c0_71] : memref<4x16x1xf32, #tpu.memory_space<vmem>>, vector<1x16x1xf32>
      %128 = vector.shape_cast %127 : vector<1x16x1xf32> to vector<16x1xf32>
      %129 = vector.shape_cast %126 : vector<16x1xf32> to vector<1x16x1xf32>
      tpu.vector_store %arg8[%c2_69, %c0_70, %c0_71], %129 {strides = array<i32>} : memref<4x16x1xf32, #tpu.memory_space<vmem>>, vector<1x16x1xf32>,
      %c2_72 = arith.constant 2 : index
      %c0_73 = arith.constant 0 : index
      %c0_74 = arith.constant 0 : index
      %130 = vector.load %arg9[%c2_72, %c0_73, %c0_74] : memref<4x16x16xf32, #tpu.memory_space<vmem>>, vector<1x16x16xf32>
      %131 = vector.shape_cast %130 : vector<1x16x16xf32> to vector<16x16xf32>
      %132 = vector.broadcast %117 : vector<16x1xf32> to vector<16x16xf32>
      %133 = arith.mulf %132, %131 : vector<16x16xf32>
      %134 = arith.truncf %120 : vector<16x16xf32> to vector<16x16xbf16>
      %135 = vector.extract_strided_slice %14 {offsets = [0, 32], sizes = [16, 16], strides = [1, 1]} : vector<16x64xbf16> to vector<16x16xbf16>
      %cst_75 = arith.constant dense<0.000000e+00> : vector<16x16xf32>
      %136 = tpu.matmul %134, %135, %cst_75 {dimension_numbers = #tpu.dot_dimension_numbers<[1], [0], [0], [1], [0, 0, 1, 1], [], []>} : vector<16x16xbf16>, vector<16x16xbf16>, vector<16x16xf32> -> vector<16x16xf32>
      %137 = arith.addf %133, %136 : vector<16x16xf32>
      %c2_76 = arith.constant 2 : index
      %c0_77 = arith.constant 0 : index
      %c0_78 = arith.constant 0 : index
      %138 = vector.load %arg9[%c2_76, %c0_77, %c0_78] : memref<4x16x16xf32, #tpu.memory_space<vmem>>, vector<1x16x16xf32>
      %139 = vector.shape_cast %138 : vector<1x16x16xf32> to vector<16x16xf32>
      %140 = vector.shape_cast %137 : vector<16x16xf32> to vector<1x16x16xf32>
      tpu.vector_store %arg9[%c2_76, %c0_77, %c0_78], %140 {strides = array<i32>} : memref<4x16x16xf32, #tpu.memory_space<vmem>>, vector<1x16x16xf32>,
      %c2_79 = arith.constant 2 : index
      %c0_80 = arith.constant 0 : index
      %c0_81 = arith.constant 0 : index
      %141 = vector.load %arg7[%c2_79, %c0_80, %c0_81] : memref<4x16x1xf32, #tpu.memory_space<vmem>>, vector<1x16x1xf32>
      %142 = vector.shape_cast %141 : vector<1x16x1xf32> to vector<16x1xf32>
      %143 = vector.shape_cast %115 : vector<16x1xf32> to vector<1x16x1xf32>
      tpu.vector_store %arg7[%c2_79, %c0_80, %c0_81], %143 {strides = array<i32>} : memref<4x16x1xf32, #tpu.memory_space<vmem>>, vector<1x16x1xf32>,
      %144 = vector.extract_strided_slice %10 {offsets = [0, 48], sizes = [16, 16], strides = [1, 1]} : vector<16x64xbf16> to vector<16x16xbf16>
      %145 = vector.extract_strided_slice %12 {offsets = [0, 48], sizes = [16, 16], strides = [1, 1]} : vector<16x64xbf16> to vector<16x16xbf16>
      %cst_82 = arith.constant dense<0.000000e+00> : vector<16x16xf32>
      %146 = tpu.matmul %144, %145, %cst_82 {dimension_numbers = #tpu.dot_dimension_numbers<[1], [1], [0], [0], [0, 0, 1, 0], [], []>} : vector<16x16xbf16>, vector<16x16xbf16>, vector<16x16xf32> -> vector<16x16xf32>
      %cst_83 = arith.constant 2.500000e-01 : f32
      %147 = vector.broadcast %cst_83 : f32 to vector<16x16xf32>
      %148 = arith.mulf %146, %147 : vector<16x16xf32>
      %cst_84 = arith.constant -1.000000e+30 : f32
      %149 = vector.broadcast %cst_84 : f32 to vector<16x16xf32>
      %150 = arith.select %23, %148, %149 : vector<16x16xi1>, vector<16x16xf32>
      %c3 = arith.constant 3 : index
      %c0_85 = arith.constant 0 : index
      %c0_86 = arith.constant 0 : index
      %151 = vector.load %arg7[%c3, %c0_85, %c0_86] : memref<4x16x1xf32, #tpu.memory_space<vmem>>, vector<1x16x1xf32>
      %152 = vector.shape_cast %151 : vector<1x16x1xf32> to vector<16x1xf32>
      %cst_87 = arith.constant dense<0xFF800000> : vector<16xf32>
      %153 = vector.multi_reduction <maximumf>, %150, %cst_87 [1] : vector<16x16xf32> to vector<16xf32>
      %154 = vector.shape_cast %153 : vector<16xf32> to vector<16x1xf32>
      %155 = arith.maximumf %152, %154 : vector<16x1xf32>
      %156 = arith.subf %152, %155 : vector<16x1xf32>
      %157 = math.exp %156 : vector<16x1xf32>
      %158 = vector.broadcast %155 : vector<16x1xf32> to vector<16x16xf32>
      %159 = arith.subf %150, %158 : vector<16x16xf32>
      %160 = math.exp %159 : vector<16x16xf32>
      %c3_88 = arith.constant 3 : index
      %c0_89 = arith.constant 0 : index
      %c0_90 = arith.constant 0 : index
      %161 = vector.load %arg8[%c3_88, %c0_89, %c0_90] : memref<4x16x1xf32, #tpu.memory_space<vmem>>, vector<1x16x1xf32>
      %162 = vector.shape_cast %161 : vector<1x16x1xf32> to vector<16x1xf32>
      %163 = arith.mulf %157, %162 : vector<16x1xf32>
      %cst_91 = arith.constant dense<0.000000e+00> : vector<16xf32>
      %164 = vector.multi_reduction <add>, %160, %cst_91 [1] : vector<16x16xf32> to vector<16xf32>
      %165 = vector.shape_cast %164 : vector<16xf32> to vector<16x1xf32>
      %166 = arith.addf %163, %165 : vector<16x1xf32>
      %c3_92 = arith.constant 3 : index
      %c0_93 = arith.constant 0 : index
      %c0_94 = arith.constant 0 : index
      %167 = vector.load %arg8[%c3_92, %c0_93, %c0_94] : memref<4x16x1xf32, #tpu.memory_space<vmem>>, vector<1x16x1xf32>
      %168 = vector.shape_cast %167 : vector<1x16x1xf32> to vector<16x1xf32>
      %169 = vector.shape_cast %166 : vector<16x1xf32> to vector<1x16x1xf32>
      tpu.vector_store %arg8[%c3_92, %c0_93, %c0_94], %169 {strides = array<i32>} : memref<4x16x1xf32, #tpu.memory_space<vmem>>, vector<1x16x1xf32>,
      %c3_95 = arith.constant 3 : index
      %c0_96 = arith.constant 0 : index
      %c0_97 = arith.constant 0 : index
      %170 = vector.load %arg9[%c3_95, %c0_96, %c0_97] : memref<4x16x16xf32, #tpu.memory_space<vmem>>, vector<1x16x16xf32>
      %171 = vector.shape_cast %170 : vector<1x16x16xf32> to vector<16x16xf32>
      %172 = vector.broadcast %157 : vector<16x1xf32> to vector<16x16xf32>
      %173 = arith.mulf %172, %171 : vector<16x16xf32>
      %174 = arith.truncf %160 : vector<16x16xf32> to vector<16x16xbf16>
      %175 = vector.extract_strided_slice %14 {offsets = [0, 48], sizes = [16, 16], strides = [1, 1]} : vector<16x64xbf16> to vector<16x16xbf16>
      %cst_98 = arith.constant dense<0.000000e+00> : vector<16x16xf32>
      %176 = tpu.matmul %174, %175, %cst_98 {dimension_numbers = #tpu.dot_dimension_numbers<[1], [0], [0], [1], [0, 0, 1, 1], [], []>} : vector<16x16xbf16>, vector<16x16xbf16>, vector<16x16xf32> -> vector<16x16xf32>
      %177 = arith.addf %173, %176 : vector<16x16xf32>
      %c3_99 = arith.constant 3 : index
      %c0_100 = arith.constant 0 : index
      %c0_101 = arith.constant 0 : index
      %178 = vector.load %arg9[%c3_99, %c0_100, %c0_101] : memref<4x16x16xf32, #tpu.memory_space<vmem>>, vector<1x16x16xf32>
      %179 = vector.shape_cast %178 : vector<1x16x16xf32> to vector<16x16xf32>
      %180 = vector.shape_cast %177 : vector<16x16xf32> to vector<1x16x16xf32>
      tpu.vector_store %arg9[%c3_99, %c0_100, %c0_101], %180 {strides = array<i32>} : memref<4x16x16xf32, #tpu.memory_space<vmem>>, vector<1x16x16xf32>,
      %c3_102 = arith.constant 3 : index
      %c0_103 = arith.constant 0 : index
      %c0_104 = arith.constant 0 : index
      %181 = vector.load %arg7[%c3_102, %c0_103, %c0_104] : memref<4x16x1xf32, #tpu.memory_space<vmem>>, vector<1x16x1xf32>
      %182 = vector.shape_cast %181 : vector<1x16x1xf32> to vector<16x1xf32>
      %183 = vector.shape_cast %155 : vector<16x1xf32> to vector<1x16x1xf32>
      tpu.vector_store %arg7[%c3_102, %c0_103, %c0_104], %183 {strides = array<i32>} : memref<4x16x1xf32, #tpu.memory_space<vmem>>, vector<1x16x1xf32>,
    } else {
    }
    %c0_i32_2 = arith.constant 0 : i32
    %6 = arith.cmpi eq, %arg2, %c0_i32_2 : i32
    %7 = arith.extui %6 : i1 to i32
    %c0_i32_3 = arith.constant 0 : i32
    %8 = arith.cmpi ne, %7, %c0_i32_3 : i32
    scf.if %8 {
      %c0 = arith.constant 0 : index
      %c0_4 = arith.constant 0 : index
      %c0_5 = arith.constant 0 : index
      %9 = vector.load %arg8[%c0, %c0_4, %c0_5] : memref<4x16x1xf32, #tpu.memory_space<vmem>>, vector<1x16x1xf32>
      %10 = vector.shape_cast %9 : vector<1x16x1xf32> to vector<16x1xf32>
      %11 = tpu.reciprocal %10 {approx = true} : vector<16x1xf32> -> vector<16x1xf32>
      %c0_6 = arith.constant 0 : index
      %c0_7 = arith.constant 0 : index
      %c0_8 = arith.constant 0 : index
      %12 = vector.load %arg9[%c0_6, %c0_7, %c0_8] : memref<4x16x16xf32, #tpu.memory_space<vmem>>, vector<1x16x16xf32>
      %13 = vector.shape_cast %12 : vector<1x16x16xf32> to vector<16x16xf32>
      %14 = vector.broadcast %11 : vector<16x1xf32> to vector<16x16xf32>
      %15 = arith.mulf %13, %14 : vector<16x16xf32>
      %16 = arith.truncf %15 : vector<16x16xf32> to vector<16x16xbf16>
      %c0_9 = arith.constant 0 : index
      %c0_10 = arith.constant 0 : index
      %c0_11 = arith.constant 0 : index
      %17 = vector.load %arg6[%c0_9, %c0_10, %c0_11] : memref<1x16x64xbf16, #tpu.memory_space<vmem>>, vector<1x16x16xbf16>
      %18 = vector.shape_cast %17 : vector<1x16x16xbf16> to vector<16x16xbf16>
      %19 = vector.shape_cast %16 : vector<16x16xbf16> to vector<1x16x16xbf16>
      tpu.vector_store %arg6[%c0_9, %c0_10, %c0_11], %19 {strides = array<i32>} : memref<1x16x64xbf16, #tpu.memory_space<vmem>>, vector<1x16x16xbf16>,
      %c1 = arith.constant 1 : index
      %c0_12 = arith.constant 0 : index
      %c0_13 = arith.constant 0 : index
      %20 = vector.load %arg8[%c1, %c0_12, %c0_13] : memref<4x16x1xf32, #tpu.memory_space<vmem>>, vector<1x16x1xf32>
      %21 = vector.shape_cast %20 : vector<1x16x1xf32> to vector<16x1xf32>
      %22 = tpu.reciprocal %21 {approx = true} : vector<16x1xf32> -> vector<16x1xf32>
      %c1_14 = arith.constant 1 : index
      %c0_15 = arith.constant 0 : index
      %c0_16 = arith.constant 0 : index
      %23 = vector.load %arg9[%c1_14, %c0_15, %c0_16] : memref<4x16x16xf32, #tpu.memory_space<vmem>>, vector<1x16x16xf32>
      %24 = vector.shape_cast %23 : vector<1x16x16xf32> to vector<16x16xf32>
      %25 = vector.broadcast %22 : vector<16x1xf32> to vector<16x16xf32>
      %26 = arith.mulf %24, %25 : vector<16x16xf32>
      %27 = arith.truncf %26 : vector<16x16xf32> to vector<16x16xbf16>
      %c0_17 = arith.constant 0 : index
      %c0_18 = arith.constant 0 : index
      %c16 = arith.constant 16 : index
      %28 = vector.load %arg6[%c0_17, %c0_18, %c16] : memref<1x16x64xbf16, #tpu.memory_space<vmem>>, vector<1x16x16xbf16>
      %29 = vector.shape_cast %28 : vector<1x16x16xbf16> to vector<16x16xbf16>
      %30 = vector.shape_cast %27 : vector<16x16xbf16> to vector<1x16x16xbf16>
      tpu.vector_store %arg6[%c0_17, %c0_18, %c16], %30 {strides = array<i32>} : memref<1x16x64xbf16, #tpu.memory_space<vmem>>, vector<1x16x16xbf16>,
      %c2 = arith.constant 2 : index
      %c0_19 = arith.constant 0 : index
      %c0_20 = arith.constant 0 : index
      %31 = vector.load %arg8[%c2, %c0_19, %c0_20] : memref<4x16x1xf32, #tpu.memory_space<vmem>>, vector<1x16x1xf32>
      %32 = vector.shape_cast %31 : vector<1x16x1xf32> to vector<16x1xf32>
      %33 = tpu.reciprocal %32 {approx = true} : vector<16x1xf32> -> vector<16x1xf32>
      %c2_21 = arith.constant 2 : index
      %c0_22 = arith.constant 0 : index
      %c0_23 = arith.constant 0 : index
      %34 = vector.load %arg9[%c2_21, %c0_22, %c0_23] : memref<4x16x16xf32, #tpu.memory_space<vmem>>, vector<1x16x16xf32>
      %35 = vector.shape_cast %34 : vector<1x16x16xf32> to vector<16x16xf32>
      %36 = vector.broadcast %33 : vector<16x1xf32> to vector<16x16xf32>
      %37 = arith.mulf %35, %36 : vector<16x16xf32>
      %38 = arith.truncf %37 : vector<16x16xf32> to vector<16x16xbf16>
      %c0_24 = arith.constant 0 : index
      %c0_25 = arith.constant 0 : index
      %c32 = arith.constant 32 : index
      %39 = vector.load %arg6[%c0_24, %c0_25, %c32] : memref<1x16x64xbf16, #tpu.memory_space<vmem>>, vector<1x16x16xbf16>
      %40 = vector.shape_cast %39 : vector<1x16x16xbf16> to vector<16x16xbf16>
      %41 = vector.shape_cast %38 : vector<16x16xbf16> to vector<1x16x16xbf16>
      tpu.vector_store %arg6[%c0_24, %c0_25, %c32], %41 {strides = array<i32>} : memref<1x16x64xbf16, #tpu.memory_space<vmem>>, vector<1x16x16xbf16>,
      %c3 = arith.constant 3 : index
      %c0_26 = arith.constant 0 : index
      %c0_27 = arith.constant 0 : index
      %42 = vector.load %arg8[%c3, %c0_26, %c0_27] : memref<4x16x1xf32, #tpu.memory_space<vmem>>, vector<1x16x1xf32>
      %43 = vector.shape_cast %42 : vector<1x16x1xf32> to vector<16x1xf32>
      %44 = tpu.reciprocal %43 {approx = true} : vector<16x1xf32> -> vector<16x1xf32>
      %c3_28 = arith.constant 3 : index
      %c0_29 = arith.constant 0 : index
      %c0_30 = arith.constant 0 : index
      %45 = vector.load %arg9[%c3_28, %c0_29, %c0_30] : memref<4x16x16xf32, #tpu.memory_space<vmem>>, vector<1x16x16xf32>
      %46 = vector.shape_cast %45 : vector<1x16x16xf32> to vector<16x16xf32>
      %47 = vector.broadcast %44 : vector<16x1xf32> to vector<16x16xf32>
      %48 = arith.mulf %46, %47 : vector<16x16xf32>
      %49 = arith.truncf %48 : vector<16x16xf32> to vector<16x16xbf16>
      %c0_31 = arith.constant 0 : index
      %c0_32 = arith.constant 0 : index
      %c48 = arith.constant 48 : index
      %50 = vector.load %arg6[%c0_31, %c0_32, %c48] : memref<1x16x64xbf16, #tpu.memory_space<vmem>>, vector<1x16x16xbf16>
      %51 = vector.shape_cast %50 : vector<1x16x16xbf16> to vector<16x16xbf16>
      %52 = vector.shape_cast %49 : vector<16x16xbf16> to vector<1x16x16xbf16>
      tpu.vector_store %arg6[%c0_31, %c0_32, %c48], %52 {strides = array<i32>} : memref<1x16x64xbf16, #tpu.memory_space<vmem>>, vector<1x16x16xbf16>,
    } else {
    }
    return
  }
  func.func @transform_0(%arg0: i32, %arg1: i32, %arg2: i32) -> (i32, i32, i32) {
    %c0_i32 = arith.constant 0 : i32
    %c0_i32_0 = arith.constant 0 : i32
    return %arg0, %arg1, %c0_i32 : i32, i32, i32
  }
  func.func @transform_1(%arg0: i32, %arg1: i32, %arg2: i32) -> (i32, i32, i32) {
    %c0_i32 = arith.constant 0 : i32
    %c0_i32_0 = arith.constant 0 : i32
    return %arg0, %arg2, %c0_i32 : i32, i32, i32
  }
  func.func @transform_2(%arg0: i32, %arg1: i32, %arg2: i32) -> (i32, i32, i32) {
    %c0_i32 = arith.constant 0 : i32
    %c0_i32_0 = arith.constant 0 : i32
    return %arg0, %arg2, %c0_i32 : i32, i32, i32
  }
  func.func @transform_3(%arg0: i32, %arg1: i32, %arg2: i32) -> (i32, i32, i32) {
    %c0_i32 = arith.constant 0 : i32
    %c0_i32_0 = arith.constant 0 : i32
    return %arg0, %arg1, %c0_i32 : i32, i32, i32
  }
}

module attributes {stable_mosaic.version = 11 : i64} {
  func.func @kernel(%arg0: i32, %arg1: i32, %arg2: i32, %arg3: memref<32x128xbf16, #tpu.memory_space<vmem>>, %arg4: memref<128x256xbf16, #tpu.memory_space<vmem>>, %arg5: memref<1x256xf32, #tpu.memory_space<vmem>>, %arg6: memref<32x256xbf16, #tpu.memory_space<vmem>>, %arg7: memref<32x256xf32, #tpu.memory_space<vmem>>) attributes {dimension_semantics = [#tpu.dimension_semantics<parallel>, #tpu.dimension_semantics<parallel>, #tpu.dimension_semantics<arbitrary>], iteration_bounds = array<i64: 1, 1, 1>, scalar_prefetch = 0 : i64, scratch_operands = 1 : i64, tpu.core_type = #tpu.core_type<tc>, window_params = [{transform_indices = @transform_0, window_bounds = array<i64: 32, 128>}, {transform_indices = @transform_1, window_bounds = array<i64: 128, 256>}, {transform_indices = @transform_2, window_bounds = array<i64: 1, 256>}, {transform_indices = @transform_3, window_bounds = array<i64: 32, 256>}]} {
    %c0_i32 = arith.constant 0 : i32
    %0 = arith.cmpi eq, %arg2, %c0_i32 : i32
    %1 = arith.extui %0 : i1 to i32
    %c0_i32_0 = arith.constant 0 : i32
    %2 = arith.cmpi ne, %1, %c0_i32_0 : i32
    scf.if %2 {
      %cst_10 = arith.constant 0.000000e+00 : f32
      %12 = vector.broadcast %cst_10 : f32 to vector<32x256xf32>
      %c0_11 = arith.constant 0 : index
      %c0_12 = arith.constant 0 : index
      %13 = vector.load %arg7[%c0_11, %c0_12] : memref<32x256xf32, #tpu.memory_space<vmem>>, vector<32x256xf32>
      tpu.vector_store %arg7[%c0_11, %c0_12], %12 {strides = array<i32>} : memref<32x256xf32, #tpu.memory_space<vmem>>, vector<32x256xf32>,
    } else {
    }
    %c0 = arith.constant 0 : index
    %c0_1 = arith.constant 0 : index
    %3 = vector.load %arg7[%c0, %c0_1] : memref<32x256xf32, #tpu.memory_space<vmem>>, vector<32x256xf32>
    %c0_2 = arith.constant 0 : index
    %c0_3 = arith.constant 0 : index
    %4 = vector.load %arg3[%c0_2, %c0_3] : memref<32x128xbf16, #tpu.memory_space<vmem>>, vector<32x128xbf16>
    %c0_4 = arith.constant 0 : index
    %c0_5 = arith.constant 0 : index
    %5 = vector.load %arg4[%c0_4, %c0_5] : memref<128x256xbf16, #tpu.memory_space<vmem>>, vector<128x256xbf16>
    %cst = arith.constant dense<0.000000e+00> : vector<32x256xf32>
    %6 = tpu.matmul %4, %5, %cst {dimension_numbers = #tpu.dot_dimension_numbers<[1], [0], [0], [1], [0, 0, 1, 1], [], []>} : vector<32x128xbf16>, vector<128x256xbf16>, vector<32x256xf32> -> vector<32x256xf32>
    %7 = arith.addf %3, %6 : vector<32x256xf32>
    %c0_6 = arith.constant 0 : index
    %c0_7 = arith.constant 0 : index
    %8 = vector.load %arg7[%c0_6, %c0_7] : memref<32x256xf32, #tpu.memory_space<vmem>>, vector<32x256xf32>
    tpu.vector_store %arg7[%c0_6, %c0_7], %7 {strides = array<i32>} : memref<32x256xf32, #tpu.memory_space<vmem>>, vector<32x256xf32>,
    %c0_i32_8 = arith.constant 0 : i32
    %9 = arith.cmpi eq, %arg2, %c0_i32_8 : i32
    %10 = arith.extui %9 : i1 to i32
    %c0_i32_9 = arith.constant 0 : i32
    %11 = arith.cmpi ne, %10, %c0_i32_9 : i32
    scf.if %11 {
      %c0_10 = arith.constant 0 : index
      %c0_11 = arith.constant 0 : index
      %12 = vector.load %arg7[%c0_10, %c0_11] : memref<32x256xf32, #tpu.memory_space<vmem>>, vector<32x256xf32>
      %c0_12 = arith.constant 0 : index
      %c0_13 = arith.constant 0 : index
      %13 = vector.load %arg5[%c0_12, %c0_13] : memref<1x256xf32, #tpu.memory_space<vmem>>, vector<1x256xf32>
      %14 = vector.broadcast %13 : vector<1x256xf32> to vector<32x256xf32>
      %15 = arith.addf %12, %14 : vector<32x256xf32>
      %cst_14 = arith.constant 5.000000e-01 : f32
      %16 = vector.broadcast %cst_14 : f32 to vector<32x256xf32>
      %17 = arith.mulf %16, %15 : vector<32x256xf32>
      %cst_15 = arith.constant 4.471500e-02 : f32
      %18 = vector.broadcast %cst_15 : f32 to vector<32x256xf32>
      %19 = arith.mulf %18, %15 : vector<32x256xf32>
      %20 = arith.mulf %19, %15 : vector<32x256xf32>
      %21 = arith.mulf %20, %15 : vector<32x256xf32>
      %22 = arith.addf %15, %21 : vector<32x256xf32>
      %cst_16 = arith.constant 0.797884583 : f32
      %23 = vector.broadcast %cst_16 : f32 to vector<32x256xf32>
      %24 = arith.mulf %23, %22 : vector<32x256xf32>
      %25 = math.tanh %24 : vector<32x256xf32>
      %cst_17 = arith.constant 1.000000e+00 : f32
      %26 = vector.broadcast %cst_17 : f32 to vector<32x256xf32>
      %27 = arith.addf %26, %25 : vector<32x256xf32>
      %28 = arith.mulf %17, %27 : vector<32x256xf32>
      %29 = arith.truncf %28 : vector<32x256xf32> to vector<32x256xbf16>
      %c0_18 = arith.constant 0 : index
      %c0_19 = arith.constant 0 : index
      %30 = vector.load %arg6[%c0_18, %c0_19] : memref<32x256xbf16, #tpu.memory_space<vmem>>, vector<32x256xbf16>
      tpu.vector_store %arg6[%c0_18, %c0_19], %29 {strides = array<i32>} : memref<32x256xbf16, #tpu.memory_space<vmem>>, vector<32x256xbf16>,
    } else {
    }
    return
  }
  func.func @transform_0(%arg0: i32, %arg1: i32, %arg2: i32) -> (i32, i32) {
    %c0_i32 = arith.constant 0 : i32
    return %arg0, %arg2 : i32, i32
  }
  func.func @transform_1(%arg0: i32, %arg1: i32, %arg2: i32) -> (i32, i32) {
    %c0_i32 = arith.constant 0 : i32
    return %arg2, %arg1 : i32, i32
  }
  func.func @transform_2(%arg0: i32, %arg1: i32, %arg2: i32) -> (i32, i32) {
    %c0_i32 = arith.constant 0 : i32
    %c0_i32_0 = arith.constant 0 : i32
    return %c0_i32, %arg1 : i32, i32
  }
  func.func @transform_3(%arg0: i32, %arg1: i32, %arg2: i32) -> (i32, i32) {
    %c0_i32 = arith.constant 0 : i32
    return %arg0, %arg1 : i32, i32
  }
}

module attributes {stable_mosaic.version = 11 : i64} {
  func.func @kernel(%arg0: i32, %arg1: i32, %arg2: i32, %arg3: memref<32x256xbf16, #tpu.memory_space<vmem>>, %arg4: memref<256x128xbf16, #tpu.memory_space<vmem>>, %arg5: memref<1x128xf32, #tpu.memory_space<vmem>>, %arg6: memref<32x128xf32, #tpu.memory_space<vmem>>, %arg7: memref<32x128xf32, #tpu.memory_space<vmem>>, %arg8: memref<32x128xf32, #tpu.memory_space<vmem>>) attributes {dimension_semantics = [#tpu.dimension_semantics<parallel>, #tpu.dimension_semantics<parallel>, #tpu.dimension_semantics<arbitrary>], iteration_bounds = array<i64: 1, 1, 1>, scalar_prefetch = 0 : i64, scratch_operands = 1 : i64, tpu.core_type = #tpu.core_type<tc>, window_params = [{transform_indices = @transform_0, window_bounds = array<i64: 32, 256>}, {transform_indices = @transform_1, window_bounds = array<i64: 256, 128>}, {transform_indices = @transform_2, window_bounds = array<i64: 1, 128>}, {transform_indices = @transform_3, window_bounds = array<i64: 32, 128>}, {transform_indices = @transform_4, window_bounds = array<i64: 32, 128>}]} {
    %c0_i32 = arith.constant 0 : i32
    %0 = arith.cmpi eq, %arg2, %c0_i32 : i32
    %1 = arith.extui %0 : i1 to i32
    %c0_i32_0 = arith.constant 0 : i32
    %2 = arith.cmpi ne, %1, %c0_i32_0 : i32
    scf.if %2 {
      %cst_10 = arith.constant 0.000000e+00 : f32
      %12 = vector.broadcast %cst_10 : f32 to vector<32x128xf32>
      %c0_11 = arith.constant 0 : index
      %c0_12 = arith.constant 0 : index
      %13 = vector.load %arg8[%c0_11, %c0_12] : memref<32x128xf32, #tpu.memory_space<vmem>>, vector<32x128xf32>
      tpu.vector_store %arg8[%c0_11, %c0_12], %12 {strides = array<i32>} : memref<32x128xf32, #tpu.memory_space<vmem>>, vector<32x128xf32>,
    } else {
    }
    %c0 = arith.constant 0 : index
    %c0_1 = arith.constant 0 : index
    %3 = vector.load %arg8[%c0, %c0_1] : memref<32x128xf32, #tpu.memory_space<vmem>>, vector<32x128xf32>
    %c0_2 = arith.constant 0 : index
    %c0_3 = arith.constant 0 : index
    %4 = vector.load %arg3[%c0_2, %c0_3] : memref<32x256xbf16, #tpu.memory_space<vmem>>, vector<32x256xbf16>
    %c0_4 = arith.constant 0 : index
    %c0_5 = arith.constant 0 : index
    %5 = vector.load %arg4[%c0_4, %c0_5] : memref<256x128xbf16, #tpu.memory_space<vmem>>, vector<256x128xbf16>
    %cst = arith.constant dense<0.000000e+00> : vector<32x128xf32>
    %6 = tpu.matmul %4, %5, %cst {dimension_numbers = #tpu.dot_dimension_numbers<[1], [0], [0], [1], [0, 0, 1, 1], [], []>} : vector<32x256xbf16>, vector<256x128xbf16>, vector<32x128xf32> -> vector<32x128xf32>
    %7 = arith.addf %3, %6 : vector<32x128xf32>
    %c0_6 = arith.constant 0 : index
    %c0_7 = arith.constant 0 : index
    %8 = vector.load %arg8[%c0_6, %c0_7] : memref<32x128xf32, #tpu.memory_space<vmem>>, vector<32x128xf32>
    tpu.vector_store %arg8[%c0_6, %c0_7], %7 {strides = array<i32>} : memref<32x128xf32, #tpu.memory_space<vmem>>, vector<32x128xf32>,
    %c0_i32_8 = arith.constant 0 : i32
    %9 = arith.cmpi eq, %arg2, %c0_i32_8 : i32
    %10 = arith.extui %9 : i1 to i32
    %c0_i32_9 = arith.constant 0 : i32
    %11 = arith.cmpi ne, %10, %c0_i32_9 : i32
    scf.if %11 {
      %c0_10 = arith.constant 0 : index
      %c0_11 = arith.constant 0 : index
      %12 = vector.load %arg8[%c0_10, %c0_11] : memref<32x128xf32, #tpu.memory_space<vmem>>, vector<32x128xf32>
      %c0_12 = arith.constant 0 : index
      %c0_13 = arith.constant 0 : index
      %13 = vector.load %arg5[%c0_12, %c0_13] : memref<1x128xf32, #tpu.memory_space<vmem>>, vector<1x128xf32>
      %14 = vector.broadcast %13 : vector<1x128xf32> to vector<32x128xf32>
      %15 = arith.addf %12, %14 : vector<32x128xf32>
      %c0_14 = arith.constant 0 : index
      %c0_15 = arith.constant 0 : index
      %16 = vector.load %arg6[%c0_14, %c0_15] : memref<32x128xf32, #tpu.memory_space<vmem>>, vector<32x128xf32>
      %17 = arith.addf %15, %16 : vector<32x128xf32>
      %c0_16 = arith.constant 0 : index
      %c0_17 = arith.constant 0 : index
      %18 = vector.load %arg7[%c0_16, %c0_17] : memref<32x128xf32, #tpu.memory_space<vmem>>, vector<32x128xf32>
      tpu.vector_store %arg7[%c0_16, %c0_17], %17 {strides = array<i32>} : memref<32x128xf32, #tpu.memory_space<vmem>>, vector<32x128xf32>,
    } else {
    }
    return
  }
  func.func @transform_0(%arg0: i32, %arg1: i32, %arg2: i32) -> (i32, i32) {
    %c0_i32 = arith.constant 0 : i32
    return %arg0, %arg2 : i32, i32
  }
  func.func @transform_1(%arg0: i32, %arg1: i32, %arg2: i32) -> (i32, i32) {
    %c0_i32 = arith.constant 0 : i32
    return %arg2, %arg1 : i32, i32
  }
  func.func @transform_2(%arg0: i32, %arg1: i32, %arg2: i32) -> (i32, i32) {
    %c0_i32 = arith.constant 0 : i32
    %c0_i32_0 = arith.constant 0 : i32
    return %c0_i32, %arg1 : i32, i32
  }
  func.func @transform_3(%arg0: i32, %arg1: i32, %arg2: i32) -> (i32, i32) {
    %c0_i32 = arith.constant 0 : i32
    return %arg0, %arg1 : i32, i32
  }
  func.func @transform_4(%arg0: i32, %arg1: i32, %arg2: i32) -> (i32, i32) {
    %c0_i32 = arith.constant 0 : i32
    return %arg0, %arg1 : i32, i32
  }
}

module attributes {stable_mosaic.version = 11 : i64} {
  func.func @_layer_norm_kernel(%arg0: i32, %arg1: memref<32x64xf32, #tpu.memory_space<vmem>>, %arg2: memref<1x64xf32, #tpu.memory_space<vmem>>, %arg3: memref<1x64xf32, #tpu.memory_space<vmem>>, %arg4: memref<32x64xf32, #tpu.memory_space<vmem>>) attributes {dimension_semantics = [#tpu.dimension_semantics<parallel>], iteration_bounds = array<i64: 1>, scalar_prefetch = 0 : i64, scratch_operands = 0 : i64, tpu.core_type = #tpu.core_type<tc>, window_params = [{transform_indices = @transform_0, window_bounds = array<i64: 32, 64>}, {pipeline_mode = #tpu.pipeline_mode<synchronous>, transform_indices = @transform_1, window_bounds = array<i64: 1, 64>}, {pipeline_mode = #tpu.pipeline_mode<synchronous>, transform_indices = @transform_2, window_bounds = array<i64: 1, 64>}, {transform_indices = @transform_3, window_bounds = array<i64: 32, 64>}]} {
    %c0 = arith.constant 0 : index
    %c0_0 = arith.constant 0 : index
    %0 = vector.load %arg1[%c0, %c0_0] : memref<32x64xf32, #tpu.memory_space<vmem>>, vector<32x64xf32>
    %cst = arith.constant dense<0.000000e+00> : vector<32xf32>
    %1 = vector.multi_reduction <add>, %0, %cst [1] : vector<32x64xf32> to vector<32xf32>
    %2 = vector.shape_cast %1 : vector<32xf32> to vector<32x1xf32>
    %cst_1 = arith.constant 6.400000e+01 : f32
    %3 = vector.broadcast %cst_1 : f32 to vector<32x1xf32>
    %4 = arith.divf %2, %3 : vector<32x1xf32>
    %5 = vector.broadcast %4 : vector<32x1xf32> to vector<32x64xf32>
    %6 = arith.subf %0, %5 : vector<32x64xf32>
    %7 = arith.mulf %6, %6 : vector<32x64xf32>
    %cst_2 = arith.constant dense<0.000000e+00> : vector<32xf32>
    %8 = vector.multi_reduction <add>, %7, %cst_2 [1] : vector<32x64xf32> to vector<32xf32>
    %9 = vector.shape_cast %8 : vector<32xf32> to vector<32x1xf32>
    %cst_3 = arith.constant 6.400000e+01 : f32
    %10 = vector.broadcast %cst_3 : f32 to vector<32x1xf32>
    %11 = arith.divf %9, %10 : vector<32x1xf32>
    %cst_4 = arith.constant 9.99999974E-6 : f32
    %12 = vector.broadcast %cst_4 : f32 to vector<32x1xf32>
    %13 = arith.addf %11, %12 : vector<32x1xf32>
    %14 = math.rsqrt %13 : vector<32x1xf32>
    %15 = vector.broadcast %14 : vector<32x1xf32> to vector<32x64xf32>
    %16 = arith.mulf %6, %15 : vector<32x64xf32>
    %c0_5 = arith.constant 0 : index
    %c0_6 = arith.constant 0 : index
    %17 = vector.load %arg2[%c0_5, %c0_6] : memref<1x64xf32, #tpu.memory_space<vmem>>, vector<1x64xf32>
    %18 = vector.broadcast %17 : vector<1x64xf32> to vector<32x64xf32>
    %19 = arith.mulf %16, %18 : vector<32x64xf32>
    %c0_7 = arith.constant 0 : index
    %c0_8 = arith.constant 0 : index
    %20 = vector.load %arg3[%c0_7, %c0_8] : memref<1x64xf32, #tpu.memory_space<vmem>>, vector<1x64xf32>
    %21 = vector.broadcast %20 : vector<1x64xf32> to vector<32x64xf32>
    %22 = arith.addf %19, %21 : vector<32x64xf32>
    %c0_9 = arith.constant 0 : index
    %c0_10 = arith.constant 0 : index
    %23 = vector.load %arg4[%c0_9, %c0_10] : memref<32x64xf32, #tpu.memory_space<vmem>>, vector<32x64xf32>
    tpu.vector_store %arg4[%c0_9, %c0_10], %22 {strides = array<i32>} : memref<32x64xf32, #tpu.memory_space<vmem>>, vector<32x64xf32>,
    return
  }
  func.func @transform_0(%arg0: i32) -> (i32, i32) {
    %c0_i32 = arith.constant 0 : i32
    %c0_i32_0 = arith.constant 0 : i32
    return %arg0, %c0_i32 : i32, i32
  }
  func.func @transform_1(%arg0: i32) -> (i32, i32) {
    %c0_i32 = arith.constant 0 : i32
    %c0_i32_0 = arith.constant 0 : i32
    %c0_i32_1 = arith.constant 0 : i32
    return %c0_i32, %c0_i32_0 : i32, i32
  }
  func.func @transform_2(%arg0: i32) -> (i32, i32) {
    %c0_i32 = arith.constant 0 : i32
    %c0_i32_0 = arith.constant 0 : i32
    %c0_i32_1 = arith.constant 0 : i32
    return %c0_i32, %c0_i32_0 : i32, i32
  }
  func.func @transform_3(%arg0: i32) -> (i32, i32) {
    %c0_i32 = arith.constant 0 : i32
    %c0_i32_0 = arith.constant 0 : i32
    return %arg0, %c0_i32 : i32, i32
  }
}

module attributes {stable_mosaic.version = 11 : i64} {
  func.func @kernel(%arg0: i32, %arg1: i32, %arg2: i32, %arg3: memref<32x128xbf16, #tpu.memory_space<vmem>>, %arg4: memref<128x128xbf16, #tpu.memory_space<vmem>>, %arg5: memref<1x128xf32, #tpu.memory_space<vmem>>, %arg6: memref<32x128xf32, #tpu.memory_space<vmem>>, %arg7: memref<32x128xf32, #tpu.memory_space<vmem>>) attributes {dimension_semantics = [#tpu.dimension_semantics<parallel>, #tpu.dimension_semantics<parallel>, #tpu.dimension_semantics<arbitrary>], iteration_bounds = array<i64: 1, 1, 1>, scalar_prefetch = 0 : i64, scratch_operands = 1 : i64, tpu.core_type = #tpu.core_type<tc>, window_params = [{transform_indices = @transform_0, window_bounds = array<i64: 32, 128>}, {transform_indices = @transform_1, window_bounds = array<i64: 128, 128>}, {transform_indices = @transform_2, window_bounds = array<i64: 1, 128>}, {transform_indices = @transform_3, window_bounds = array<i64: 32, 128>}]} {
    %c0_i32 = arith.constant 0 : i32
    %0 = arith.cmpi eq, %arg2, %c0_i32 : i32
    %1 = arith.extui %0 : i1 to i32
    %c0_i32_0 = arith.constant 0 : i32
    %2 = arith.cmpi ne, %1, %c0_i32_0 : i32
    scf.if %2 {
      %cst_10 = arith.constant 0.000000e+00 : f32
      %12 = vector.broadcast %cst_10 : f32 to vector<32x128xf32>
      %c0_11 = arith.constant 0 : index
      %c0_12 = arith.constant 0 : index
      %13 = vector.load %arg7[%c0_11, %c0_12] : memref<32x128xf32, #tpu.memory_space<vmem>>, vector<32x128xf32>
      tpu.vector_store %arg7[%c0_11, %c0_12], %12 {strides = array<i32>} : memref<32x128xf32, #tpu.memory_space<vmem>>, vector<32x128xf32>,
    } else {
    }
    %c0 = arith.constant 0 : index
    %c0_1 = arith.constant 0 : index
    %3 = vector.load %arg7[%c0, %c0_1] : memref<32x128xf32, #tpu.memory_space<vmem>>, vector<32x128xf32>
    %c0_2 = arith.constant 0 : index
    %c0_3 = arith.constant 0 : index
    %4 = vector.load %arg3[%c0_2, %c0_3] : memref<32x128xbf16, #tpu.memory_space<vmem>>, vector<32x128xbf16>
    %c0_4 = arith.constant 0 : index
    %c0_5 = arith.constant 0 : index
    %5 = vector.load %arg4[%c0_4, %c0_5] : memref<128x128xbf16, #tpu.memory_space<vmem>>, vector<128x128xbf16>
    %cst = arith.constant dense<0.000000e+00> : vector<32x128xf32>
    %6 = tpu.matmul %4, %5, %cst {dimension_numbers = #tpu.dot_dimension_numbers<[1], [0], [0], [1], [0, 0, 1, 1], [], []>} : vector<32x128xbf16>, vector<128x128xbf16>, vector<32x128xf32> -> vector<32x128xf32>
    %7 = arith.addf %3, %6 : vector<32x128xf32>
    %c0_6 = arith.constant 0 : index
    %c0_7 = arith.constant 0 : index
    %8 = vector.load %arg7[%c0_6, %c0_7] : memref<32x128xf32, #tpu.memory_space<vmem>>, vector<32x128xf32>
    tpu.vector_store %arg7[%c0_6, %c0_7], %7 {strides = array<i32>} : memref<32x128xf32, #tpu.memory_space<vmem>>, vector<32x128xf32>,
    %c0_i32_8 = arith.constant 0 : i32
    %9 = arith.cmpi eq, %arg2, %c0_i32_8 : i32
    %10 = arith.extui %9 : i1 to i32
    %c0_i32_9 = arith.constant 0 : i32
    %11 = arith.cmpi ne, %10, %c0_i32_9 : i32
    scf.if %11 {
      %c0_10 = arith.constant 0 : index
      %c0_11 = arith.constant 0 : index
      %12 = vector.load %arg7[%c0_10, %c0_11] : memref<32x128xf32, #tpu.memory_space<vmem>>, vector<32x128xf32>
      %c0_12 = arith.constant 0 : index
      %c0_13 = arith.constant 0 : index
      %13 = vector.load %arg5[%c0_12, %c0_13] : memref<1x128xf32, #tpu.memory_space<vmem>>, vector<1x128xf32>
      %14 = vector.broadcast %13 : vector<1x128xf32> to vector<32x128xf32>
      %15 = arith.addf %12, %14 : vector<32x128xf32>
      %c0_14 = arith.constant 0 : index
      %c0_15 = arith.constant 0 : index
      %16 = vector.load %arg6[%c0_14, %c0_15] : memref<32x128xf32, #tpu.memory_space<vmem>>, vector<32x128xf32>
      tpu.vector_store %arg6[%c0_14, %c0_15], %15 {strides = array<i32>} : memref<32x128xf32, #tpu.memory_space<vmem>>, vector<32x128xf32>,
    } else {
    }
    return
  }
  func.func @transform_0(%arg0: i32, %arg1: i32, %arg2: i32) -> (i32, i32) {
    %c0_i32 = arith.constant 0 : i32
    return %arg0, %arg2 : i32, i32
  }
  func.func @transform_1(%arg0: i32, %arg1: i32, %arg2: i32) -> (i32, i32) {
    %c0_i32 = arith.constant 0 : i32
    return %arg2, %arg1 : i32, i32
  }
  func.func @transform_2(%arg0: i32, %arg1: i32, %arg2: i32) -> (i32, i32) {
    %c0_i32 = arith.constant 0 : i32
    %c0_i32_0 = arith.constant 0 : i32
    return %c0_i32, %arg1 : i32, i32
  }
  func.func @transform_3(%arg0: i32, %arg1: i32, %arg2: i32) -> (i32, i32) {
    %c0_i32 = arith.constant 0 : i32
    return %arg0, %arg1 : i32, i32
  }
}

</mosaic_0001>

<llo_original>
// kernel: transformer_forward.21
$region0: #{transformer_forward.21}
  #allocation0 [shape = 'u32[]', space=smem, size = 0x4, offset = 0x4, fixed_abs, tag = 'smem constant byte address 0x4 - core index']
  #allocation1 [shape = 'u32[144,128]{1,0:T(1,128)}', space=vmem, size = 0x12000, scoped, tag = 'internal scratch']
  #allocation2 [shape = 'f32[32,128]{1,0:T(8,128)}', space=vmem, size = 0x4000, scoped, tag = 'scratch operand']
  %s0 = inlined_call_operand.vmem [shape: bf16[32,128], index: 0, kind: input, shape index: {}]
  %s1 = inlined_call_operand.vmem [shape: bf16[128,128], index: 1, kind: input, shape index: {}]
  %s2 = inlined_call_operand.vmem [shape: f32[1,128], index: 2, kind: input, shape index: {}]
  %s3 = inlined_call_operand.vmem [shape: bf16[32,128], index: 3, kind: output, shape index: {}]
  %s4 = sld [smem:[#allocation0]]
  $region30: #{transformer_forward.21} parent=0
    _
  %s6 = ssub.s32 1, %s4
  %s7 = scalar_select 0, %s6, %s4
  // Predicated region
  $region2: #{transformer_forward.21} parent=0 // pred_check
    _
  $region3: #{transformer_forward.21} parent=0 // pred_check_branch
    %9 = sbr.rel (0) target = $region5
  $region4: #{transformer_forward.21} parent=0 // pred_region
    _
  $region5: #{transformer_forward.21} parent=0 // pred_fallthru
    _
  // Predicated region
  $region6: #{transformer_forward.21} parent=0 // pred_check
    _
  $region7: #{transformer_forward.21} parent=0 // pred_check_branch
    %11 = sbr.rel (0) target = $region9
  $region8: #{transformer_forward.21} parent=0 // pred_region
    _
  $region9: #{transformer_forward.21} parent=0 // pred_fallthru
    _
  // Predicated region
  $region10: #{transformer_forward.21} parent=0 // pred_check
    _
  $region11: #{transformer_forward.21} parent=0 // pred_check_branch
    %13 = sbr.rel (0) target = $region13
  $region12: #{transformer_forward.21} parent=0 // pred_region
    _
  $region13: #{transformer_forward.21} parent=0 // pred_fallthru
    _
  %p15 = scmp.eq.s32.totalorder 0, 0
  // Predicated region
  $region14: #{transformer_forward.21} parent=0 // pred_check
    %p16 = pneg %p15
  $region15: #{transformer_forward.21} parent=0 // pred_check_branch
    %18 = sbr.rel (%p16) target = $region17
  $region16: #{transformer_forward.21} parent=0 // pred_region
    %19 = vst [vmem:[#allocation2] sm:$0xff] 0.0
    %20 = vst [vmem:[#allocation2 + $0x8] sm:$0xff] 0.0
    %21 = vst [vmem:[#allocation2 + $0x10] sm:$0xff] 0.0
    %22 = vst [vmem:[#allocation2 + $0x18] sm:$0xff] 0.0
  $region17: #{transformer_forward.21} parent=0 // pred_fallthru
    _
  %v23 = vld [vmem:[#allocation2] sm:$0xff]
  %v24 = vld [vmem:[#allocation2 + $0x8] sm:$0xff]
  %v25 = vld [vmem:[#allocation2 + $0x10] sm:$0xff]
  %v26 = vld [vmem:[#allocation2 + $0x18] sm:$0xff]
  %v27 = vld [vmem:[%s0] sm:$0xf]
  %v28 = vld [vmem:[%s0 + $0x4] sm:$0xf]
  %v29 = vld [vmem:[%s0 + $0x8] sm:$0xf]
  %v30 = vld [vmem:[%s0 + $0xc] sm:$0xf]
  %v31 = vld [vmem:[%s1] sm:$0xf]
  %v32 = vld [vmem:[%s1 + $0x4] sm:$0xf]
  %v33 = vld [vmem:[%s1 + $0x8] sm:$0xf]
  %v34 = vld [vmem:[%s1 + $0xc] sm:$0xf]
  %v35 = vld [vmem:[%s1 + $0x10] sm:$0xf]
  %v36 = vld [vmem:[%s1 + $0x14] sm:$0xf]
  %v37 = vld [vmem:[%s1 + $0x18] sm:$0xf]
  %v38 = vld [vmem:[%s1 + $0x1c] sm:$0xf]
  %v39 = vld [vmem:[%s1 + $0x20] sm:$0xf]
  %v40 = vld [vmem:[%s1 + $0x24] sm:$0xf]
  %v41 = vld [vmem:[%s1 + $0x28] sm:$0xf]
  %v42 = vld [vmem:[%s1 + $0x2c] sm:$0xf]
  %v43 = vld [vmem:[%s1 + $0x30] sm:$0xf]
  %v44 = vld [vmem:[%s1 + $0x34] sm:$0xf]
  %v45 = vld [vmem:[%s1 + $0x38] sm:$0xf]
  %v46 = vld [vmem:[%s1 + $0x3c] sm:$0xf]
  %v51 = vunpack.c.l.b16 %v27
  %v52 = vunpack.c.l.b16 %v28
  %v53 = vunpack.c.l.b16 %v29
  %v54 = vunpack.c.l.b16 %v30
  %v55 = vpack.c.b16 %v52, %v51
  %v56 = vpack.c.b16 %v54, %v53
  %v75 = vunpack.c.l.b16 %v31
  %v76 = vunpack.c.l.b16 %v32
  %v77 = vunpack.c.l.b16 %v33
  %v78 = vunpack.c.l.b16 %v34
  %v79 = vunpack.c.l.b16 %v35
  %v80 = vunpack.c.l.b16 %v36
  %v81 = vunpack.c.l.b16 %v37
  %v82 = vunpack.c.l.b16 %v38
  %v83 = vunpack.c.l.b16 %v39
  %v84 = vunpack.c.l.b16 %v40
  %v85 = vunpack.c.l.b16 %v41
  %v86 = vunpack.c.l.b16 %v42
  %v87 = vunpack.c.l.b16 %v43
  %v88 = vunpack.c.l.b16 %v44
  %v89 = vunpack.c.l.b16 %v45
  %v90 = vunpack.c.l.b16 %v46
  %v91 = vpack.c.b16 %v76, %v75
  %v92 = vpack.c.b16 %v78, %v77
  %v93 = vpack.c.b16 %v80, %v79
  %v94 = vpack.c.b16 %v82, %v81
  %v95 = vpack.c.b16 %v84, %v83
  %v96 = vpack.c.b16 %v86, %v85
  %v97 = vpack.c.b16 %v88, %v87
  %v98 = vpack.c.b16 %v90, %v89
  %107 = vmatprep.subr.bf16.mxu0 0
  %108 = vmatpush1.bf16.msra.mxu0 %v91
  %109 = vmatprep.subr.bf16.mxu0 0
  %110 = vmatpush1.bf16.msra.mxu0 %v92
  %111 = vmatprep.subr.bf16.mxu0 0
  %112 = vmatpush1.bf16.msra.mxu0 %v93
  %113 = vmatprep.subr.bf16.mxu0 0
  %114 = vmatpush1.bf16.msra.mxu0 %v94
  %115 = vmatprep.subr.bf16.mxu0 0
  %116 = vmatpush1.bf16.msra.mxu0 %v95
  %117 = vmatprep.subr.bf16.mxu0 0
  %118 = vmatpush1.bf16.msra.mxu0 %v96
  %119 = vmatprep.subr.bf16.mxu0 0
  %120 = vmatpush1.bf16.msra.mxu0 %v97
  %121 = vmatprep.subr.bf16.mxu0 0
  %122 = vmatpush1.bf16.msra.mxu0 %v98
  %123 = vmatprep.subr.bf16.mxu0 0
  %124 = vmatpush1.bf16.msra.mxu0 0
  %125 = vmatprep.subr.bf16.mxu0 0
  %126 = vmatpush1.bf16.msra.mxu0 0
  %127 = vmatprep.subr.bf16.mxu0 0
  %128 = vmatpush1.bf16.msra.mxu0 0
  %129 = vmatprep.subr.bf16.mxu0 0
  %130 = vmatpush1.bf16.msra.mxu0 0
  %131 = vmatprep.subr.bf16.mxu0 0
  %132 = vmatpush1.bf16.msra.mxu0 0
  %133 = vmatprep.subr.bf16.mxu0 0
  %134 = vmatpush1.bf16.msra.mxu0 0
  %135 = vmatprep.subr.bf16.mxu0 0
  %136 = vmatpush1.bf16.msra.mxu0 0
  %137 = vmatprep.subr.bf16.mxu0 0
  %138 = vmatpush1.bf16.msra.mxu0 0
  %139 = vmatprep.mubr.bf16.mxu0 0
  %140 = vmatmul.mubr.bf16.gmra.mrb[0].mxu0 %v55
  %v141 = vpop.f32.mrb[0].mxu0
  %v142 = vadd.f32 0.0, %v141
  %v143 = vpop.f32.mrb[0].mxu0
  %v144 = vpop.f32.mrb[0].mxu0
  %v145 = vadd.f32 0.0, %v144
  %v146 = vpop.f32.mrb[0].mxu0
  %147 = vmatprep.mubr.bf16.mxu0 0
  %148 = vmatmul.mubr.bf16.gmra.mrb[0].mxu0 %v56
  %v149 = vpop.f32.mrb[0].mxu0
  %v150 = vadd.f32 0.0, %v149
  %v151 = vpop.f32.mrb[0].mxu0
  %v152 = vpop.f32.mrb[0].mxu0
  %v153 = vadd.f32 0.0, %v152
  %v154 = vpop.f32.mrb[0].mxu0
  %155 = vdwg.mxu0
  %v156 = vadd.f32 %v23, %v142
  %v157 = vadd.f32 %v24, %v145
  %v158 = vadd.f32 %v25, %v150
  %v159 = vadd.f32 %v26, %v153
  %160 = vst [vmem:[#allocation2] sm:$0xff] %v156
  %161 = vst [vmem:[#allocation2 + $0x8] sm:$0xff] %v157
  %162 = vst [vmem:[#allocation2 + $0x10] sm:$0xff] %v158
  %163 = vst [vmem:[#allocation2 + $0x18] sm:$0xff] %v159
  // Predicated region
  $region18: #{transformer_forward.21} parent=0 // pred_check
    %p164 = pneg %p15
  $region19: #{transformer_forward.21} parent=0 // pred_check_branch
    %166 = sbr.rel (%p164) target = $region21
  $region20: #{transformer_forward.21} parent=0 // pred_region
    %v167 = vld [vmem:[#allocation2] sm:$0xff]
    %v168 = vld [vmem:[#allocation2 + $0x8] sm:$0xff]
    %v169 = vld [vmem:[#allocation2 + $0x10] sm:$0xff]
    %v170 = vld [vmem:[#allocation2 + $0x18] sm:$0xff]
    %v171 = vld [vmem:[%s2] sm:$0x1]
    %v173 = vlaneseq
    %v174 = vshrl.u32 %v173, 7
    %v175 = vsub.s32 0, %v174
    %v176 = vrot.slane %v171, %v175
    %v178 = vadd.f32 %v167, %v176
    %v179 = vadd.f32 %v168, %v176
    %v180 = vadd.f32 %v169, %v176
    %v181 = vadd.f32 %v170, %v176
    %v182 = vpack.c.bf16 %v179, %v178
    %v183 = vpack.c.bf16 %v181, %v180
    %v186 = vunpack.c.l.b16 %v182
    %v187 = vunpack.c.h.b16 %v182
    %v188 = vunpack.c.l.b16 %v183
    %v189 = vunpack.c.h.b16 %v183
    %v190 = vpack.c.b16 %v186, %v186
    %v191 = vpack.c.b16 %v187, %v187
    %v192 = vpack.c.b16 %v188, %v188
    %v193 = vpack.c.b16 %v189, %v189
    %198 = vst [vmem:[%s3] sm:$0xf] %v190
    %199 = vst [vmem:[%s3 + $0x4] sm:$0xf] %v191
    %200 = vst [vmem:[%s3 + $0x8] sm:$0xf] %v192
    %201 = vst [vmem:[%s3 + $0xc] sm:$0xf] %v193
  $region21: #{transformer_forward.21} parent=0 // pred_fallthru
    _
  // Predicated region
  $region22: #{transformer_forward.21} parent=0 // pred_check
    _
  $region23: #{transformer_forward.21} parent=0 // pred_check_branch
    %203 = sbr.rel (0) target = $region25
  $region24: #{transformer_forward.21} parent=0 // pred_region
    _
  $region25: #{transformer_forward.21} parent=0 // pred_fallthru
    _
  // Predicated region
  $region26: #{transformer_forward.21} parent=0 // pred_check
    _
  $region27: #{transformer_forward.21} parent=0 // pred_check_branch
    %205 = sbr.rel (0) target = $region29
  $region28: #{transformer_forward.21} parent=0 // pred_region
    _
  $region29: #{transformer_forward.21} parent=0 // pred_fallthru
    _

// kernel: transformer_forward.25
$region0: #{transformer_forward.25}
  #allocation0 [shape = 'u32[]', space=smem, size = 0x4, offset = 0x4, fixed_abs, tag = 'smem constant byte address 0x4 - core index']
  #allocation1 [shape = 'u32[144,128]{1,0:T(1,128)}', space=vmem, size = 0x12000, scoped, tag = 'internal scratch']
  #allocation2 [shape = 'f32[32,128]{1,0:T(8,128)}', space=vmem, size = 0x4000, scoped, tag = 'scratch operand']
  %s0 = inlined_call_operand.vmem [shape: bf16[32,128], index: 0, kind: input, shape index: {}]
  %s1 = inlined_call_operand.vmem [shape: bf16[128,128], index: 1, kind: input, shape index: {}]
  %s2 = inlined_call_operand.vmem [shape: f32[1,128], index: 2, kind: input, shape index: {}]
  %s3 = inlined_call_operand.vmem [shape: f32[32,128], index: 3, kind: input, shape index: {}]
  %s4 = inlined_call_operand.vmem [shape: f32[32,128], index: 4, kind: output, shape index: {}]
  %s5 = sld [smem:[#allocation0]]
  $region34: #{transformer_forward.25} parent=0
    _
  %s7 = ssub.s32 1, %s5
  %s8 = scalar_select 0, %s7, %s5
  // Predicated region
  $region2: #{transformer_forward.25} parent=0 // pred_check
    _
  $region3: #{transformer_forward.25} parent=0 // pred_check_branch
    %10 = sbr.rel (0) target = $region5
  $region4: #{transformer_forward.25} parent=0 // pred_region
    _
  $region5: #{transformer_forward.25} parent=0 // pred_fallthru
    _
  // Predicated region
  $region6: #{transformer_forward.25} parent=0 // pred_check
    _
  $region7: #{transformer_forward.25} parent=0 // pred_check_branch
    %12 = sbr.rel (0) target = $region9
  $region8: #{transformer_forward.25} parent=0 // pred_region
    _
  $region9: #{transformer_forward.25} parent=0 // pred_fallthru
    _
  // Predicated region
  $region10: #{transformer_forward.25} parent=0 // pred_check
    _
  $region11: #{transformer_forward.25} parent=0 // pred_check_branch
    %14 = sbr.rel (0) target = $region13
  $region12: #{transformer_forward.25} parent=0 // pred_region
    _
  $region13: #{transformer_forward.25} parent=0 // pred_fallthru
    _
  // Predicated region
  $region14: #{transformer_forward.25} parent=0 // pred_check
    _
  $region15: #{transformer_forward.25} parent=0 // pred_check_branch
    %16 = sbr.rel (0) target = $region17
  $region16: #{transformer_forward.25} parent=0 // pred_region
    _
  $region17: #{transformer_forward.25} parent=0 // pred_fallthru
    _
  %p18 = scmp.eq.s32.totalorder 0, 0
  // Predicated region
  $region18: #{transformer_forward.25} parent=0 // pred_check
    %p19 = pneg %p18
  $region19: #{transformer_forward.25} parent=0 // pred_check_branch
    %21 = sbr.rel (%p19) target = $region21
  $region20: #{transformer_forward.25} parent=0 // pred_region
    %22 = vst [vmem:[#allocation2] sm:$0xff] 0.0
    %23 = vst [vmem:[#allocation2 + $0x8] sm:$0xff] 0.0
    %24 = vst [vmem:[#allocation2 + $0x10] sm:$0xff] 0.0
    %25 = vst [vmem:[#allocation2 + $0x18] sm:$0xff] 0.0
  $region21: #{transformer_forward.25} parent=0 // pred_fallthru
    _
  %v26 = vld [vmem:[#allocation2] sm:$0xff]
  %v27 = vld [vmem:[#allocation2 + $0x8] sm:$0xff]
  %v28 = vld [vmem:[#allocation2 + $0x10] sm:$0xff]
  %v29 = vld [vmem:[#allocation2 + $0x18] sm:$0xff]
  %v30 = vld [vmem:[%s0] sm:$0xf]
  %v31 = vld [vmem:[%s0 + $0x4] sm:$0xf]
  %v32 = vld [vmem:[%s0 + $0x8] sm:$0xf]
  %v33 = vld [vmem:[%s0 + $0xc] sm:$0xf]
  %v34 = vld [vmem:[%s1] sm:$0xf]
  %v35 = vld [vmem:[%s1 + $0x4] sm:$0xf]
  %v36 = vld [vmem:[%s1 + $0x8] sm:$0xf]
  %v37 = vld [vmem:[%s1 + $0xc] sm:$0xf]
  %v38 = vld [vmem:[%s1 + $0x10] sm:$0xf]
  %v39 = vld [vmem:[%s1 + $0x14] sm:$0xf]
  %v40 = vld [vmem:[%s1 + $0x18] sm:$0xf]
  %v41 = vld [vmem:[%s1 + $0x1c] sm:$0xf]
  %v42 = vld [vmem:[%s1 + $0x20] sm:$0xf]
  %v43 = vld [vmem:[%s1 + $0x24] sm:$0xf]
  %v44 = vld [vmem:[%s1 + $0x28] sm:$0xf]
  %v45 = vld [vmem:[%s1 + $0x2c] sm:$0xf]
  %v46 = vld [vmem:[%s1 + $0x30] sm:$0xf]
  %v47 = vld [vmem:[%s1 + $0x34] sm:$0xf]
  %v48 = vld [vmem:[%s1 + $0x38] sm:$0xf]
  %v49 = vld [vmem:[%s1 + $0x3c] sm:$0xf]
  %v54 = vunpack.c.l.b16 %v30
  %v55 = vunpack.c.l.b16 %v31
  %v56 = vunpack.c.l.b16 %v32
  %v57 = vunpack.c.l.b16 %v33
  %v58 = vpack.c.b16 %v55, %v54
  %v59 = vpack.c.b16 %v57, %v56
  %v78 = vunpack.c.l.b16 %v34
  %v79 = vunpack.c.l.b16 %v35
  %v80 = vunpack.c.l.b16 %v36
  %v81 = vunpack.c.l.b16 %v37
  %v82 = vunpack.c.l.b16 %v38
  %v83 = vunpack.c.l.b16 %v39
  %v84 = vunpack.c.l.b16 %v40
  %v85 = vunpack.c.l.b16 %v41
  %v86 = vunpack.c.l.b16 %v42
  %v87 = vunpack.c.l.b16 %v43
  %v88 = vunpack.c.l.b16 %v44
  %v89 = vunpack.c.l.b16 %v45
  %v90 = vunpack.c.l.b16 %v46
  %v91 = vunpack.c.l.b16 %v47
  %v92 = vunpack.c.l.b16 %v48
  %v93 = vunpack.c.l.b16 %v49
  %v94 = vpack.c.b16 %v79, %v78
  %v95 = vpack.c.b16 %v81, %v80
  %v96 = vpack.c.b16 %v83, %v82
  %v97 = vpack.c.b16 %v85, %v84
  %v98 = vpack.c.b16 %v87, %v86
  %v99 = vpack.c.b16 %v89, %v88
  %v100 = vpack.c.b16 %v91, %v90
  %v101 = vpack.c.b16 %v93, %v92
  %110 = vmatprep.subr.bf16.mxu0 0
  %111 = vmatpush1.bf16.msra.mxu0 %v94
  %112 = vmatprep.subr.bf16.mxu0 0
  %113 = vmatpush1.bf16.msra.mxu0 %v95
  %114 = vmatprep.subr.bf16.mxu0 0
  %115 = vmatpush1.bf16.msra.mxu0 %v96
  %116 = vmatprep.subr.bf16.mxu0 0
  %117 = vmatpush1.bf16.msra.mxu0 %v97
  %118 = vmatprep.subr.bf16.mxu0 0
  %119 = vmatpush1.bf16.msra.mxu0 %v98
  %120 = vmatprep.subr.bf16.mxu0 0
  %121 = vmatpush1.bf16.msra.mxu0 %v99
  %122 = vmatprep.subr.bf16.mxu0 0
  %123 = vmatpush1.bf16.msra.mxu0 %v100
  %124 = vmatprep.subr.bf16.mxu0 0
  %125 = vmatpush1.bf16.msra.mxu0 %v101
  %126 = vmatprep.subr.bf16.mxu0 0
  %127 = vmatpush1.bf16.msra.mxu0 0
  %128 = vmatprep.subr.bf16.mxu0 0
  %129 = vmatpush1.bf16.msra.mxu0 0
  %130 = vmatprep.subr.bf16.mxu0 0
  %131 = vmatpush1.bf16.msra.mxu0 0
  %132 = vmatprep.subr.bf16.mxu0 0
  %133 = vmatpush1.bf16.msra.mxu0 0
  %134 = vmatprep.subr.bf16.mxu0 0
  %135 = vmatpush1.bf16.msra.mxu0 0
  %136 = vmatprep.subr.bf16.mxu0 0
  %137 = vmatpush1.bf16.msra.mxu0 0
  %138 = vmatprep.subr.bf16.mxu0 0
  %139 = vmatpush1.bf16.msra.mxu0 0
  %140 = vmatprep.subr.bf16.mxu0 0
  %141 = vmatpush1.bf16.msra.mxu0 0
  %142 = vmatprep.mubr.bf16.mxu0 0
  %143 = vmatmul.mubr.bf16.gmra.mrb[0].mxu0 %v58
  %v144 = vpop.f32.mrb[0].mxu0
  %v145 = vadd.f32 0.0, %v144
  %v146 = vpop.f32.mrb[0].mxu0
  %v147 = vpop.f32.mrb[0].mxu0
  %v148 = vadd.f32 0.0, %v147
  %v149 = vpop.f32.mrb[0].mxu0
  %150 = vmatprep.mubr.bf16.mxu0 0
  %151 = vmatmul.mubr.bf16.gmra.mrb[0].mxu0 %v59
  %v152 = vpop.f32.mrb[0].mxu0
  %v153 = vadd.f32 0.0, %v152
  %v154 = vpop.f32.mrb[0].mxu0
  %v155 = vpop.f32.mrb[0].mxu0
  %v156 = vadd.f32 0.0, %v155
  %v157 = vpop.f32.mrb[0].mxu0
  %158 = vdwg.mxu0
  %v159 = vadd.f32 %v26, %v145
  %v160 = vadd.f32 %v27, %v148
  %v161 = vadd.f32 %v28, %v153
  %v162 = vadd.f32 %v29, %v156
  %163 = vst [vmem:[#allocation2] sm:$0xff] %v159
  %164 = vst [vmem:[#allocation2 + $0x8] sm:$0xff] %v160
  %165 = vst [vmem:[#allocation2 + $0x10] sm:$0xff] %v161
  %166 = vst [vmem:[#allocation2 + $0x18] sm:$0xff] %v162
  // Predicated region
  $region22: #{transformer_forward.25} parent=0 // pred_check
    %p167 = pneg %p18
  $region23: #{transformer_forward.25} parent=0 // pred_check_branch
    %169 = sbr.rel (%p167) target = $region25
  $region24: #{transformer_forward.25} parent=0 // pred_region
    %v170 = vld [vmem:[#allocation2] sm:$0xff]
    %v171 = vld [vmem:[#allocation2 + $0x8] sm:$0xff]
    %v172 = vld [vmem:[#allocation2 + $0x10] sm:$0xff]
    %v173 = vld [vmem:[#allocation2 + $0x18] sm:$0xff]
    %v174 = vld [vmem:[%s2] sm:$0x1]
    %v176 = vlaneseq
    %v177 = vshrl.u32 %v176, 7
    %v178 = vsub.s32 0, %v177
    %v179 = vrot.slane %v174, %v178
    %v181 = vadd.f32 %v170, %v179
    %v182 = vadd.f32 %v171, %v179
    %v183 = vadd.f32 %v172, %v179
    %v184 = vadd.f32 %v173, %v179
    %v185 = vld [vmem:[%s3] sm:$0xff]
    %v186 = vld [vmem:[%s3 + $0x8] sm:$0xff]
    %v187 = vld [vmem:[%s3 + $0x10] sm:$0xff]
    %v188 = vld [vmem:[%s3 + $0x18] sm:$0xff]
    %v189 = vadd.f32 %v181, %v185
    %v190 = vadd.f32 %v182, %v186
    %v191 = vadd.f32 %v183, %v187
    %v192 = vadd.f32 %v184, %v188
    %193 = vst [vmem:[%s4] sm:$0xff] %v189
    %194 = vst [vmem:[%s4 + $0x8] sm:$0xff] %v190
    %195 = vst [vmem:[%s4 + $0x10] sm:$0xff] %v191
    %196 = vst [vmem:[%s4 + $0x18] sm:$0xff] %v192
  $region25: #{transformer_forward.25} parent=0 // pred_fallthru
    _
  // Predicated region
  $region26: #{transformer_forward.25} parent=0 // pred_check
    _
  $region27: #{transformer_forward.25} parent=0 // pred_check_branch
    %198 = sbr.rel (0) target = $region29
  $region28: #{transformer_forward.25} parent=0 // pred_region
    _
  $region29: #{transformer_forward.25} parent=0 // pred_fallthru
    _
  // Predicated region
  $region30: #{transformer_forward.25} parent=0 // pred_check
    _
  $region31: #{transformer_forward.25} parent=0 // pred_check_branch
    %200 = sbr.rel (0) target = $region33
  $region32: #{transformer_forward.25} parent=0 // pred_region
    _
  $region33: #{transformer_forward.25} parent=0 // pred_fallthru
    _

// kernel: transformer_forward.20
$region0: #{transformer_forward.20}
  #allocation0 [shape = 'u32[]', space=smem, size = 0x4, offset = 0x4, fixed_abs, tag = 'smem constant byte address 0x4 - core index']
  #allocation1 [shape = 'u32[144,128]{1,0:T(1,128)}', space=vmem, size = 0x12000, scoped, tag = 'internal scratch']
  %s0 = inlined_call_operand.vmem [shape: f32[32,64], index: 0, kind: input, shape index: {}]
  %s1 = inlined_call_operand.vmem [shape: f32[1,64], index: 1, kind: input, shape index: {}]
  %s2 = inlined_call_operand.vmem [shape: f32[1,64], index: 2, kind: input, shape index: {}]
  %s3 = inlined_call_operand.vmem [shape: bf16[32,64], index: 3, kind: output, shape index: {}]
  %s4 = sld [smem:[#allocation0]]
  $region22: #{transformer_forward.20} parent=0
    _
  %s6 = ssub.s32 1, %s4
  %s7 = scalar_select 0, %s6, %s4
  // Predicated region
  $region2: #{transformer_forward.20} parent=0 // pred_check
    _
  $region3: #{transformer_forward.20} parent=0 // pred_check_branch
    %9 = sbr.rel (0) target = $region5
  $region4: #{transformer_forward.20} parent=0 // pred_region
    _
  $region5: #{transformer_forward.20} parent=0 // pred_fallthru
    _
  // Predicated region
  $region6: #{transformer_forward.20} parent=0 // pred_check
    _
  $region7: #{transformer_forward.20} parent=0 // pred_check_branch
    %11 = sbr.rel (0) target = $region9
  $region8: #{transformer_forward.20} parent=0 // pred_region
    _
  $region9: #{transformer_forward.20} parent=0 // pred_fallthru
    _
  // Predicated region
  $region10: #{transformer_forward.20} parent=0 // pred_check
    _
  $region11: #{transformer_forward.20} parent=0 // pred_check_branch
    %13 = sbr.rel (0) target = $region13
  $region12: #{transformer_forward.20} parent=0 // pred_region
    _
  $region13: #{transformer_forward.20} parent=0 // pred_fallthru
    _
  %v14 = vld [vmem:[%s0] sm:$0xff]
  %v15 = vld [vmem:[%s0 + $0x8] sm:$0xff]
  %v16 = vld [vmem:[%s0 + $0x10] sm:$0xff]
  %v17 = vld [vmem:[%s0 + $0x18] sm:$0xff]
  %vm18 = vcmask 523264
  %v19 = vsel %vm18, %v14, 0.0
  %20 = vadd.xlane.f32.xlu0 %v19
  %v21 = vpop.xlane.xlu0 %20
  %v22 = vsel %vm18, %v15, 0.0
  %23 = vadd.xlane.f32.xlu0 %v22
  %v24 = vpop.xlane.xlu0 %23
  %v25 = vsel %vm18, %v16, 0.0
  %26 = vadd.xlane.f32.xlu0 %v25
  %v27 = vpop.xlane.xlu0 %26
  %v28 = vsel %vm18, %v17, 0.0
  %29 = vadd.xlane.f32.xlu0 %v28
  %v30 = vpop.xlane.xlu0 %29
  %v31 = vrcp.pop 64.0
  %v32 = vmul.f32 %v21, %v31
  %v33 = vmul.f32 %v24, %v31
  %v34 = vmul.f32 %v27, %v31
  %v35 = vmul.f32 %v30, %v31
  %v36 = vsub.f32 %v14, %v32
  %v37 = vsub.f32 %v15, %v33
  %v38 = vsub.f32 %v16, %v34
  %v39 = vsub.f32 %v17, %v35
  %v40 = vmul.f32 %v36, %v36
  %v41 = vmul.f32 %v37, %v37
  %v42 = vmul.f32 %v38, %v38
  %v43 = vmul.f32 %v39, %v39
  %v44 = vsel %vm18, %v40, 0.0
  %45 = vadd.xlane.f32.xlu0 %v44
  %v46 = vpop.xlane.xlu0 %45
  %v47 = vsel %vm18, %v41, 0.0
  %48 = vadd.xlane.f32.xlu0 %v47
  %v49 = vpop.xlane.xlu0 %48
  %v50 = vsel %vm18, %v42, 0.0
  %51 = vadd.xlane.f32.xlu0 %v50
  %v52 = vpop.xlane.xlu0 %51
  %v53 = vsel %vm18, %v43, 0.0
  %54 = vadd.xlane.f32.xlu0 %v53
  %v55 = vpop.xlane.xlu0 %54
  %v56 = vmul.f32 %v46, %v31
  %v57 = vmul.f32 %v49, %v31
  %v58 = vmul.f32 %v52, %v31
  %v59 = vmul.f32 %v55, %v31
  %v60 = vadd.f32 %v56, 1e-05
  %v61 = vadd.f32 %v57, 1e-05
  %v62 = vadd.f32 %v58, 1e-05
  %v63 = vadd.f32 %v59, 1e-05
  %v64 = vrsqrt.pop %v60
  %v65 = vrsqrt.pop %v61
  %v66 = vrsqrt.pop %v62
  %v67 = vrsqrt.pop %v63
  %v68 = vmul.f32 %v36, %v64
  %v69 = vmul.f32 %v37, %v65
  %v70 = vmul.f32 %v38, %v66
  %v71 = vmul.f32 %v39, %v67
  %v72 = vld [vmem:[%s1] sm:$0x1]
  %v74 = vlaneseq
  %v75 = vshrl.u32 %v74, 7
  %v76 = vsub.s32 0, %v75
  %v77 = vrot.slane %v72, %v76
  %v79 = vmul.f32 %v68, %v77
  %v80 = vmul.f32 %v69, %v77
  %v81 = vmul.f32 %v70, %v77
  %v82 = vmul.f32 %v71, %v77
  %v83 = vld [vmem:[%s2] sm:$0x1]
  %v85 = vlaneseq
  %v86 = vshrl.u32 %v85, 7
  %v87 = vsub.s32 0, %v86
  %v88 = vrot.slane %v83, %v87
  %v90 = vadd.f32 %v79, %v88
  %v91 = vadd.f32 %v80, %v88
  %v92 = vadd.f32 %v81, %v88
  %v93 = vadd.f32 %v82, %v88
  %v94 = vpack.c.bf16 %v91, %v90
  %v95 = vpack.c.bf16 %v93, %v92
  %v98 = vunpack.c.l.b16 %v94
  %v99 = vunpack.c.h.b16 %v94
  %v100 = vunpack.c.l.b16 %v95
  %v101 = vunpack.c.h.b16 %v95
  %v102 = vpack.c.b16 %v98, %v98
  %v103 = vpack.c.b16 %v99, %v99
  %v104 = vpack.c.b16 %v100, %v100
  %v105 = vpack.c.b16 %v101, %v101
  %vm110 = vcmask 519168
  %111 = vst.msk [vmem:[%s3] sm:$0xf] %vm110, %v102
  %112 = vst.msk [vmem:[%s3 + $0x4] sm:$0xf] %vm110, %v103
  %113 = vst.msk [vmem:[%s3 + $0x8] sm:$0xf] %vm110, %v104
  %114 = vst.msk [vmem:[%s3 + $0xc] sm:$0xf] %vm110, %v105
  // Predicated region
  $region14: #{transformer_forward.20} parent=0 // pred_check
    _
  $region15: #{transformer_forward.20} parent=0 // pred_check_branch
    %116 = sbr.rel (0) target = $region17
  $region16: #{transformer_forward.20} parent=0 // pred_region
    _
  $region17: #{transformer_forward.20} parent=0 // pred_fallthru
    _
  // Predicated region
  $region18: #{transformer_forward.20} parent=0 // pred_check
    _
  $region19: #{transformer_forward.20} parent=0 // pred_check_branch
    %118 = sbr.rel (0) target = $region21
  $region20: #{transformer_forward.20} parent=0 // pred_region
    _
  $region21: #{transformer_forward.20} parent=0 // pred_fallthru
    _

// kernel: transformer_forward.24
$region0: #{transformer_forward.24}
  #allocation0 [shape = 'u32[]', space=smem, size = 0x4, offset = 0x4, fixed_abs, tag = 'smem constant byte address 0x4 - core index']
  #allocation1 [shape = 'u32[144,128]{1,0:T(1,128)}', space=vmem, size = 0x12000, scoped, tag = 'internal scratch']
  #allocation2 [shape = 'f32[4,16,1]{2,1,0:T(8,128)}', space=vmem, size = 0x8000, scoped, tag = 'scratch operand']
  #allocation3 [shape = 'f32[4,16,1]{2,1,0:T(8,128)}', space=vmem, size = 0x8000, scoped, tag = 'scratch operand']
  #allocation4 [shape = 'f32[4,16,16]{2,1,0:T(8,128)}', space=vmem, size = 0x8000, scoped, tag = 'scratch operand']
  %s0 = inlined_call_operand.vmem [shape: bf16[2,16,64], index: 0, kind: input, shape index: {}]
  %s1 = inlined_call_operand.vmem [shape: bf16[2,16,64], index: 1, kind: input, shape index: {}]
  %s2 = inlined_call_operand.vmem [shape: bf16[2,16,64], index: 2, kind: input, shape index: {}]
  %s3 = inlined_call_operand.vmem [shape: bf16[2,16,64], index: 3, kind: output, shape index: {}]
  %s4 = sld [smem:[#allocation0]]
  $region57: #{transformer_forward.24} parent=0
    _
  %s6 = ssub.s32 1, %s4
  %s7 = scalar_select 0, %s6, %s4
  loop: start=0, step=1, limit=4
  $region2: #{transformer_forward.24} parent=0 // loop_pre_header
    _
  $region3: #{transformer_forward.24} parent=0 // loop_header
    %s9 = sphi 0, %s13
    %p10 = scmp.ge.s32.totalorder %s9, 4
    %s16 = sphi 0, %s35
    %s17 = sphi 0, %s31
    %s18 = sphi 0, %s27
    %s19 = sphi 0, %s16
    %s20 = sphi 0, %s17
    %s21 = sphi 0, %s18
    %s22 = sphi 0, %s19
    %s23 = sphi 0, %s20
    %s24 = sphi 0, %s21
    %s40 = sphi 0, %s42
    %s43 = sphi 0, %s40
    %s44 = sphi 0, %s43
    %s60 = sphi 0, %s44
    %s68 = sphi 0, %s70
    %s71 = sphi 0, %s68
    %s72 = sphi 0, %s71
    %s88 = sphi 0, %s72
    %s96 = sphi 0, %s98
    %s99 = sphi 0, %s96
    %s100 = sphi 0, %s99
    %s116 = sphi 0, %s100
    %s124 = sphi 0, %s126
    %s127 = sphi 0, %s124
    %s128 = sphi 0, %s127
    %s144 = sphi 0, %s128
  $region4: #{transformer_forward.24} parent=0 // loop_header_branch
    %12 = sbr.rel (%p10) target = $region8
  $region5: #{transformer_forward.24} parent=0 // loop_body
    %s14 = ssub.s32 %s9, 1
    %s15 = ssub.s32 %s9, 2
    %s25 = sadd.s32 1, %s18
    %p26 = scmp.ge.s32.totalorder %s25, 1
    %s27 = scalar_select %p26, 0, %s25
    %s28 = sadd.s32 1, %s17
    %s29 = scalar_select %p26, %s28, %s17
    %p30 = scmp.ge.s32.totalorder %s29, 1
    %s31 = scalar_select %p30, 0, %s29
    %s32 = sadd.s32 1, %s16
    %s33 = scalar_select %p30, %s32, %s16
    %p34 = scmp.ge.s32.totalorder %s33, 2
    %s35 = scalar_select %p34, 0, %s33
    %s36 = ssub.s32 %s16, %s35
    %s37 = ssub.s32 %s17, %s31
    %s38 = sor.u32 %s36, %s37
    %p39 = scmp.eq.s32.totalorder %s38, 0
    %s41 = sadd.s32 %s40, 1
    %s42 = scalar_select %p39, %s40, %s41
    %p45 = pneg %p39
    %p46 = scmp.eq.s32.totalorder %s9, 1
    %p47 = por %p45, %p46
    %p48 = scmp.ne.s32.totalorder %s40, %s43
    %p49 = scmp.eq.s32.totalorder %s9, 0
    %p50 = por %p48, %p49
    %p51 = scmp.ne.s32.totalorder %s40, %s43
    %p52 = scmp.eq.s32.totalorder %s14, 1
    %p53 = por %p51, %p52
    %p54 = scmp.ne.s32.totalorder %s43, %s44
    %p55 = scmp.eq.s32.totalorder %s14, 0
    %p56 = por %p54, %p55
    %p57 = scmp.ne.s32.totalorder %s43, %s44
    %p58 = scmp.eq.s32.totalorder %s15, 1
    %p59 = por %p57, %p58
    %p61 = scmp.ne.s32.totalorder %s44, %s60
    %p62 = scmp.eq.s32.totalorder %s15, 0
    %p63 = por %p61, %p62
    %s64 = ssub.s32 %s16, %s35
    %s65 = ssub.s32 %s18, %s27
    %s66 = sor.u32 %s64, %s65
    %p67 = scmp.eq.s32.totalorder %s66, 0
    %s69 = sadd.s32 %s68, 1
    %s70 = scalar_select %p67, %s68, %s69
    %p73 = pneg %p67
    %p74 = scmp.eq.s32.totalorder %s9, 1
    %p75 = por %p73, %p74
    %p76 = scmp.ne.s32.totalorder %s68, %s71
    %p77 = scmp.eq.s32.totalorder %s9, 0
    %p78 = por %p76, %p77
    %p79 = scmp.ne.s32.totalorder %s68, %s71
    %p80 = scmp.eq.s32.totalorder %s14, 1
    %p81 = por %p79, %p80
    %p82 = scmp.ne.s32.totalorder %s71, %s72
    %p83 = scmp.eq.s32.totalorder %s14, 0
    %p84 = por %p82, %p83
    %p85 = scmp.ne.s32.totalorder %s71, %s72
    %p86 = scmp.eq.s32.totalorder %s15, 1
    %p87 = por %p85, %p86
    %p89 = scmp.ne.s32.totalorder %s72, %s88
    %p90 = scmp.eq.s32.totalorder %s15, 0
    %p91 = por %p89, %p90
    %s92 = ssub.s32 %s16, %s35
    %s93 = ssub.s32 %s18, %s27
    %s94 = sor.u32 %s92, %s93
    %p95 = scmp.eq.s32.totalorder %s94, 0
    %s97 = sadd.s32 %s96, 1
    %s98 = scalar_select %p95, %s96, %s97
    %p101 = pneg %p95
    %p102 = scmp.eq.s32.totalorder %s9, 1
    %p103 = por %p101, %p102
    %p104 = scmp.ne.s32.totalorder %s96, %s99
    %p105 = scmp.eq.s32.totalorder %s9, 0
    %p106 = por %p104, %p105
    %p107 = scmp.ne.s32.totalorder %s96, %s99
    %p108 = scmp.eq.s32.totalorder %s14, 1
    %p109 = por %p107, %p108
    %p110 = scmp.ne.s32.totalorder %s99, %s100
    %p111 = scmp.eq.s32.totalorder %s14, 0
    %p112 = por %p110, %p111
    %p113 = scmp.ne.s32.totalorder %s99, %s100
    %p114 = scmp.eq.s32.totalorder %s15, 1
    %p115 = por %p113, %p114
    %p117 = scmp.ne.s32.totalorder %s100, %s116
    %p118 = scmp.eq.s32.totalorder %s15, 0
    %p119 = por %p117, %p118
    %s120 = ssub.s32 %s16, %s35
    %s121 = ssub.s32 %s17, %s31
    %s122 = sor.u32 %s120, %s121
    %p123 = scmp.eq.s32.totalorder %s122, 0
    %s125 = sadd.s32 %s124, 1
    %s126 = scalar_select %p123, %s124, %s125
    %p129 = pneg %p123
    %p130 = scmp.eq.s32.totalorder %s9, 1
    %p131 = por %p129, %p130
    %p132 = scmp.ne.s32.totalorder %s124, %s127
    %p133 = scmp.eq.s32.totalorder %s9, 0
    %p134 = por %p132, %p133
    %p135 = scmp.ne.s32.totalorder %s124, %s127
    %p136 = scmp.eq.s32.totalorder %s14, 1
    %p137 = por %p135, %p136
    %p138 = scmp.ne.s32.totalorder %s127, %s128
    %p139 = scmp.eq.s32.totalorder %s14, 0
    %p140 = por %p138, %p139
    %p141 = scmp.ne.s32.totalorder %s127, %s128
    %p142 = scmp.eq.s32.totalorder %s15, 1
    %p143 = por %p141, %p142
    %p145 = scmp.ne.s32.totalorder %s128, %s144
    %p146 = scmp.eq.s32.totalorder %s15, 0
    %p147 = por %p145, %p146
    %p148 = scmp.le.s32.totalorder 1, %s9
    %p149 = scmp.lt.s32.totalorder %s9, 3
    %p150 = pnand %p148, %p149
    %p151 = pneg %p150
    // Predicated region
    $region9: #{transformer_forward.24} parent=5 // pred_check
      _
    $region10: #{transformer_forward.24} parent=5 // pred_check_branch
      %153 = sbr.rel (%p150) target = $region12
    $region11: #{transformer_forward.24} parent=5 // pred_region
      %s154 = ssub.s32 %s9, 1
    $region12: #{transformer_forward.24} parent=5 // pred_fallthru
      _
    %p155 = scmp.lt.s32.totalorder %s9, 2
    // Predicated region
    $region13: #{transformer_forward.24} parent=5 // pred_check
      %p156 = pneg %p155
    $region14: #{transformer_forward.24} parent=5 // pred_check_branch
      %158 = sbr.rel (%p156) target = $region16
    $region15: #{transformer_forward.24} parent=5 // pred_region
      // Predicated region
      $region17: #{transformer_forward.24} parent=15 // pred_check
        %p159 = pneg %p50
      $region18: #{transformer_forward.24} parent=15 // pred_check_branch
        %161 = sbr.rel (%p159) target = $region20
      $region19: #{transformer_forward.24} parent=15 // pred_region
        %s162 = smul.u32 2, %s17
        %p163 = scmp.lt.s32.totalorder %s16, 1
        %s164 = scalar_select %p163, %s16, 1
        %p165 = scmp.lt.s32.totalorder %s162, 1
        %s166 = scalar_select %p165, %s162, 1
        %s167 = smul.addr %s164, 2
        %s168 = sadd.s32 %s166, %s167
        %s169 = smul.addr %s168, 4
        %s170 = scalar_lea.vmem %s0, %s169
        %s171 = smul.u32 2, %s17
      $region20: #{transformer_forward.24} parent=15 // pred_fallthru
        _
      // Predicated region
      $region21: #{transformer_forward.24} parent=15 // pred_check
        %p172 = pneg %p78
      $region22: #{transformer_forward.24} parent=15 // pred_check_branch
        %174 = sbr.rel (%p172) target = $region24
      $region23: #{transformer_forward.24} parent=15 // pred_region
        %s175 = smul.u32 2, %s18
        %p176 = scmp.lt.s32.totalorder %s16, 1
        %s177 = scalar_select %p176, %s16, 1
        %p178 = scmp.lt.s32.totalorder %s175, 1
        %s179 = scalar_select %p178, %s175, 1
        %s180 = smul.addr %s177, 2
        %s181 = sadd.s32 %s179, %s180
        %s182 = smul.addr %s181, 4
        %s183 = scalar_lea.vmem %s1, %s182
        %s184 = smul.u32 2, %s18
      $region24: #{transformer_forward.24} parent=15 // pred_fallthru
        _
      // Predicated region
      $region25: #{transformer_forward.24} parent=15 // pred_check
        %p185 = pneg %p106
      $region26: #{transformer_forward.24} parent=15 // pred_check_branch
        %187 = sbr.rel (%p185) target = $region28
      $region27: #{transformer_forward.24} parent=15 // pred_region
        %s188 = smul.u32 2, %s18
        %p189 = scmp.lt.s32.totalorder %s16, 1
        %s190 = scalar_select %p189, %s16, 1
        %p191 = scmp.lt.s32.totalorder %s188, 1
        %s192 = scalar_select %p191, %s188, 1
        %s193 = smul.addr %s190, 2
        %s194 = sadd.s32 %s192, %s193
        %s195 = smul.addr %s194, 4
        %s196 = scalar_lea.vmem %s2, %s195
        %s197 = smul.u32 2, %s18
      $region28: #{transformer_forward.24} parent=15 // pred_fallthru
        _
    $region16: #{transformer_forward.24} parent=5 // pred_fallthru
      _
    %p198 = scmp.le.s32.totalorder 1, %s9
    %p199 = scmp.lt.s32.totalorder %s9, 3
    %p200 = pnand %p198, %p199
    %p201 = pneg %p200
    // Predicated region
    $region29: #{transformer_forward.24} parent=5 // pred_check
      _
    $region30: #{transformer_forward.24} parent=5 // pred_check_branch
      %203 = sbr.rel (%p200) target = $region32
    $region31: #{transformer_forward.24} parent=5 // pred_region
      %s204 = ssub.s32 %s9, 1
      %s205 = smul.u32 2, %s20
      %p206 = scmp.lt.s32.totalorder %s19, 1
      %s207 = scalar_select %p206, %s19, 1
      %p208 = scmp.lt.s32.totalorder %s205, 1
      %s209 = scalar_select %p208, %s205, 1
      %s210 = smul.addr %s207, 2
      %s211 = sadd.s32 %s209, %s210
      %s212 = smul.addr %s211, 4
      %s213 = scalar_lea.vmem %s0, %s212
      %p214 = pneg %p56
      %p215 = pneg %p53
      %s216 = smul.u32 2, %s21
      %p217 = scmp.lt.s32.totalorder %s19, 1
      %s218 = scalar_select %p217, %s19, 1
      %p219 = scmp.lt.s32.totalorder %s216, 1
      %s220 = scalar_select %p219, %s216, 1
      %s221 = smul.addr %s218, 2
      %s222 = sadd.s32 %s220, %s221
      %s223 = smul.addr %s222, 4
      %s224 = scalar_lea.vmem %s1, %s223
      %p225 = pneg %p84
      %p226 = pneg %p81
      %s227 = smul.u32 2, %s21
      %p228 = scmp.lt.s32.totalorder %s19, 1
      %s229 = scalar_select %p228, %s19, 1
      %p230 = scmp.lt.s32.totalorder %s227, 1
      %s231 = scalar_select %p230, %s227, 1
      %s232 = smul.addr %s229, 2
      %s233 = sadd.s32 %s231, %s232
      %s234 = smul.addr %s233, 4
      %s235 = scalar_lea.vmem %s2, %s234
      %p236 = pneg %p112
      %p237 = pneg %p109
      %p238 = pneg %p140
      %p239 = pneg %p137
      %s240 = smul.u32 2, %s20
      %p241 = scmp.lt.s32.totalorder %s19, 1
      %s242 = scalar_select %p241, %s19, 1
      %p243 = scmp.lt.s32.totalorder %s240, 1
      %s244 = scalar_select %p243, %s240, 1
      %s245 = smul.addr %s242, 2
      %s246 = sadd.s32 %s244, %s245
      %s247 = smul.addr %s246, 4
      %s248 = scalar_lea.vmem %s3, %s247
      %s249 = smul.u32 2, %s20
      %p250 = scmp.lt.s32.totalorder %s19, 1
      %s251 = scalar_select %p250, %s19, 1
      %p252 = scmp.lt.s32.totalorder %s249, 1
      %s253 = scalar_select %p252, %s249, 1
      %s254 = smul.addr %s251, 2
      %s255 = sadd.s32 %s253, %s254
      %s256 = smul.addr %s255, 4
      %s257 = scalar_lea.vmem %s0, %s256
      %s258 = smul.u32 2, %s20
      %s259 = smul.u32 2, %s21
      %p260 = scmp.lt.s32.totalorder %s19, 1
      %s261 = scalar_select %p260, %s19, 1
      %p262 = scmp.lt.s32.totalorder %s259, 1
      %s263 = scalar_select %p262, %s259, 1
      %s264 = smul.addr %s261, 2
      %s265 = sadd.s32 %s263, %s264
      %s266 = smul.addr %s265, 4
      %s267 = scalar_lea.vmem %s1, %s266
      %s268 = smul.u32 2, %s21
      %s269 = smul.u32 2, %s21
      %p270 = scmp.lt.s32.totalorder %s19, 1
      %s271 = scalar_select %p270, %s19, 1
      %p272 = scmp.lt.s32.totalorder %s269, 1
      %s273 = scalar_select %p272, %s269, 1
      %s274 = smul.addr %s271, 2
      %s275 = sadd.s32 %s273, %s274
      %s276 = smul.addr %s275, 4
      %s277 = scalar_lea.vmem %s2, %s276
      %s278 = smul.u32 2, %s21
      %s279 = smul.u32 2, %s20
      %p280 = scmp.lt.s32.totalorder %s19, 1
      %s281 = scalar_select %p280, %s19, 1
      %p282 = scmp.lt.s32.totalorder %s279, 1
      %s283 = scalar_select %p282, %s279, 1
      %s284 = smul.addr %s281, 2
      %s285 = sadd.s32 %s283, %s284
      %s286 = smul.addr %s285, 4
      %s287 = scalar_lea.vmem %s3, %s286
      %s288 = smul.u32 2, %s20
      %p290 = scmp.eq.s32.totalorder %s21, 0
      // Predicated region
      $region33: #{transformer_forward.24} parent=31 // pred_check
        %p291 = pneg %p290
      $region34: #{transformer_forward.24} parent=31 // pred_check_branch
        %293 = sbr.rel (%p291) target = $region36
      $region35: #{transformer_forward.24} parent=31 // pred_region
        %vm294 = vcmask 7168
        %295 = vst.msk [vmem:[#allocation2] sm:$0xff] %vm294, -1e+30
        %296 = vst.msk [vmem:[#allocation2 + $0x8] sm:$0xff] %vm294, -1e+30
        %297 = vst.msk [vmem:[#allocation2 + $0x10] sm:$0xff] %vm294, -1e+30
        %298 = vst.msk [vmem:[#allocation2 + $0x18] sm:$0xff] %vm294, -1e+30
        %299 = vst.msk [vmem:[#allocation2 + $0x20] sm:$0xff] %vm294, -1e+30
        %300 = vst.msk [vmem:[#allocation2 + $0x28] sm:$0xff] %vm294, -1e+30
        %301 = vst.msk [vmem:[#allocation2 + $0x30] sm:$0xff] %vm294, -1e+30
        %302 = vst.msk [vmem:[#allocation2 + $0x38] sm:$0xff] %vm294, -1e+30
        %303 = vst.msk [vmem:[#allocation3] sm:$0xff] %vm294, 0.0
        %304 = vst.msk [vmem:[#allocation3 + $0x8] sm:$0xff] %vm294, 0.0
        %305 = vst.msk [vmem:[#allocation3 + $0x10] sm:$0xff] %vm294, 0.0
        %306 = vst.msk [vmem:[#allocation3 + $0x18] sm:$0xff] %vm294, 0.0
        %307 = vst.msk [vmem:[#allocation3 + $0x20] sm:$0xff] %vm294, 0.0
        %308 = vst.msk [vmem:[#allocation3 + $0x28] sm:$0xff] %vm294, 0.0
        %309 = vst.msk [vmem:[#allocation3 + $0x30] sm:$0xff] %vm294, 0.0
        %310 = vst.msk [vmem:[#allocation3 + $0x38] sm:$0xff] %vm294, 0.0
        %vm311 = vcmask 130048
        %312 = vst.msk [vmem:[#allocation4] sm:$0xff] %vm311, 0.0
        %313 = vst.msk [vmem:[#allocation4 + $0x8] sm:$0xff] %vm311, 0.0
        %314 = vst.msk [vmem:[#allocation4 + $0x10] sm:$0xff] %vm311, 0.0
        %315 = vst.msk [vmem:[#allocation4 + $0x18] sm:$0xff] %vm311, 0.0
        %316 = vst.msk [vmem:[#allocation4 + $0x20] sm:$0xff] %vm311, 0.0
        %317 = vst.msk [vmem:[#allocation4 + $0x28] sm:$0xff] %vm311, 0.0
        %318 = vst.msk [vmem:[#allocation4 + $0x30] sm:$0xff] %vm311, 0.0
        %319 = vst.msk [vmem:[#allocation4 + $0x38] sm:$0xff] %vm311, 0.0
      $region36: #{transformer_forward.24} parent=31 // pred_fallthru
        _
      %p320 = scmp.le.s32.totalorder %s21, %s20
      // Predicated region
      $region37: #{transformer_forward.24} parent=31 // pred_check
        %p321 = pneg %p320
      $region38: #{transformer_forward.24} parent=31 // pred_check_branch
        %323 = sbr.rel (%p321) target = $region40
      $region39: #{transformer_forward.24} parent=31 // pred_region
        %v324 = vld [vmem:[%s257] sm:$0xf]
        %v325 = vld [vmem:[%s257 + $0x4] sm:$0xf]
        %v326 = vld [vmem:[%s267] sm:$0xf]
        %v327 = vld [vmem:[%s267 + $0x4] sm:$0xf]
        %v328 = vld [vmem:[%s277] sm:$0xf]
        %v329 = vld [vmem:[%s277 + $0x4] sm:$0xf]
        %s330 = smul.u32 %s20, 16
        %v331 = vlaneseq
        %v332 = vshrl.u32 %v331, 7
        %v333 = vadd.s32 %v332, 8
        %v334 = vstv %s330
        %v335 = vadd.s32 %v334, %v332
        %v336 = vadd.s32 %v334, %v333
        %s337 = smul.u32 %s21, 16
        %v338 = vlaneseq
        %v339 = vand.u32 %v338, 127
        %v340 = vstv %s337
        %v341 = vadd.s32 %v340, %v339
        %vm342 = vcmp.le.s32.totalorder %v341, %v335
        %vm343 = vcmp.le.s32.totalorder %v341, %v336
        %v346 = vunpack.c.l.b16 %v324
        %v347 = vunpack.c.l.b16 %v325
        %v348 = vpack.c.b16 %v347, %v346
        %v351 = vunpack.c.l.b16 %v326
        %v352 = vunpack.c.l.b16 %v327
        %v353 = vpack.c.b16 %v352, %v351
        %vm354 = vcmask 130048
        %v356 = vsel %vm354, %v348, 0
        %v359 = vsel %vm354, %v353, 0
        %361 = vmatprep.subr.bf16.mxu0 0
        %362 = vmatpush1.bf16.xpose.msra.mxu0 %v359
        %363 = vmatprep.subr.bf16.mxu0 0
        %364 = vmatpush1.bf16.xpose.msra.mxu0 0
        %365 = vmatprep.subr.bf16.mxu0 0
        %366 = vmatpush1.bf16.xpose.msra.mxu0 0
        %367 = vmatprep.subr.bf16.mxu0 0
        %368 = vmatpush1.bf16.xpose.msra.mxu0 0
        %369 = vmatprep.subr.bf16.mxu0 0
        %370 = vmatpush1.bf16.xpose.msra.mxu0 0
        %371 = vmatprep.subr.bf16.mxu0 0
        %372 = vmatpush1.bf16.xpose.msra.mxu0 0
        %373 = vmatprep.subr.bf16.mxu0 0
        %374 = vmatpush1.bf16.xpose.msra.mxu0 0
        %375 = vmatprep.subr.bf16.mxu0 0
        %376 = vmatpush1.bf16.xpose.msra.mxu0 0
        %377 = vmatprep.subr.bf16.mxu0 0
        %378 = vmatpush1.bf16.xpose.msra.mxu0 0
        %379 = vmatprep.subr.bf16.mxu0 0
        %380 = vmatpush1.bf16.xpose.msra.mxu0 0
        %381 = vmatprep.subr.bf16.mxu0 0
        %382 = vmatpush1.bf16.xpose.msra.mxu0 0
        %383 = vmatprep.subr.bf16.mxu0 0
        %384 = vmatpush1.bf16.xpose.msra.mxu0 0
        %385 = vmatprep.subr.bf16.mxu0 0
        %386 = vmatpush1.bf16.xpose.msra.mxu0 0
        %387 = vmatprep.subr.bf16.mxu0 0
        %388 = vmatpush1.bf16.xpose.msra.mxu0 0
        %389 = vmatprep.subr.bf16.mxu0 0
        %390 = vmatpush1.bf16.xpose.msra.mxu0 0
        %391 = vmatprep.subr.bf16.mxu0 0
        %392 = vmatpush1.bf16.xpose.msra.mxu0 0
        %393 = vmatprep.mubr.bf16.mxu0 0
        %394 = vmatmul.mubr.bf16.gmra.mrb[0].mxu0 %v356
        %v395 = vpop.f32.mrb[0].mxu0
        %v396 = vadd.f32 0.0, %v395
        %v397 = vpop.f32.mrb[0].mxu0
        %v398 = vpop.f32.mrb[0].mxu0
        %v399 = vadd.f32 0.0, %v398
        %v400 = vpop.f32.mrb[0].mxu0
        %401 = vdwg.mxu0
        %v402 = vmul.f32 %v396, 0.25
        %v403 = vmul.f32 %v399, 0.25
        %v404 = vsel %vm342, %v402, -1e+30
        %v405 = vsel %vm343, %v403, -1e+30
        %v406 = vld [vmem:[#allocation2] sm:$0xff]
        %v407 = vld [vmem:[#allocation2 + $0x8] sm:$0xff]
        %v408 = vsel %vm354, %v404, -inf
        %409 = vmax.xlane.f32.xlu0 %v408
        %v410 = vpop.xlane.xlu0 %409
        %v411 = vsel %vm354, %v405, -inf
        %412 = vmax.xlane.f32.xlu0 %v411
        %v413 = vpop.xlane.xlu0 %412
        %v414 = vmax.f32 %v406, %v410
        %v415 = vmax.f32 %v407, %v413
        %v416 = vsub.f32 %v406, %v414
        %v417 = vsub.f32 %v407, %v415
        %v418 = vmul.f32 %v416, 1.442695
        %v419 = vpow.pop %v418
        %v420 = vmul.f32 %v417, 1.442695
        %v421 = vpow.pop %v420
        %423 = vset.pattern.permute.xlu0 0
        %424 = vperm.xlu0 %423, %v414
        %v425 = vpop.permute.xlu0 %424
        %428 = vset.pattern.permute.xlu0 0
        %429 = vperm.xlu0 %428, %v415
        %v430 = vpop.permute.xlu0 %429
        %v432 = vsub.f32 %v404, %v425
        %v433 = vsub.f32 %v405, %v430
        %v434 = vmul.f32 %v432, 1.442695
        %v435 = vpow.pop %v434
        %v436 = vmul.f32 %v433, 1.442695
        %v437 = vpow.pop %v436
        %v438 = vld [vmem:[#allocation3] sm:$0xff]
        %v439 = vld [vmem:[#allocation3 + $0x8] sm:$0xff]
        %v440 = vmul.f32 %v419, %v438
        %v441 = vmul.f32 %v421, %v439
        %v442 = vsel %vm354, %v435, 0.0
        %443 = vadd.xlane.f32.xlu0 %v442
        %v444 = vpop.xlane.xlu0 %443
        %v445 = vsel %vm354, %v437, 0.0
        %446 = vadd.xlane.f32.xlu0 %v445
        %v447 = vpop.xlane.xlu0 %446
        %v448 = vadd.f32 %v440, %v444
        %v449 = vadd.f32 %v441, %v447
        %vm450 = vcmask 7168
        %451 = vst.msk [vmem:[#allocation3] sm:$0xff] %vm450, %v448
        %452 = vst.msk [vmem:[#allocation3 + $0x8] sm:$0xff] %vm450, %v449
        %v453 = vld [vmem:[#allocation4] sm:$0xff]
        %v454 = vld [vmem:[#allocation4 + $0x8] sm:$0xff]
        %456 = vset.pattern.permute.xlu0 0
        %457 = vperm.xlu0 %456, %v419
        %v458 = vpop.permute.xlu0 %457
        %461 = vset.pattern.permute.xlu0 0
        %462 = vperm.xlu0 %461, %v421
        %v463 = vpop.permute.xlu0 %462
        %v465 = vmul.f32 %v458, %v453
        %v466 = vmul.f32 %v463, %v454
        %v467 = vpack.c.bf16 %v437, %v435
        %v470 = vunpack.c.l.b16 %v328
        %v471 = vunpack.c.l.b16 %v329
        %v472 = vpack.c.b16 %v471, %v470
        %v475 = vsel %vm354, %v467, 0
        %477 = vmatprep.subr.bf16.mxu0 0
        %478 = vmatpush1.bf16.msra.mxu0 %v472
        %479 = vmatprep.subr.bf16.mxu0 0
        %480 = vmatpush1.bf16.msra.mxu0 0
        %481 = vmatprep.subr.bf16.mxu0 0
        %482 = vmatpush1.bf16.msra.mxu0 0
        %483 = vmatprep.subr.bf16.mxu0 0
        %484 = vmatpush1.bf16.msra.mxu0 0
        %485 = vmatprep.subr.bf16.mxu0 0
        %486 = vmatpush1.bf16.msra.mxu0 0
        %487 = vmatprep.subr.bf16.mxu0 0
        %488 = vmatpush1.bf16.msra.mxu0 0
        %489 = vmatprep.subr.bf16.mxu0 0
        %490 = vmatpush1.bf16.msra.mxu0 0
        %491 = vmatprep.subr.bf16.mxu0 0
        %492 = vmatpush1.bf16.msra.mxu0 0
        %493 = vmatprep.subr.bf16.mxu0 0
        %494 = vmatpush1.bf16.msra.mxu0 0
        %495 = vmatprep.subr.bf16.mxu0 0
        %496 = vmatpush1.bf16.msra.mxu0 0
        %497 = vmatprep.subr.bf16.mxu0 0
        %498 = vmatpush1.bf16.msra.mxu0 0
        %499 = vmatprep.subr.bf16.mxu0 0
        %500 = vmatpush1.bf16.msra.mxu0 0
        %501 = vmatprep.subr.bf16.mxu0 0
        %502 = vmatpush1.bf16.msra.mxu0 0
        %503 = vmatprep.subr.bf16.mxu0 0
        %504 = vmatpush1.bf16.msra.mxu0 0
        %505 = vmatprep.subr.bf16.mxu0 0
        %506 = vmatpush1.bf16.msra.mxu0 0
        %507 = vmatprep.subr.bf16.mxu0 0
        %508 = vmatpush1.bf16.msra.mxu0 0
        %509 = vmatprep.mubr.bf16.mxu0 0
        %510 = vmatmul.mubr.bf16.gmra.mrb[0].mxu0 %v475
        %v511 = vpop.f32.mrb[0].mxu0
        %v512 = vadd.f32 0.0, %v511
        %v513 = vpop.f32.mrb[0].mxu0
        %v514 = vpop.f32.mrb[0].mxu0
        %v515 = vadd.f32 0.0, %v514
        %v516 = vpop.f32.mrb[0].mxu0
        %517 = vdwg.mxu0
        %v518 = vadd.f32 %v465, %v512
        %v519 = vadd.f32 %v466, %v515
        %520 = vst.msk [vmem:[#allocation4] sm:$0xff] %vm354, %v518
        %521 = vst.msk [vmem:[#allocation4 + $0x8] sm:$0xff] %vm354, %v519
        %522 = vst.msk [vmem:[#allocation2] sm:$0xff] %vm450, %v414
        %523 = vst.msk [vmem:[#allocation2 + $0x8] sm:$0xff] %vm450, %v415
        %524 = vrot.lane.b32.xlu0 %v348, 112
        %v525 = vpop.permute.xlu0 %524
        %526 = vrot.lane.b32.xlu0 %v353, 112
        %v527 = vpop.permute.xlu0 %526
        %v529 = vsel %vm354, %v525, 0
        %v532 = vsel %vm354, %v527, 0
        %534 = vmatprep.subr.bf16.mxu0 0
        %535 = vmatpush1.bf16.xpose.msra.mxu0 %v532
        %536 = vmatprep.subr.bf16.mxu0 0
        %537 = vmatpush1.bf16.xpose.msra.mxu0 0
        %538 = vmatprep.subr.bf16.mxu0 0
        %539 = vmatpush1.bf16.xpose.msra.mxu0 0
        %540 = vmatprep.subr.bf16.mxu0 0
        %541 = vmatpush1.bf16.xpose.msra.mxu0 0
        %542 = vmatprep.subr.bf16.mxu0 0
        %543 = vmatpush1.bf16.xpose.msra.mxu0 0
        %544 = vmatprep.subr.bf16.mxu0 0
        %545 = vmatpush1.bf16.xpose.msra.mxu0 0
        %546 = vmatprep.subr.bf16.mxu0 0
        %547 = vmatpush1.bf16.xpose.msra.mxu0 0
        %548 = vmatprep.subr.bf16.mxu0 0
        %549 = vmatpush1.bf16.xpose.msra.mxu0 0
        %550 = vmatprep.subr.bf16.mxu0 0
        %551 = vmatpush1.bf16.xpose.msra.mxu0 0
        %552 = vmatprep.subr.bf16.mxu0 0
        %553 = vmatpush1.bf16.xpose.msra.mxu0 0
        %554 = vmatprep.subr.bf16.mxu0 0
        %555 = vmatpush1.bf16.xpose.msra.mxu0 0
        %556 = vmatprep.subr.bf16.mxu0 0
        %557 = vmatpush1.bf16.xpose.msra.mxu0 0
        %558 = vmatprep.subr.bf16.mxu0 0
        %559 = vmatpush1.bf16.xpose.msra.mxu0 0
        %560 = vmatprep.subr.bf16.mxu0 0
        %561 = vmatpush1.bf16.xpose.msra.mxu0 0
        %562 = vmatprep.subr.bf16.mxu0 0
        %563 = vmatpush1.bf16.xpose.msra.mxu0 0
        %564 = vmatprep.subr.bf16.mxu0 0
        %565 = vmatpush1.bf16.xpose.msra.mxu0 0
        %566 = vmatprep.mubr.bf16.mxu0 0
        %567 = vmatmul.mubr.bf16.gmra.mrb[0].mxu0 %v529
        %v568 = vpop.f32.mrb[0].mxu0
        %v569 = vadd.f32 0.0, %v568
        %v570 = vpop.f32.mrb[0].mxu0
        %v571 = vpop.f32.mrb[0].mxu0
        %v572 = vadd.f32 0.0, %v571
        %v573 = vpop.f32.mrb[0].mxu0
        %574 = vdwg.mxu0
        %v575 = vmul.f32 %v569, 0.25
        %v576 = vmul.f32 %v572, 0.25
        %v577 = vsel %vm342, %v575, -1e+30
        %v578 = vsel %vm343, %v576, -1e+30
        %s579 = scalar_lea.vmem [#allocation2], 16
        %v580 = vld [vmem:[%s579] sm:$0xff]
        %v581 = vld [vmem:[%s579 + $0x8] sm:$0xff]
        %v582 = vsel %vm354, %v577, -inf
        %583 = vmax.xlane.f32.xlu0 %v582
        %v584 = vpop.xlane.xlu0 %583
        %v585 = vsel %vm354, %v578, -inf
        %586 = vmax.xlane.f32.xlu0 %v585
        %v587 = vpop.xlane.xlu0 %586
        %v588 = vmax.f32 %v580, %v584
        %v589 = vmax.f32 %v581, %v587
        %v590 = vsub.f32 %v580, %v588
        %v591 = vsub.f32 %v581, %v589
        %v592 = vmul.f32 %v590, 1.442695
        %v593 = vpow.pop %v592
        %v594 = vmul.f32 %v591, 1.442695
        %v595 = vpow.pop %v594
        %597 = vset.pattern.permute.xlu0 0
        %598 = vperm.xlu0 %597, %v588
        %v599 = vpop.permute.xlu0 %598
        %602 = vset.pattern.permute.xlu0 0
        %603 = vperm.xlu0 %602, %v589
        %v604 = vpop.permute.xlu0 %603
        %v606 = vsub.f32 %v577, %v599
        %v607 = vsub.f32 %v578, %v604
        %v608 = vmul.f32 %v606, 1.442695
        %v609 = vpow.pop %v608
        %v610 = vmul.f32 %v607, 1.442695
        %v611 = vpow.pop %v610
        %s612 = scalar_lea.vmem [#allocation3], 16
        %v613 = vld [vmem:[%s612] sm:$0xff]
        %v614 = vld [vmem:[%s612 + $0x8] sm:$0xff]
        %v615 = vmul.f32 %v593, %v613
        %v616 = vmul.f32 %v595, %v614
        %v617 = vsel %vm354, %v609, 0.0
        %618 = vadd.xlane.f32.xlu0 %v617
        %v619 = vpop.xlane.xlu0 %618
        %v620 = vsel %vm354, %v611, 0.0
        %621 = vadd.xlane.f32.xlu0 %v620
        %v622 = vpop.xlane.xlu0 %621
        %v623 = vadd.f32 %v615, %v619
        %v624 = vadd.f32 %v616, %v622
        %625 = vst.msk [vmem:[%s612] sm:$0xff] %vm450, %v623
        %626 = vst.msk [vmem:[%s612 + $0x8] sm:$0xff] %vm450, %v624
        %s627 = scalar_lea.vmem [#allocation4], 16
        %v628 = vld [vmem:[%s627] sm:$0xff]
        %v629 = vld [vmem:[%s627 + $0x8] sm:$0xff]
        %631 = vset.pattern.permute.xlu0 0
        %632 = vperm.xlu0 %631, %v593
        %v633 = vpop.permute.xlu0 %632
        %636 = vset.pattern.permute.xlu0 0
        %637 = vperm.xlu0 %636, %v595
        %v638 = vpop.permute.xlu0 %637
        %v640 = vmul.f32 %v633, %v628
        %v641 = vmul.f32 %v638, %v629
        %v642 = vpack.c.bf16 %v611, %v609
        %643 = vrot.lane.b32.xlu0 %v472, 112
        %v644 = vpop.permute.xlu0 %643
        %v647 = vsel %vm354, %v642, 0
        %649 = vmatprep.subr.bf16.mxu0 0
        %650 = vmatpush1.bf16.msra.mxu0 %v644
        %651 = vmatprep.subr.bf16.mxu0 0
        %652 = vmatpush1.bf16.msra.mxu0 0
        %653 = vmatprep.subr.bf16.mxu0 0
        %654 = vmatpush1.bf16.msra.mxu0 0
        %655 = vmatprep.subr.bf16.mxu0 0
        %656 = vmatpush1.bf16.msra.mxu0 0
        %657 = vmatprep.subr.bf16.mxu0 0
        %658 = vmatpush1.bf16.msra.mxu0 0
        %659 = vmatprep.subr.bf16.mxu0 0
        %660 = vmatpush1.bf16.msra.mxu0 0
        %661 = vmatprep.subr.bf16.mxu0 0
        %662 = vmatpush1.bf16.msra.mxu0 0
        %663 = vmatprep.subr.bf16.mxu0 0
        %664 = vmatpush1.bf16.msra.mxu0 0
        %665 = vmatprep.subr.bf16.mxu0 0
        %666 = vmatpush1.bf16.msra.mxu0 0
        %667 = vmatprep.subr.bf16.mxu0 0
        %668 = vmatpush1.bf16.msra.mxu0 0
        %669 = vmatprep.subr.bf16.mxu0 0
        %670 = vmatpush1.bf16.msra.mxu0 0
        %671 = vmatprep.subr.bf16.mxu0 0
        %672 = vmatpush1.bf16.msra.mxu0 0
        %673 = vmatprep.subr.bf16.mxu0 0
        %674 = vmatpush1.bf16.msra.mxu0 0
        %675 = vmatprep.subr.bf16.mxu0 0
        %676 = vmatpush1.bf16.msra.mxu0 0
        %677 = vmatprep.subr.bf16.mxu0 0
        %678 = vmatpush1.bf16.msra.mxu0 0
        %679 = vmatprep.subr.bf16.mxu0 0
        %680 = vmatpush1.bf16.msra.mxu0 0
        %681 = vmatprep.mubr.bf16.mxu0 0
        %682 = vmatmul.mubr.bf16.gmra.mrb[0].mxu0 %v647
        %v683 = vpop.f32.mrb[0].mxu0
        %v684 = vadd.f32 0.0, %v683
        %v685 = vpop.f32.mrb[0].mxu0
        %v686 = vpop.f32.mrb[0].mxu0
        %v687 = vadd.f32 0.0, %v686
        %v688 = vpop.f32.mrb[0].mxu0
        %689 = vdwg.mxu0
        %v690 = vadd.f32 %v640, %v684
        %v691 = vadd.f32 %v641, %v687
        %692 = vst.msk [vmem:[%s627] sm:$0xff] %vm354, %v690
        %693 = vst.msk [vmem:[%s627 + $0x8] sm:$0xff] %vm354, %v691
        %694 = vst.msk [vmem:[%s579] sm:$0xff] %vm450, %v588
        %695 = vst.msk [vmem:[%s579 + $0x8] sm:$0xff] %vm450, %v589
        %696 = vrot.lane.b32.xlu0 %v348, 96
        %v697 = vpop.permute.xlu0 %696
        %698 = vrot.lane.b32.xlu0 %v353, 96
        %v699 = vpop.permute.xlu0 %698
        %v701 = vsel %vm354, %v697, 0
        %v704 = vsel %vm354, %v699, 0
        %706 = vmatprep.subr.bf16.mxu0 0
        %707 = vmatpush1.bf16.xpose.msra.mxu0 %v704
        %708 = vmatprep.subr.bf16.mxu0 0
        %709 = vmatpush1.bf16.xpose.msra.mxu0 0
        %710 = vmatprep.subr.bf16.mxu0 0
        %711 = vmatpush1.bf16.xpose.msra.mxu0 0
        %712 = vmatprep.subr.bf16.mxu0 0
        %713 = vmatpush1.bf16.xpose.msra.mxu0 0
        %714 = vmatprep.subr.bf16.mxu0 0
        %715 = vmatpush1.bf16.xpose.msra.mxu0 0
        %716 = vmatprep.subr.bf16.mxu0 0
        %717 = vmatpush1.bf16.xpose.msra.mxu0 0
        %718 = vmatprep.subr.bf16.mxu0 0
        %719 = vmatpush1.bf16.xpose.msra.mxu0 0
        %720 = vmatprep.subr.bf16.mxu0 0
        %721 = vmatpush1.bf16.xpose.msra.mxu0 0
        %722 = vmatprep.subr.bf16.mxu0 0
        %723 = vmatpush1.bf16.xpose.msra.mxu0 0
        %724 = vmatprep.subr.bf16.mxu0 0
        %725 = vmatpush1.bf16.xpose.msra.mxu0 0
        %726 = vmatprep.subr.bf16.mxu0 0
        %727 = vmatpush1.bf16.xpose.msra.mxu0 0
        %728 = vmatprep.subr.bf16.mxu0 0
        %729 = vmatpush1.bf16.xpose.msra.mxu0 0
        %730 = vmatprep.subr.bf16.mxu0 0
        %731 = vmatpush1.bf16.xpose.msra.mxu0 0
        %732 = vmatprep.subr.bf16.mxu0 0
        %733 = vmatpush1.bf16.xpose.msra.mxu0 0
        %734 = vmatprep.subr.bf16.mxu0 0
        %735 = vmatpush1.bf16.xpose.msra.mxu0 0
        %736 = vmatprep.subr.bf16.mxu0 0
        %737 = vmatpush1.bf16.xpose.msra.mxu0 0
        %738 = vmatprep.mubr.bf16.mxu0 0
        %739 = vmatmul.mubr.bf16.gmra.mrb[0].mxu0 %v701
        %v740 = vpop.f32.mrb[0].mxu0
        %v741 = vadd.f32 0.0, %v740
        %v742 = vpop.f32.mrb[0].mxu0
        %v743 = vpop.f32.mrb[0].mxu0
        %v744 = vadd.f32 0.0, %v743
        %v745 = vpop.f32.mrb[0].mxu0
        %746 = vdwg.mxu0
        %v747 = vmul.f32 %v741, 0.25
        %v748 = vmul.f32 %v744, 0.25
        %v749 = vsel %vm342, %v747, -1e+30
        %v750 = vsel %vm343, %v748, -1e+30
        %s751 = scalar_lea.vmem [#allocation2], 32
        %v752 = vld [vmem:[%s751] sm:$0xff]
        %v753 = vld [vmem:[%s751 + $0x8] sm:$0xff]
        %v754 = vsel %vm354, %v749, -inf
        %755 = vmax.xlane.f32.xlu0 %v754
        %v756 = vpop.xlane.xlu0 %755
        %v757 = vsel %vm354, %v750, -inf
        %758 = vmax.xlane.f32.xlu0 %v757
        %v759 = vpop.xlane.xlu0 %758
        %v760 = vmax.f32 %v752, %v756
        %v761 = vmax.f32 %v753, %v759
        %v762 = vsub.f32 %v752, %v760
        %v763 = vsub.f32 %v753, %v761
        %v764 = vmul.f32 %v762, 1.442695
        %v765 = vpow.pop %v764
        %v766 = vmul.f32 %v763, 1.442695
        %v767 = vpow.pop %v766
        %769 = vset.pattern.permute.xlu0 0
        %770 = vperm.xlu0 %769, %v760
        %v771 = vpop.permute.xlu0 %770
        %774 = vset.pattern.permute.xlu0 0
        %775 = vperm.xlu0 %774, %v761
        %v776 = vpop.permute.xlu0 %775
        %v778 = vsub.f32 %v749, %v771
        %v779 = vsub.f32 %v750, %v776
        %v780 = vmul.f32 %v778, 1.442695
        %v781 = vpow.pop %v780
        %v782 = vmul.f32 %v779, 1.442695
        %v783 = vpow.pop %v782
        %s784 = scalar_lea.vmem [#allocation3], 32
        %v785 = vld [vmem:[%s784] sm:$0xff]
        %v786 = vld [vmem:[%s784 + $0x8] sm:$0xff]
        %v787 = vmul.f32 %v765, %v785
        %v788 = vmul.f32 %v767, %v786
        %v789 = vsel %vm354, %v781, 0.0
        %790 = vadd.xlane.f32.xlu0 %v789
        %v791 = vpop.xlane.xlu0 %790
        %v792 = vsel %vm354, %v783, 0.0
        %793 = vadd.xlane.f32.xlu0 %v792
        %v794 = vpop.xlane.xlu0 %793
        %v795 = vadd.f32 %v787, %v791
        %v796 = vadd.f32 %v788, %v794
        %797 = vst.msk [vmem:[%s784] sm:$0xff] %vm450, %v795
        %798 = vst.msk [vmem:[%s784 + $0x8] sm:$0xff] %vm450, %v796
        %s799 = scalar_lea.vmem [#allocation4], 32
        %v800 = vld [vmem:[%s799] sm:$0xff]
        %v801 = vld [vmem:[%s799 + $0x8] sm:$0xff]
        %803 = vset.pattern.permute.xlu0 0
        %804 = vperm.xlu0 %803, %v765
        %v805 = vpop.permute.xlu0 %804
        %808 = vset.pattern.permute.xlu0 0
        %809 = vperm.xlu0 %808, %v767
        %v810 = vpop.permute.xlu0 %809
        %v812 = vmul.f32 %v805, %v800
        %v813 = vmul.f32 %v810, %v801
        %v814 = vpack.c.bf16 %v783, %v781
        %815 = vrot.lane.b32.xlu0 %v472, 96
        %v816 = vpop.permute.xlu0 %815
        %v819 = vsel %vm354, %v814, 0
        %821 = vmatprep.subr.bf16.mxu0 0
        %822 = vmatpush1.bf16.msra.mxu0 %v816
        %823 = vmatprep.subr.bf16.mxu0 0
        %824 = vmatpush1.bf16.msra.mxu0 0
        %825 = vmatprep.subr.bf16.mxu0 0
        %826 = vmatpush1.bf16.msra.mxu0 0
        %827 = vmatprep.subr.bf16.mxu0 0
        %828 = vmatpush1.bf16.msra.mxu0 0
        %829 = vmatprep.subr.bf16.mxu0 0
        %830 = vmatpush1.bf16.msra.mxu0 0
        %831 = vmatprep.subr.bf16.mxu0 0
        %832 = vmatpush1.bf16.msra.mxu0 0
        %833 = vmatprep.subr.bf16.mxu0 0
        %834 = vmatpush1.bf16.msra.mxu0 0
        %835 = vmatprep.subr.bf16.mxu0 0
        %836 = vmatpush1.bf16.msra.mxu0 0
        %837 = vmatprep.subr.bf16.mxu0 0
        %838 = vmatpush1.bf16.msra.mxu0 0
        %839 = vmatprep.subr.bf16.mxu0 0
        %840 = vmatpush1.bf16.msra.mxu0 0
        %841 = vmatprep.subr.bf16.mxu0 0
        %842 = vmatpush1.bf16.msra.mxu0 0
        %843 = vmatprep.subr.bf16.mxu0 0
        %844 = vmatpush1.bf16.msra.mxu0 0
        %845 = vmatprep.subr.bf16.mxu0 0
        %846 = vmatpush1.bf16.msra.mxu0 0
        %847 = vmatprep.subr.bf16.mxu0 0
        %848 = vmatpush1.bf16.msra.mxu0 0
        %849 = vmatprep.subr.bf16.mxu0 0
        %850 = vmatpush1.bf16.msra.mxu0 0
        %851 = vmatprep.subr.bf16.mxu0 0
        %852 = vmatpush1.bf16.msra.mxu0 0
        %853 = vmatprep.mubr.bf16.mxu0 0
        %854 = vmatmul.mubr.bf16.gmra.mrb[0].mxu0 %v819
        %v855 = vpop.f32.mrb[0].mxu0
        %v856 = vadd.f32 0.0, %v855
        %v857 = vpop.f32.mrb[0].mxu0
        %v858 = vpop.f32.mrb[0].mxu0
        %v859 = vadd.f32 0.0, %v858
        %v860 = vpop.f32.mrb[0].mxu0
        %861 = vdwg.mxu0
        %v862 = vadd.f32 %v812, %v856
        %v863 = vadd.f32 %v813, %v859
        %864 = vst.msk [vmem:[%s799] sm:$0xff] %vm354, %v862
        %865 = vst.msk [vmem:[%s799 + $0x8] sm:$0xff] %vm354, %v863
        %866 = vst.msk [vmem:[%s751] sm:$0xff] %vm450, %v760
        %867 = vst.msk [vmem:[%s751 + $0x8] sm:$0xff] %vm450, %v761
        %868 = vrot.lane.b32.xlu0 %v348, 80
        %v869 = vpop.permute.xlu0 %868
        %870 = vrot.lane.b32.xlu0 %v353, 80
        %v871 = vpop.permute.xlu0 %870
        %v873 = vsel %vm354, %v869, 0
        %v876 = vsel %vm354, %v871, 0
        %878 = vmatprep.subr.bf16.mxu0 0
        %879 = vmatpush1.bf16.xpose.msra.mxu0 %v876
        %880 = vmatprep.subr.bf16.mxu0 0
        %881 = vmatpush1.bf16.xpose.msra.mxu0 0
        %882 = vmatprep.subr.bf16.mxu0 0
        %883 = vmatpush1.bf16.xpose.msra.mxu0 0
        %884 = vmatprep.subr.bf16.mxu0 0
        %885 = vmatpush1.bf16.xpose.msra.mxu0 0
        %886 = vmatprep.subr.bf16.mxu0 0
        %887 = vmatpush1.bf16.xpose.msra.mxu0 0
        %888 = vmatprep.subr.bf16.mxu0 0
        %889 = vmatpush1.bf16.xpose.msra.mxu0 0
        %890 = vmatprep.subr.bf16.mxu0 0
        %891 = vmatpush1.bf16.xpose.msra.mxu0 0
        %892 = vmatprep.subr.bf16.mxu0 0
        %893 = vmatpush1.bf16.xpose.msra.mxu0 0
        %894 = vmatprep.subr.bf16.mxu0 0
        %895 = vmatpush1.bf16.xpose.msra.mxu0 0
        %896 = vmatprep.subr.bf16.mxu0 0
        %897 = vmatpush1.bf16.xpose.msra.mxu0 0
        %898 = vmatprep.subr.bf16.mxu0 0
        %899 = vmatpush1.bf16.xpose.msra.mxu0 0
        %900 = vmatprep.subr.bf16.mxu0 0
        %901 = vmatpush1.bf16.xpose.msra.mxu0 0
        %902 = vmatprep.subr.bf16.mxu0 0
        %903 = vmatpush1.bf16.xpose.msra.mxu0 0
        %904 = vmatprep.subr.bf16.mxu0 0
        %905 = vmatpush1.bf16.xpose.msra.mxu0 0
        %906 = vmatprep.subr.bf16.mxu0 0
        %907 = vmatpush1.bf16.xpose.msra.mxu0 0
        %908 = vmatprep.subr.bf16.mxu0 0
        %909 = vmatpush1.bf16.xpose.msra.mxu0 0
        %910 = vmatprep.mubr.bf16.mxu0 0
        %911 = vmatmul.mubr.bf16.gmra.mrb[0].mxu0 %v873
        %v912 = vpop.f32.mrb[0].mxu0
        %v913 = vadd.f32 0.0, %v912
        %v914 = vpop.f32.mrb[0].mxu0
        %v915 = vpop.f32.mrb[0].mxu0
        %v916 = vadd.f32 0.0, %v915
        %v917 = vpop.f32.mrb[0].mxu0
        %918 = vdwg.mxu0
        %v919 = vmul.f32 %v913, 0.25
        %v920 = vmul.f32 %v916, 0.25
        %v921 = vsel %vm342, %v919, -1e+30
        %v922 = vsel %vm343, %v920, -1e+30
        %s923 = scalar_lea.vmem [#allocation2], 48
        %v924 = vld [vmem:[%s923] sm:$0xff]
        %v925 = vld [vmem:[%s923 + $0x8] sm:$0xff]
        %v926 = vsel %vm354, %v921, -inf
        %927 = vmax.xlane.f32.xlu0 %v926
        %v928 = vpop.xlane.xlu0 %927
        %v929 = vsel %vm354, %v922, -inf
        %930 = vmax.xlane.f32.xlu0 %v929
        %v931 = vpop.xlane.xlu0 %930
        %v932 = vmax.f32 %v924, %v928
        %v933 = vmax.f32 %v925, %v931
        %v934 = vsub.f32 %v924, %v932
        %v935 = vsub.f32 %v925, %v933
        %v936 = vmul.f32 %v934, 1.442695
        %v937 = vpow.pop %v936
        %v938 = vmul.f32 %v935, 1.442695
        %v939 = vpow.pop %v938
        %941 = vset.pattern.permute.xlu0 0
        %942 = vperm.xlu0 %941, %v932
        %v943 = vpop.permute.xlu0 %942
        %946 = vset.pattern.permute.xlu0 0
        %947 = vperm.xlu0 %946, %v933
        %v948 = vpop.permute.xlu0 %947
        %v950 = vsub.f32 %v921, %v943
        %v951 = vsub.f32 %v922, %v948
        %v952 = vmul.f32 %v950, 1.442695
        %v953 = vpow.pop %v952
        %v954 = vmul.f32 %v951, 1.442695
        %v955 = vpow.pop %v954
        %s956 = scalar_lea.vmem [#allocation3], 48
        %v957 = vld [vmem:[%s956] sm:$0xff]
        %v958 = vld [vmem:[%s956 + $0x8] sm:$0xff]
        %v959 = vmul.f32 %v937, %v957
        %v960 = vmul.f32 %v939, %v958
        %v961 = vsel %vm354, %v953, 0.0
        %962 = vadd.xlane.f32.xlu0 %v961
        %v963 = vpop.xlane.xlu0 %962
        %v964 = vsel %vm354, %v955, 0.0
        %965 = vadd.xlane.f32.xlu0 %v964
        %v966 = vpop.xlane.xlu0 %965
        %v967 = vadd.f32 %v959, %v963
        %v968 = vadd.f32 %v960, %v966
        %969 = vst.msk [vmem:[%s956] sm:$0xff] %vm450, %v967
        %970 = vst.msk [vmem:[%s956 + $0x8] sm:$0xff] %vm450, %v968
        %s971 = scalar_lea.vmem [#allocation4], 48
        %v972 = vld [vmem:[%s971] sm:$0xff]
        %v973 = vld [vmem:[%s971 + $0x8] sm:$0xff]
        %975 = vset.pattern.permute.xlu0 0
        %976 = vperm.xlu0 %975, %v937
        %v977 = vpop.permute.xlu0 %976
        %980 = vset.pattern.permute.xlu0 0
        %981 = vperm.xlu0 %980, %v939
        %v982 = vpop.permute.xlu0 %981
        %v984 = vmul.f32 %v977, %v972
        %v985 = vmul.f32 %v982, %v973
        %v986 = vpack.c.bf16 %v955, %v953
        %987 = vrot.lane.b32.xlu0 %v472, 80
        %v988 = vpop.permute.xlu0 %987
        %v991 = vsel %vm354, %v986, 0
        %993 = vmatprep.subr.bf16.mxu0 0
        %994 = vmatpush1.bf16.msra.mxu0 %v988
        %995 = vmatprep.subr.bf16.mxu0 0
        %996 = vmatpush1.bf16.msra.mxu0 0
        %997 = vmatprep.subr.bf16.mxu0 0
        %998 = vmatpush1.bf16.msra.mxu0 0
        %999 = vmatprep.subr.bf16.mxu0 0
        %1000 = vmatpush1.bf16.msra.mxu0 0
        %1001 = vmatprep.subr.bf16.mxu0 0
        %1002 = vmatpush1.bf16.msra.mxu0 0
        %1003 = vmatprep.subr.bf16.mxu0 0
        %1004 = vmatpush1.bf16.msra.mxu0 0
        %1005 = vmatprep.subr.bf16.mxu0 0
        %1006 = vmatpush1.bf16.msra.mxu0 0
        %1007 = vmatprep.subr.bf16.mxu0 0
        %1008 = vmatpush1.bf16.msra.mxu0 0
        %1009 = vmatprep.subr.bf16.mxu0 0
        %1010 = vmatpush1.bf16.msra.mxu0 0
        %1011 = vmatprep.subr.bf16.mxu0 0
        %1012 = vmatpush1.bf16.msra.mxu0 0
        %1013 = vmatprep.subr.bf16.mxu0 0
        %1014 = vmatpush1.bf16.msra.mxu0 0
        %1015 = vmatprep.subr.bf16.mxu0 0
        %1016 = vmatpush1.bf16.msra.mxu0 0
        %1017 = vmatprep.subr.bf16.mxu0 0
        %1018 = vmatpush1.bf16.msra.mxu0 0
        %1019 = vmatprep.subr.bf16.mxu0 0
        %1020 = vmatpush1.bf16.msra.mxu0 0
        %1021 = vmatprep.subr.bf16.mxu0 0
        %1022 = vmatpush1.bf16.msra.mxu0 0
        %1023 = vmatprep.subr.bf16.mxu0 0
        %1024 = vmatpush1.bf16.msra.mxu0 0
        %1025 = vmatprep.mubr.bf16.mxu0 0
        %1026 = vmatmul.mubr.bf16.gmra.mrb[0].mxu0 %v991
        %v1027 = vpop.f32.mrb[0].mxu0
        %v1028 = vadd.f32 0.0, %v1027
        %v1029 = vpop.f32.mrb[0].mxu0
        %v1030 = vpop.f32.mrb[0].mxu0
        %v1031 = vadd.f32 0.0, %v1030
        %v1032 = vpop.f32.mrb[0].mxu0
        %1033 = vdwg.mxu0
        %v1034 = vadd.f32 %v984, %v1028
        %v1035 = vadd.f32 %v985, %v1031
        %1036 = vst.msk [vmem:[%s971] sm:$0xff] %vm354, %v1034
        %1037 = vst.msk [vmem:[%s971 + $0x8] sm:$0xff] %vm354, %v1035
        %1038 = vst.msk [vmem:[%s923] sm:$0xff] %vm450, %v932
        %1039 = vst.msk [vmem:[%s923 + $0x8] sm:$0xff] %vm450, %v933
      $region40: #{transformer_forward.24} parent=31 // pred_fallthru
        _
      // Predicated region
      $region41: #{transformer_forward.24} parent=31 // pred_check
        %p1040 = pneg %p290
      $region42: #{transformer_forward.24} parent=31 // pred_check_branch
        %1042 = sbr.rel (%p1040) target = $region44
      $region43: #{transformer_forward.24} parent=31 // pred_region
        %v1043 = vld [vmem:[#allocation3] sm:$0xff]
        %v1044 = vld [vmem:[#allocation3 + $0x8] sm:$0xff]
        %v1045 = vrcp.pop %v1043
        %v1046 = vrcp.pop %v1044
        %v1047 = vld [vmem:[#allocation4] sm:$0xff]
        %v1048 = vld [vmem:[#allocation4 + $0x8] sm:$0xff]
        %1050 = vset.pattern.permute.xlu0 0
        %1051 = vperm.xlu0 %1050, %v1045
        %v1052 = vpop.permute.xlu0 %1051
        %1055 = vset.pattern.permute.xlu0 0
        %1056 = vperm.xlu0 %1055, %v1046
        %v1057 = vpop.permute.xlu0 %1056
        %v1059 = vmul.f32 %v1047, %v1052
        %v1060 = vmul.f32 %v1048, %v1057
        %v1061 = vpack.c.bf16 %v1060, %v1059
        %v1063 = vunpack.c.l.b16 %v1061
        %v1064 = vunpack.c.h.b16 %v1061
        %v1065 = vpack.c.b16 %v1063, %v1063
        %v1066 = vpack.c.b16 %v1064, %v1064
        %vm1069 = vcmask 125952
        %1070 = vst.msk [vmem:[%s287] sm:$0xf] %vm1069, %v1065
        %1071 = vst.msk [vmem:[%s287 + $0x4] sm:$0xf] %vm1069, %v1066
        %s1072 = scalar_lea.vmem [#allocation3], 16
        %v1073 = vld [vmem:[%s1072] sm:$0xff]
        %v1074 = vld [vmem:[%s1072 + $0x8] sm:$0xff]
        %v1075 = vrcp.pop %v1073
        %v1076 = vrcp.pop %v1074
        %s1077 = scalar_lea.vmem [#allocation4], 16
        %v1078 = vld [vmem:[%s1077] sm:$0xff]
        %v1079 = vld [vmem:[%s1077 + $0x8] sm:$0xff]
        %1081 = vset.pattern.permute.xlu0 0
        %1082 = vperm.xlu0 %1081, %v1075
        %v1083 = vpop.permute.xlu0 %1082
        %1086 = vset.pattern.permute.xlu0 0
        %1087 = vperm.xlu0 %1086, %v1076
        %v1088 = vpop.permute.xlu0 %1087
        %v1090 = vmul.f32 %v1078, %v1083
        %v1091 = vmul.f32 %v1079, %v1088
        %v1092 = vpack.c.bf16 %v1091, %v1090
        %v1094 = vunpack.c.l.b16 %v1092
        %v1095 = vunpack.c.h.b16 %v1092
        %v1096 = vpack.c.b16 %v1094, %v1094
        %v1097 = vpack.c.b16 %v1095, %v1095
        %1098 = vrot.lane.b32.xlu0 %v1096, 16
        %v1099 = vpop.permute.xlu0 %1098
        %1100 = vrot.lane.b32.xlu0 %v1097, 16
        %v1101 = vpop.permute.xlu0 %1100
        %vm1104 = vcmask 257152
        %1105 = vst.msk [vmem:[%s287] sm:$0xf] %vm1104, %v1099
        %1106 = vst.msk [vmem:[%s287 + $0x4] sm:$0xf] %vm1104, %v1101
        %s1107 = scalar_lea.vmem [#allocation3], 32
        %v1108 = vld [vmem:[%s1107] sm:$0xff]
        %v1109 = vld [vmem:[%s1107 + $0x8] sm:$0xff]
        %v1110 = vrcp.pop %v1108
        %v1111 = vrcp.pop %v1109
        %s1112 = scalar_lea.vmem [#allocation4], 32
        %v1113 = vld [vmem:[%s1112] sm:$0xff]
        %v1114 = vld [vmem:[%s1112 + $0x8] sm:$0xff]
        %1116 = vset.pattern.permute.xlu0 0
        %1117 = vperm.xlu0 %1116, %v1110
        %v1118 = vpop.permute.xlu0 %1117
        %1121 = vset.pattern.permute.xlu0 0
        %1122 = vperm.xlu0 %1121, %v1111
        %v1123 = vpop.permute.xlu0 %1122
        %v1125 = vmul.f32 %v1113, %v1118
        %v1126 = vmul.f32 %v1114, %v1123
        %v1127 = vpack.c.bf16 %v1126, %v1125
        %v1129 = vunpack.c.l.b16 %v1127
        %v1130 = vunpack.c.h.b16 %v1127
        %v1131 = vpack.c.b16 %v1129, %v1129
        %v1132 = vpack.c.b16 %v1130, %v1130
        %1133 = vrot.lane.b32.xlu0 %v1131, 32
        %v1134 = vpop.permute.xlu0 %1133
        %1135 = vrot.lane.b32.xlu0 %v1132, 32
        %v1136 = vpop.permute.xlu0 %1135
        %vm1139 = vcmask 388352
        %1140 = vst.msk [vmem:[%s287] sm:$0xf] %vm1139, %v1134
        %1141 = vst.msk [vmem:[%s287 + $0x4] sm:$0xf] %vm1139, %v1136
        %s1142 = scalar_lea.vmem [#allocation3], 48
        %v1143 = vld [vmem:[%s1142] sm:$0xff]
        %v1144 = vld [vmem:[%s1142 + $0x8] sm:$0xff]
        %v1145 = vrcp.pop %v1143
        %v1146 = vrcp.pop %v1144
        %s1147 = scalar_lea.vmem [#allocation4], 48
        %v1148 = vld [vmem:[%s1147] sm:$0xff]
        %v1149 = vld [vmem:[%s1147 + $0x8] sm:$0xff]
        %1151 = vset.pattern.permute.xlu0 0
        %1152 = vperm.xlu0 %1151, %v1145
        %v1153 = vpop.permute.xlu0 %1152
        %1156 = vset.pattern.permute.xlu0 0
        %1157 = vperm.xlu0 %1156, %v1146
        %v1158 = vpop.permute.xlu0 %1157
        %v1160 = vmul.f32 %v1148, %v1153
        %v1161 = vmul.f32 %v1149, %v1158
        %v1162 = vpack.c.bf16 %v1161, %v1160
        %v1164 = vunpack.c.l.b16 %v1162
        %v1165 = vunpack.c.h.b16 %v1162
        %v1166 = vpack.c.b16 %v1164, %v1164
        %v1167 = vpack.c.b16 %v1165, %v1165
        %1168 = vrot.lane.b32.xlu0 %v1166, 48
        %v1169 = vpop.permute.xlu0 %1168
        %1170 = vrot.lane.b32.xlu0 %v1167, 48
        %v1171 = vpop.permute.xlu0 %1170
        %vm1174 = vcmask 519552
        %1175 = vst.msk [vmem:[%s287] sm:$0xf] %vm1174, %v1169
        %1176 = vst.msk [vmem:[%s287 + $0x4] sm:$0xf] %vm1174, %v1171
      $region44: #{transformer_forward.24} parent=31 // pred_fallthru
        _
      %s1177 = smul.u32 2, %s20
      %p1178 = scmp.lt.s32.totalorder %s19, 1
      %s1179 = scalar_select %p1178, %s19, 1
      %p1180 = scmp.lt.s32.totalorder %s1177, 1
      %s1181 = scalar_select %p1180, %s1177, 1
      %s1182 = smul.addr %s1179, 2
      %s1183 = sadd.s32 %s1181, %s1182
      %s1184 = smul.addr %s1183, 4
      %s1185 = scalar_lea.vmem %s3, %s1184
      // Predicated region
      $region45: #{transformer_forward.24} parent=31 // pred_check
        %p1186 = pneg %p137
      $region46: #{transformer_forward.24} parent=31 // pred_check_branch
        %1188 = sbr.rel (%p1186) target = $region48
      $region47: #{transformer_forward.24} parent=31 // pred_region
        %s1189 = smul.u32 2, %s20
      $region48: #{transformer_forward.24} parent=31 // pred_fallthru
        _
    $region32: #{transformer_forward.24} parent=5 // pred_fallthru
      _
    %p1190 = scmp.le.s32.totalorder 2, %s9
    // Predicated region
    $region49: #{transformer_forward.24} parent=5 // pred_check
      %p1191 = pneg %p1190
    $region50: #{transformer_forward.24} parent=5 // pred_check_branch
      %1193 = sbr.rel (%p1191) target = $region52
    $region51: #{transformer_forward.24} parent=5 // pred_region
      %s1194 = ssub.s32 %s9, 2
      // Predicated region
      $region53: #{transformer_forward.24} parent=51 // pred_check
        %p1195 = pneg %p143
      $region54: #{transformer_forward.24} parent=51 // pred_check_branch
        %1197 = sbr.rel (%p1195) target = $region56
      $region55: #{transformer_forward.24} parent=51 // pred_region
        %s1198 = smul.u32 2, %s23
        %p1199 = scmp.lt.s32.totalorder %s22, 1
        %s1200 = scalar_select %p1199, %s22, 1
        %p1201 = scmp.lt.s32.totalorder %s1198, 1
        %s1202 = scalar_select %p1201, %s1198, 1
        %s1203 = smul.addr %s1200, 2
        %s1204 = sadd.s32 %s1202, %s1203
        %s1205 = smul.addr %s1204, 4
        %s1206 = scalar_lea.vmem %s3, %s1205
      $region56: #{transformer_forward.24} parent=51 // pred_fallthru
        _
    $region52: #{transformer_forward.24} parent=5 // pred_fallthru
      _
  $region6: #{transformer_forward.24} parent=0 // loop_footer
    %s13 = sadd.s32 1, %s9
  $region7: #{transformer_forward.24} parent=0 // loop_footer_branch
    %8 = sbr.rel target = $region3
  $region8: #{transformer_forward.24} parent=0 // loop_exit
    _

// kernel: transformer_forward.27
$region0: #{transformer_forward.27}
  #allocation0 [shape = 'u32[]', space=smem, size = 0x4, offset = 0x4, fixed_abs, tag = 'smem constant byte address 0x4 - core index']
  #allocation1 [shape = 'u32[144,128]{1,0:T(1,128)}', space=vmem, size = 0x12000, scoped, tag = 'internal scratch']
  #allocation2 [shape = 'f32[32,256]{1,0:T(8,128)}', space=vmem, size = 0x8000, scoped, tag = 'scratch operand']
  %s0 = inlined_call_operand.vmem [shape: bf16[32,128], index: 0, kind: input, shape index: {}]
  %s1 = inlined_call_operand.vmem [shape: bf16[128,256], index: 1, kind: input, shape index: {}]
  %s2 = inlined_call_operand.vmem [shape: f32[1,256], index: 2, kind: input, shape index: {}]
  %s3 = inlined_call_operand.vmem [shape: bf16[32,256], index: 3, kind: output, shape index: {}]
  %s4 = sld [smem:[#allocation0]]
  $region30: #{transformer_forward.27} parent=0
    _
  %s6 = ssub.s32 1, %s4
  %s7 = scalar_select 0, %s6, %s4
  // Predicated region
  $region2: #{transformer_forward.27} parent=0 // pred_check
    _
  $region3: #{transformer_forward.27} parent=0 // pred_check_branch
    %9 = sbr.rel (0) target = $region5
  $region4: #{transformer_forward.27} parent=0 // pred_region
    _
  $region5: #{transformer_forward.27} parent=0 // pred_fallthru
    _
  // Predicated region
  $region6: #{transformer_forward.27} parent=0 // pred_check
    _
  $region7: #{transformer_forward.27} parent=0 // pred_check_branch
    %11 = sbr.rel (0) target = $region9
  $region8: #{transformer_forward.27} parent=0 // pred_region
    _
  $region9: #{transformer_forward.27} parent=0 // pred_fallthru
    _
  // Predicated region
  $region10: #{transformer_forward.27} parent=0 // pred_check
    _
  $region11: #{transformer_forward.27} parent=0 // pred_check_branch
    %13 = sbr.rel (0) target = $region13
  $region12: #{transformer_forward.27} parent=0 // pred_region
    _
  $region13: #{transformer_forward.27} parent=0 // pred_fallthru
    _
  %p15 = scmp.eq.s32.totalorder 0, 0
  // Predicated region
  $region14: #{transformer_forward.27} parent=0 // pred_check
    %p16 = pneg %p15
  $region15: #{transformer_forward.27} parent=0 // pred_check_branch
    %18 = sbr.rel (%p16) target = $region17
  $region16: #{transformer_forward.27} parent=0 // pred_region
    %19 = vst [vmem:[#allocation2] sm:$0xff] 0.0
    %20 = vst [vmem:[#allocation2 + $0x8] sm:$0xff] 0.0
    %21 = vst [vmem:[#allocation2 + $0x10] sm:$0xff] 0.0
    %22 = vst [vmem:[#allocation2 + $0x18] sm:$0xff] 0.0
    %23 = vst [vmem:[#allocation2 + $0x20] sm:$0xff] 0.0
    %24 = vst [vmem:[#allocation2 + $0x28] sm:$0xff] 0.0
    %25 = vst [vmem:[#allocation2 + $0x30] sm:$0xff] 0.0
    %26 = vst [vmem:[#allocation2 + $0x38] sm:$0xff] 0.0
  $region17: #{transformer_forward.27} parent=0 // pred_fallthru
    _
  %v27 = vld [vmem:[#allocation2] sm:$0xff]
  %v28 = vld [vmem:[#allocation2 + $0x8] sm:$0xff]
  %v29 = vld [vmem:[#allocation2 + $0x10] sm:$0xff]
  %v30 = vld [vmem:[#allocation2 + $0x18] sm:$0xff]
  %v31 = vld [vmem:[#allocation2 + $0x20] sm:$0xff]
  %v32 = vld [vmem:[#allocation2 + $0x28] sm:$0xff]
  %v33 = vld [vmem:[#allocation2 + $0x30] sm:$0xff]
  %v34 = vld [vmem:[#allocation2 + $0x38] sm:$0xff]
  %v35 = vld [vmem:[%s0] sm:$0xf]
  %v36 = vld [vmem:[%s0 + $0x4] sm:$0xf]
  %v37 = vld [vmem:[%s0 + $0x8] sm:$0xf]
  %v38 = vld [vmem:[%s0 + $0xc] sm:$0xf]
  %v39 = vld [vmem:[%s1] sm:$0xff]
  %v40 = vld [vmem:[%s1 + $0x8] sm:$0xff]
  %v41 = vld [vmem:[%s1 + $0x10] sm:$0xff]
  %v42 = vld [vmem:[%s1 + $0x18] sm:$0xff]
  %v43 = vld [vmem:[%s1 + $0x20] sm:$0xff]
  %v44 = vld [vmem:[%s1 + $0x28] sm:$0xff]
  %v45 = vld [vmem:[%s1 + $0x30] sm:$0xff]
  %v46 = vld [vmem:[%s1 + $0x38] sm:$0xff]
  %v47 = vld [vmem:[%s1 + $0x40] sm:$0xff]
  %v48 = vld [vmem:[%s1 + $0x48] sm:$0xff]
  %v49 = vld [vmem:[%s1 + $0x50] sm:$0xff]
  %v50 = vld [vmem:[%s1 + $0x58] sm:$0xff]
  %v51 = vld [vmem:[%s1 + $0x60] sm:$0xff]
  %v52 = vld [vmem:[%s1 + $0x68] sm:$0xff]
  %v53 = vld [vmem:[%s1 + $0x70] sm:$0xff]
  %v54 = vld [vmem:[%s1 + $0x78] sm:$0xff]
  %v59 = vunpack.c.l.b16 %v35
  %v60 = vunpack.c.l.b16 %v36
  %v61 = vunpack.c.l.b16 %v37
  %v62 = vunpack.c.l.b16 %v38
  %v63 = vpack.c.b16 %v60, %v59
  %v64 = vpack.c.b16 %v62, %v61
  %v83 = vunpack.c.l.b16 %v39
  %v84 = vunpack.c.h.b16 %v39
  %v85 = vunpack.c.l.b16 %v40
  %v86 = vunpack.c.h.b16 %v40
  %v87 = vunpack.c.l.b16 %v41
  %v88 = vunpack.c.h.b16 %v41
  %v89 = vunpack.c.l.b16 %v42
  %v90 = vunpack.c.h.b16 %v42
  %v91 = vunpack.c.l.b16 %v43
  %v92 = vunpack.c.h.b16 %v43
  %v93 = vunpack.c.l.b16 %v44
  %v94 = vunpack.c.h.b16 %v44
  %v95 = vunpack.c.l.b16 %v45
  %v96 = vunpack.c.h.b16 %v45
  %v97 = vunpack.c.l.b16 %v46
  %v98 = vunpack.c.h.b16 %v46
  %v99 = vunpack.c.l.b16 %v47
  %v100 = vunpack.c.h.b16 %v47
  %v101 = vunpack.c.l.b16 %v48
  %v102 = vunpack.c.h.b16 %v48
  %v103 = vunpack.c.l.b16 %v49
  %v104 = vunpack.c.h.b16 %v49
  %v105 = vunpack.c.l.b16 %v50
  %v106 = vunpack.c.h.b16 %v50
  %v107 = vunpack.c.l.b16 %v51
  %v108 = vunpack.c.h.b16 %v51
  %v109 = vunpack.c.l.b16 %v52
  %v110 = vunpack.c.h.b16 %v52
  %v111 = vunpack.c.l.b16 %v53
  %v112 = vunpack.c.h.b16 %v53
  %v113 = vunpack.c.l.b16 %v54
  %v114 = vunpack.c.h.b16 %v54
  %v115 = vpack.c.b16 %v85, %v83
  %v116 = vpack.c.b16 %v86, %v84
  %v117 = vpack.c.b16 %v89, %v87
  %v118 = vpack.c.b16 %v90, %v88
  %v119 = vpack.c.b16 %v93, %v91
  %v120 = vpack.c.b16 %v94, %v92
  %v121 = vpack.c.b16 %v97, %v95
  %v122 = vpack.c.b16 %v98, %v96
  %v123 = vpack.c.b16 %v101, %v99
  %v124 = vpack.c.b16 %v102, %v100
  %v125 = vpack.c.b16 %v105, %v103
  %v126 = vpack.c.b16 %v106, %v104
  %v127 = vpack.c.b16 %v109, %v107
  %v128 = vpack.c.b16 %v110, %v108
  %v129 = vpack.c.b16 %v113, %v111
  %v130 = vpack.c.b16 %v114, %v112
  %147 = vmatprep.subr.bf16.mxu0 %v116
  %148 = vmatpush1.bf16.msra.mxu0 %v115
  %149 = vmatprep.subr.bf16.mxu0 %v118
  %150 = vmatpush1.bf16.msra.mxu0 %v117
  %151 = vmatprep.subr.bf16.mxu0 %v120
  %152 = vmatpush1.bf16.msra.mxu0 %v119
  %153 = vmatprep.subr.bf16.mxu0 %v122
  %154 = vmatpush1.bf16.msra.mxu0 %v121
  %155 = vmatprep.subr.bf16.mxu0 %v124
  %156 = vmatpush1.bf16.msra.mxu0 %v123
  %157 = vmatprep.subr.bf16.mxu0 %v126
  %158 = vmatpush1.bf16.msra.mxu0 %v125
  %159 = vmatprep.subr.bf16.mxu0 %v128
  %160 = vmatpush1.bf16.msra.mxu0 %v127
  %161 = vmatprep.subr.bf16.mxu0 %v130
  %162 = vmatpush1.bf16.msra.mxu0 %v129
  %163 = vmatprep.subr.bf16.mxu0 0
  %164 = vmatpush1.bf16.msra.mxu0 0
  %165 = vmatprep.subr.bf16.mxu0 0
  %166 = vmatpush1.bf16.msra.mxu0 0
  %167 = vmatprep.subr.bf16.mxu0 0
  %168 = vmatpush1.bf16.msra.mxu0 0
  %169 = vmatprep.subr.bf16.mxu0 0
  %170 = vmatpush1.bf16.msra.mxu0 0
  %171 = vmatprep.subr.bf16.mxu0 0
  %172 = vmatpush1.bf16.msra.mxu0 0
  %173 = vmatprep.subr.bf16.mxu0 0
  %174 = vmatpush1.bf16.msra.mxu0 0
  %175 = vmatprep.subr.bf16.mxu0 0
  %176 = vmatpush1.bf16.msra.mxu0 0
  %177 = vmatprep.subr.bf16.mxu0 0
  %178 = vmatpush1.bf16.msra.mxu0 0
  %179 = vmatprep.mubr.bf16.mxu0 0
  %180 = vmatmul.mubr.bf16.gmra.mrb[0].mxu0 %v63
  %v181 = vpop.f32.mrb[0].mxu0
  %v182 = vadd.f32 0.0, %v181
  %v183 = vpop.f32.mrb[0].mxu0
  %v184 = vadd.f32 0.0, %v183
  %v185 = vpop.f32.mrb[0].mxu0
  %v186 = vadd.f32 0.0, %v185
  %v187 = vpop.f32.mrb[0].mxu0
  %v188 = vadd.f32 0.0, %v187
  %189 = vmatprep.mubr.bf16.mxu0 0
  %190 = vmatmul.mubr.bf16.gmra.mrb[0].mxu0 %v64
  %v191 = vpop.f32.mrb[0].mxu0
  %v192 = vadd.f32 0.0, %v191
  %v193 = vpop.f32.mrb[0].mxu0
  %v194 = vadd.f32 0.0, %v193
  %v195 = vpop.f32.mrb[0].mxu0
  %v196 = vadd.f32 0.0, %v195
  %v197 = vpop.f32.mrb[0].mxu0
  %v198 = vadd.f32 0.0, %v197
  %199 = vdwg.mxu0
  %v200 = vadd.f32 %v27, %v182
  %v201 = vadd.f32 %v28, %v184
  %v202 = vadd.f32 %v29, %v186
  %v203 = vadd.f32 %v30, %v188
  %v204 = vadd.f32 %v31, %v192
  %v205 = vadd.f32 %v32, %v194
  %v206 = vadd.f32 %v33, %v196
  %v207 = vadd.f32 %v34, %v198
  %208 = vst [vmem:[#allocation2] sm:$0xff] %v200
  %209 = vst [vmem:[#allocation2 + $0x8] sm:$0xff] %v201
  %210 = vst [vmem:[#allocation2 + $0x10] sm:$0xff] %v202
  %211 = vst [vmem:[#allocation2 + $0x18] sm:$0xff] %v203
  %212 = vst [vmem:[#allocation2 + $0x20] sm:$0xff] %v204
  %213 = vst [vmem:[#allocation2 + $0x28] sm:$0xff] %v205
  %214 = vst [vmem:[#allocation2 + $0x30] sm:$0xff] %v206
  %215 = vst [vmem:[#allocation2 + $0x38] sm:$0xff] %v207
  // Predicated region
  $region18: #{transformer_forward.27} parent=0 // pred_check
    %p216 = pneg %p15
  $region19: #{transformer_forward.27} parent=0 // pred_check_branch
    %218 = sbr.rel (%p216) target = $region21
  $region20: #{transformer_forward.27} parent=0 // pred_region
    %v219 = vld [vmem:[#allocation2] sm:$0xff]
    %v220 = vld [vmem:[#allocation2 + $0x8] sm:$0xff]
    %v221 = vld [vmem:[#allocation2 + $0x10] sm:$0xff]
    %v222 = vld [vmem:[#allocation2 + $0x18] sm:$0xff]
    %v223 = vld [vmem:[#allocation2 + $0x20] sm:$0xff]
    %v224 = vld [vmem:[#allocation2 + $0x28] sm:$0xff]
    %v225 = vld [vmem:[#allocation2 + $0x30] sm:$0xff]
    %v226 = vld [vmem:[#allocation2 + $0x38] sm:$0xff]
    %v227 = vld [vmem:[%s2] sm:$0x3]
    %v229 = vlaneseq
    %v230 = vshrl.u32 %v229, 7
    %v231 = vsub.s32 0, %v230
    %v232 = vrot.slane %v227, %v231
    %v233 = vlaneseq
    %v234 = vshrl.u32 %v233, 7
    %v235 = vsub.s32 1, %v234
    %v236 = vrot.slane %v227, %v235
    %v239 = vadd.f32 %v219, %v232
    %v240 = vadd.f32 %v220, %v236
    %v241 = vadd.f32 %v221, %v232
    %v242 = vadd.f32 %v222, %v236
    %v243 = vadd.f32 %v223, %v232
    %v244 = vadd.f32 %v224, %v236
    %v245 = vadd.f32 %v225, %v232
    %v246 = vadd.f32 %v226, %v236
    %v247 = vmul.f32 %v239, 0.5
    %v248 = vmul.f32 %v240, 0.5
    %v249 = vmul.f32 %v241, 0.5
    %v250 = vmul.f32 %v242, 0.5
    %v251 = vmul.f32 %v243, 0.5
    %v252 = vmul.f32 %v244, 0.5
    %v253 = vmul.f32 %v245, 0.5
    %v254 = vmul.f32 %v246, 0.5
    %v255 = vmul.f32 %v239, 0.044715
    %v256 = vmul.f32 %v240, 0.044715
    %v257 = vmul.f32 %v241, 0.044715
    %v258 = vmul.f32 %v242, 0.044715
    %v259 = vmul.f32 %v243, 0.044715
    %v260 = vmul.f32 %v244, 0.044715
    %v261 = vmul.f32 %v245, 0.044715
    %v262 = vmul.f32 %v246, 0.044715
    %v263 = vmul.f32 %v255, %v239
    %v264 = vmul.f32 %v256, %v240
    %v265 = vmul.f32 %v257, %v241
    %v266 = vmul.f32 %v258, %v242
    %v267 = vmul.f32 %v259, %v243
    %v268 = vmul.f32 %v260, %v244
    %v269 = vmul.f32 %v261, %v245
    %v270 = vmul.f32 %v262, %v246
    %v271 = vmul.f32 %v263, %v239
    %v272 = vmul.f32 %v264, %v240
    %v273 = vmul.f32 %v265, %v241
    %v274 = vmul.f32 %v266, %v242
    %v275 = vmul.f32 %v267, %v243
    %v276 = vmul.f32 %v268, %v244
    %v277 = vmul.f32 %v269, %v245
    %v278 = vmul.f32 %v270, %v246
    %v279 = vadd.f32 %v239, %v271
    %v280 = vadd.f32 %v240, %v272
    %v281 = vadd.f32 %v241, %v273
    %v282 = vadd.f32 %v242, %v274
    %v283 = vadd.f32 %v243, %v275
    %v284 = vadd.f32 %v244, %v276
    %v285 = vadd.f32 %v245, %v277
    %v286 = vadd.f32 %v246, %v278
    %v287 = vmul.f32 %v279, 0.7978846
    %v288 = vmul.f32 %v280, 0.7978846
    %v289 = vmul.f32 %v281, 0.7978846
    %v290 = vmul.f32 %v282, 0.7978846
    %v291 = vmul.f32 %v283, 0.7978846
    %v292 = vmul.f32 %v284, 0.7978846
    %v293 = vmul.f32 %v285, 0.7978846
    %v294 = vmul.f32 %v286, 0.7978846
    %v295 = vtanh.pop %v287
    %v296 = vtanh.pop %v288
    %v297 = vtanh.pop %v289
    %v298 = vtanh.pop %v290
    %v299 = vtanh.pop %v291
    %v300 = vtanh.pop %v292
    %v301 = vtanh.pop %v293
    %v302 = vtanh.pop %v294
    %v303 = vadd.f32 %v295, 1.0
    %v304 = vadd.f32 %v296, 1.0
    %v305 = vadd.f32 %v297, 1.0
    %v306 = vadd.f32 %v298, 1.0
    %v307 = vadd.f32 %v299, 1.0
    %v308 = vadd.f32 %v300, 1.0
    %v309 = vadd.f32 %v301, 1.0
    %v310 = vadd.f32 %v302, 1.0
    %v311 = vmul.f32 %v247, %v303
    %v312 = vmul.f32 %v248, %v304
    %v313 = vmul.f32 %v249, %v305
    %v314 = vmul.f32 %v250, %v306
    %v315 = vmul.f32 %v251, %v307
    %v316 = vmul.f32 %v252, %v308
    %v317 = vmul.f32 %v253, %v309
    %v318 = vmul.f32 %v254, %v310
    %v319 = vpack.c.bf16 %v313, %v311
    %v320 = vpack.c.bf16 %v314, %v312
    %v321 = vpack.c.bf16 %v317, %v315
    %v322 = vpack.c.bf16 %v318, %v316
    %v327 = vunpack.c.l.b16 %v319
    %v328 = vunpack.c.l.b16 %v320
    %v329 = vunpack.c.h.b16 %v319
    %v330 = vunpack.c.h.b16 %v320
    %v331 = vunpack.c.l.b16 %v321
    %v332 = vunpack.c.l.b16 %v322
    %v333 = vunpack.c.h.b16 %v321
    %v334 = vunpack.c.h.b16 %v322
    %v335 = vpack.c.b16 %v328, %v327
    %v336 = vpack.c.b16 %v330, %v329
    %v337 = vpack.c.b16 %v332, %v331
    %v338 = vpack.c.b16 %v334, %v333
    %343 = vst [vmem:[%s3] sm:$0xff] %v335
    %344 = vst [vmem:[%s3 + $0x8] sm:$0xff] %v336
    %345 = vst [vmem:[%s3 + $0x10] sm:$0xff] %v337
    %346 = vst [vmem:[%s3 + $0x18] sm:$0xff] %v338
  $region21: #{transformer_forward.27} parent=0 // pred_fallthru
    _
  // Predicated region
  $region22: #{transformer_forward.27} parent=0 // pred_check
    _
  $region23: #{transformer_forward.27} parent=0 // pred_check_branch
    %348 = sbr.rel (0) target = $region25
  $region24: #{transformer_forward.27} parent=0 // pred_region
    _
  $region25: #{transformer_forward.27} parent=0 // pred_fallthru
    _
  // Predicated region
  $region26: #{transformer_forward.27} parent=0 // pred_check
    _
  $region27: #{transformer_forward.27} parent=0 // pred_check_branch
    %350 = sbr.rel (0) target = $region29
  $region28: #{transformer_forward.27} parent=0 // pred_region
    _
  $region29: #{transformer_forward.27} parent=0 // pred_fallthru
    _

// kernel: transformer_forward.38
$region0: #{transformer_forward.38}
  #allocation0 [shape = 'u32[]', space=smem, size = 0x4, offset = 0x4, fixed_abs, tag = 'smem constant byte address 0x4 - core index']
  #allocation1 [shape = 'u32[144,128]{1,0:T(1,128)}', space=vmem, size = 0x12000, scoped, tag = 'internal scratch']
  %s0 = inlined_call_operand.vmem [shape: f32[32,64], index: 0, kind: input, shape index: {}]
  %s1 = inlined_call_operand.vmem [shape: f32[1,64], index: 1, kind: input, shape index: {}]
  %s2 = inlined_call_operand.vmem [shape: f32[1,64], index: 2, kind: input, shape index: {}]
  %s3 = inlined_call_operand.vmem [shape: f32[32,64], index: 3, kind: output, shape index: {}]
  %s4 = sld [smem:[#allocation0]]
  $region22: #{transformer_forward.38} parent=0
    _
  %s6 = ssub.s32 1, %s4
  %s7 = scalar_select 0, %s6, %s4
  // Predicated region
  $region2: #{transformer_forward.38} parent=0 // pred_check
    _
  $region3: #{transformer_forward.38} parent=0 // pred_check_branch
    %9 = sbr.rel (0) target = $region5
  $region4: #{transformer_forward.38} parent=0 // pred_region
    _
  $region5: #{transformer_forward.38} parent=0 // pred_fallthru
    _
  // Predicated region
  $region6: #{transformer_forward.38} parent=0 // pred_check
    _
  $region7: #{transformer_forward.38} parent=0 // pred_check_branch
    %11 = sbr.rel (0) target = $region9
  $region8: #{transformer_forward.38} parent=0 // pred_region
    _
  $region9: #{transformer_forward.38} parent=0 // pred_fallthru
    _
  // Predicated region
  $region10: #{transformer_forward.38} parent=0 // pred_check
    _
  $region11: #{transformer_forward.38} parent=0 // pred_check_branch
    %13 = sbr.rel (0) target = $region13
  $region12: #{transformer_forward.38} parent=0 // pred_region
    _
  $region13: #{transformer_forward.38} parent=0 // pred_fallthru
    _
  %v14 = vld [vmem:[%s0] sm:$0xff]
  %v15 = vld [vmem:[%s0 + $0x8] sm:$0xff]
  %v16 = vld [vmem:[%s0 + $0x10] sm:$0xff]
  %v17 = vld [vmem:[%s0 + $0x18] sm:$0xff]
  %vm18 = vcmask 523264
  %v19 = vsel %vm18, %v14, 0.0
  %20 = vadd.xlane.f32.xlu0 %v19
  %v21 = vpop.xlane.xlu0 %20
  %v22 = vsel %vm18, %v15, 0.0
  %23 = vadd.xlane.f32.xlu0 %v22
  %v24 = vpop.xlane.xlu0 %23
  %v25 = vsel %vm18, %v16, 0.0
  %26 = vadd.xlane.f32.xlu0 %v25
  %v27 = vpop.xlane.xlu0 %26
  %v28 = vsel %vm18, %v17, 0.0
  %29 = vadd.xlane.f32.xlu0 %v28
  %v30 = vpop.xlane.xlu0 %29
  %v31 = vrcp.pop 64.0
  %v32 = vmul.f32 %v21, %v31
  %v33 = vmul.f32 %v24, %v31
  %v34 = vmul.f32 %v27, %v31
  %v35 = vmul.f32 %v30, %v31
  %v36 = vsub.f32 %v14, %v32
  %v37 = vsub.f32 %v15, %v33
  %v38 = vsub.f32 %v16, %v34
  %v39 = vsub.f32 %v17, %v35
  %v40 = vmul.f32 %v36, %v36
  %v41 = vmul.f32 %v37, %v37
  %v42 = vmul.f32 %v38, %v38
  %v43 = vmul.f32 %v39, %v39
  %v44 = vsel %vm18, %v40, 0.0
  %45 = vadd.xlane.f32.xlu0 %v44
  %v46 = vpop.xlane.xlu0 %45
  %v47 = vsel %vm18, %v41, 0.0
  %48 = vadd.xlane.f32.xlu0 %v47
  %v49 = vpop.xlane.xlu0 %48
  %v50 = vsel %vm18, %v42, 0.0
  %51 = vadd.xlane.f32.xlu0 %v50
  %v52 = vpop.xlane.xlu0 %51
  %v53 = vsel %vm18, %v43, 0.0
  %54 = vadd.xlane.f32.xlu0 %v53
  %v55 = vpop.xlane.xlu0 %54
  %v56 = vmul.f32 %v46, %v31
  %v57 = vmul.f32 %v49, %v31
  %v58 = vmul.f32 %v52, %v31
  %v59 = vmul.f32 %v55, %v31
  %v60 = vadd.f32 %v56, 1e-05
  %v61 = vadd.f32 %v57, 1e-05
  %v62 = vadd.f32 %v58, 1e-05
  %v63 = vadd.f32 %v59, 1e-05
  %v64 = vrsqrt.pop %v60
  %v65 = vrsqrt.pop %v61
  %v66 = vrsqrt.pop %v62
  %v67 = vrsqrt.pop %v63
  %v68 = vmul.f32 %v36, %v64
  %v69 = vmul.f32 %v37, %v65
  %v70 = vmul.f32 %v38, %v66
  %v71 = vmul.f32 %v39, %v67
  %v72 = vld [vmem:[%s1] sm:$0x1]
  %v74 = vlaneseq
  %v75 = vshrl.u32 %v74, 7
  %v76 = vsub.s32 0, %v75
  %v77 = vrot.slane %v72, %v76
  %v79 = vmul.f32 %v68, %v77
  %v80 = vmul.f32 %v69, %v77
  %v81 = vmul.f32 %v70, %v77
  %v82 = vmul.f32 %v71, %v77
  %v83 = vld [vmem:[%s2] sm:$0x1]
  %v85 = vlaneseq
  %v86 = vshrl.u32 %v85, 7
  %v87 = vsub.s32 0, %v86
  %v88 = vrot.slane %v83, %v87
  %v90 = vadd.f32 %v79, %v88
  %v91 = vadd.f32 %v80, %v88
  %v92 = vadd.f32 %v81, %v88
  %v93 = vadd.f32 %v82, %v88
  %94 = vst.msk [vmem:[%s3] sm:$0xff] %vm18, %v90
  %95 = vst.msk [vmem:[%s3 + $0x8] sm:$0xff] %vm18, %v91
  %96 = vst.msk [vmem:[%s3 + $0x10] sm:$0xff] %vm18, %v92
  %97 = vst.msk [vmem:[%s3 + $0x18] sm:$0xff] %vm18, %v93
  // Predicated region
  $region14: #{transformer_forward.38} parent=0 // pred_check
    _
  $region15: #{transformer_forward.38} parent=0 // pred_check_branch
    %99 = sbr.rel (0) target = $region17
  $region16: #{transformer_forward.38} parent=0 // pred_region
    _
  $region17: #{transformer_forward.38} parent=0 // pred_fallthru
    _
  // Predicated region
  $region18: #{transformer_forward.38} parent=0 // pred_check
    _
  $region19: #{transformer_forward.38} parent=0 // pred_check_branch
    %101 = sbr.rel (0) target = $region21
  $region20: #{transformer_forward.38} parent=0 // pred_region
    _
  $region21: #{transformer_forward.38} parent=0 // pred_fallthru
    _

// kernel: transformer_forward.28
$region0: #{transformer_forward.28}
  #allocation0 [shape = 'u32[]', space=smem, size = 0x4, offset = 0x4, fixed_abs, tag = 'smem constant byte address 0x4 - core index']
  #allocation1 [shape = 'u32[144,128]{1,0:T(1,128)}', space=vmem, size = 0x12000, scoped, tag = 'internal scratch']
  #allocation2 [shape = 'f32[32,128]{1,0:T(8,128)}', space=vmem, size = 0x4000, scoped, tag = 'scratch operand']
  %s0 = inlined_call_operand.vmem [shape: bf16[32,256], index: 0, kind: input, shape index: {}]
  %s1 = inlined_call_operand.vmem [shape: bf16[256,128], index: 1, kind: input, shape index: {}]
  %s2 = inlined_call_operand.vmem [shape: f32[1,128], index: 2, kind: input, shape index: {}]
  %s3 = inlined_call_operand.vmem [shape: f32[32,128], index: 3, kind: input, shape index: {}]
  %s4 = inlined_call_operand.vmem [shape: f32[32,128], index: 4, kind: output, shape index: {}]
  %s5 = sld [smem:[#allocation0]]
  $region34: #{transformer_forward.28} parent=0
    _
  %s7 = ssub.s32 1, %s5
  %s8 = scalar_select 0, %s7, %s5
  // Predicated region
  $region2: #{transformer_forward.28} parent=0 // pred_check
    _
  $region3: #{transformer_forward.28} parent=0 // pred_check_branch
    %10 = sbr.rel (0) target = $region5
  $region4: #{transformer_forward.28} parent=0 // pred_region
    _
  $region5: #{transformer_forward.28} parent=0 // pred_fallthru
    _
  // Predicated region
  $region6: #{transformer_forward.28} parent=0 // pred_check
    _
  $region7: #{transformer_forward.28} parent=0 // pred_check_branch
    %12 = sbr.rel (0) target = $region9
  $region8: #{transformer_forward.28} parent=0 // pred_region
    _
  $region9: #{transformer_forward.28} parent=0 // pred_fallthru
    _
  // Predicated region
  $region10: #{transformer_forward.28} parent=0 // pred_check
    _
  $region11: #{transformer_forward.28} parent=0 // pred_check_branch
    %14 = sbr.rel (0) target = $region13
  $region12: #{transformer_forward.28} parent=0 // pred_region
    _
  $region13: #{transformer_forward.28} parent=0 // pred_fallthru
    _
  // Predicated region
  $region14: #{transformer_forward.28} parent=0 // pred_check
    _
  $region15: #{transformer_forward.28} parent=0 // pred_check_branch
    %16 = sbr.rel (0) target = $region17
  $region16: #{transformer_forward.28} parent=0 // pred_region
    _
  $region17: #{transformer_forward.28} parent=0 // pred_fallthru
    _
  %p18 = scmp.eq.s32.totalorder 0, 0
  // Predicated region
  $region18: #{transformer_forward.28} parent=0 // pred_check
    %p19 = pneg %p18
  $region19: #{transformer_forward.28} parent=0 // pred_check_branch
    %21 = sbr.rel (%p19) target = $region21
  $region20: #{transformer_forward.28} parent=0 // pred_region
    %22 = vst [vmem:[#allocation2] sm:$0xff] 0.0
    %23 = vst [vmem:[#allocation2 + $0x8] sm:$0xff] 0.0
    %24 = vst [vmem:[#allocation2 + $0x10] sm:$0xff] 0.0
    %25 = vst [vmem:[#allocation2 + $0x18] sm:$0xff] 0.0
  $region21: #{transformer_forward.28} parent=0 // pred_fallthru
    _
  %v26 = vld [vmem:[#allocation2] sm:$0xff]
  %v27 = vld [vmem:[#allocation2 + $0x8] sm:$0xff]
  %v28 = vld [vmem:[#allocation2 + $0x10] sm:$0xff]
  %v29 = vld [vmem:[#allocation2 + $0x18] sm:$0xff]
  %v30 = vld [vmem:[%s0] sm:$0xff]
  %v31 = vld [vmem:[%s0 + $0x8] sm:$0xff]
  %v32 = vld [vmem:[%s0 + $0x10] sm:$0xff]
  %v33 = vld [vmem:[%s0 + $0x18] sm:$0xff]
  %v34 = vld [vmem:[%s1] sm:$0xf]
  %v35 = vld [vmem:[%s1 + $0x4] sm:$0xf]
  %v36 = vld [vmem:[%s1 + $0x8] sm:$0xf]
  %v37 = vld [vmem:[%s1 + $0xc] sm:$0xf]
  %v38 = vld [vmem:[%s1 + $0x10] sm:$0xf]
  %v39 = vld [vmem:[%s1 + $0x14] sm:$0xf]
  %v40 = vld [vmem:[%s1 + $0x18] sm:$0xf]
  %v41 = vld [vmem:[%s1 + $0x1c] sm:$0xf]
  %v42 = vld [vmem:[%s1 + $0x20] sm:$0xf]
  %v43 = vld [vmem:[%s1 + $0x24] sm:$0xf]
  %v44 = vld [vmem:[%s1 + $0x28] sm:$0xf]
  %v45 = vld [vmem:[%s1 + $0x2c] sm:$0xf]
  %v46 = vld [vmem:[%s1 + $0x30] sm:$0xf]
  %v47 = vld [vmem:[%s1 + $0x34] sm:$0xf]
  %v48 = vld [vmem:[%s1 + $0x38] sm:$0xf]
  %v49 = vld [vmem:[%s1 + $0x3c] sm:$0xf]
  %v50 = vld [vmem:[%s1 + $0x40] sm:$0xf]
  %v51 = vld [vmem:[%s1 + $0x44] sm:$0xf]
  %v52 = vld [vmem:[%s1 + $0x48] sm:$0xf]
  %v53 = vld [vmem:[%s1 + $0x4c] sm:$0xf]
  %v54 = vld [vmem:[%s1 + $0x50] sm:$0xf]
  %v55 = vld [vmem:[%s1 + $0x54] sm:$0xf]
  %v56 = vld [vmem:[%s1 + $0x58] sm:$0xf]
  %v57 = vld [vmem:[%s1 + $0x5c] sm:$0xf]
  %v58 = vld [vmem:[%s1 + $0x60] sm:$0xf]
  %v59 = vld [vmem:[%s1 + $0x64] sm:$0xf]
  %v60 = vld [vmem:[%s1 + $0x68] sm:$0xf]
  %v61 = vld [vmem:[%s1 + $0x6c] sm:$0xf]
  %v62 = vld [vmem:[%s1 + $0x70] sm:$0xf]
  %v63 = vld [vmem:[%s1 + $0x74] sm:$0xf]
  %v64 = vld [vmem:[%s1 + $0x78] sm:$0xf]
  %v65 = vld [vmem:[%s1 + $0x7c] sm:$0xf]
  %v70 = vunpack.c.l.b16 %v30
  %v71 = vunpack.c.h.b16 %v30
  %v72 = vunpack.c.l.b16 %v31
  %v73 = vunpack.c.h.b16 %v31
  %v74 = vunpack.c.l.b16 %v32
  %v75 = vunpack.c.h.b16 %v32
  %v76 = vunpack.c.l.b16 %v33
  %v77 = vunpack.c.h.b16 %v33
  %v78 = vpack.c.b16 %v72, %v70
  %v79 = vpack.c.b16 %v73, %v71
  %v80 = vpack.c.b16 %v76, %v74
  %v81 = vpack.c.b16 %v77, %v75
  %v118 = vunpack.c.l.b16 %v34
  %v119 = vunpack.c.l.b16 %v35
  %v120 = vunpack.c.l.b16 %v36
  %v121 = vunpack.c.l.b16 %v37
  %v122 = vunpack.c.l.b16 %v38
  %v123 = vunpack.c.l.b16 %v39
  %v124 = vunpack.c.l.b16 %v40
  %v125 = vunpack.c.l.b16 %v41
  %v126 = vunpack.c.l.b16 %v42
  %v127 = vunpack.c.l.b16 %v43
  %v128 = vunpack.c.l.b16 %v44
  %v129 = vunpack.c.l.b16 %v45
  %v130 = vunpack.c.l.b16 %v46
  %v131 = vunpack.c.l.b16 %v47
  %v132 = vunpack.c.l.b16 %v48
  %v133 = vunpack.c.l.b16 %v49
  %v134 = vunpack.c.l.b16 %v50
  %v135 = vunpack.c.l.b16 %v51
  %v136 = vunpack.c.l.b16 %v52
  %v137 = vunpack.c.l.b16 %v53
  %v138 = vunpack.c.l.b16 %v54
  %v139 = vunpack.c.l.b16 %v55
  %v140 = vunpack.c.l.b16 %v56
  %v141 = vunpack.c.l.b16 %v57
  %v142 = vunpack.c.l.b16 %v58
  %v143 = vunpack.c.l.b16 %v59
  %v144 = vunpack.c.l.b16 %v60
  %v145 = vunpack.c.l.b16 %v61
  %v146 = vunpack.c.l.b16 %v62
  %v147 = vunpack.c.l.b16 %v63
  %v148 = vunpack.c.l.b16 %v64
  %v149 = vunpack.c.l.b16 %v65
  %v150 = vpack.c.b16 %v119, %v118
  %v151 = vpack.c.b16 %v121, %v120
  %v152 = vpack.c.b16 %v123, %v122
  %v153 = vpack.c.b16 %v125, %v124
  %v154 = vpack.c.b16 %v127, %v126
  %v155 = vpack.c.b16 %v129, %v128
  %v156 = vpack.c.b16 %v131, %v130
  %v157 = vpack.c.b16 %v133, %v132
  %v158 = vpack.c.b16 %v135, %v134
  %v159 = vpack.c.b16 %v137, %v136
  %v160 = vpack.c.b16 %v139, %v138
  %v161 = vpack.c.b16 %v141, %v140
  %v162 = vpack.c.b16 %v143, %v142
  %v163 = vpack.c.b16 %v145, %v144
  %v164 = vpack.c.b16 %v147, %v146
  %v165 = vpack.c.b16 %v149, %v148
  %182 = vmatprep.subr.bf16.mxu0 0
  %183 = vmatpush1.bf16.msra.mxu0 %v150
  %184 = vmatprep.subr.bf16.mxu0 0
  %185 = vmatpush1.bf16.msra.mxu0 %v151
  %186 = vmatprep.subr.bf16.mxu0 0
  %187 = vmatpush1.bf16.msra.mxu0 %v152
  %188 = vmatprep.subr.bf16.mxu0 0
  %189 = vmatpush1.bf16.msra.mxu0 %v153
  %190 = vmatprep.subr.bf16.mxu0 0
  %191 = vmatpush1.bf16.msra.mxu0 %v154
  %192 = vmatprep.subr.bf16.mxu0 0
  %193 = vmatpush1.bf16.msra.mxu0 %v155
  %194 = vmatprep.subr.bf16.mxu0 0
  %195 = vmatpush1.bf16.msra.mxu0 %v156
  %196 = vmatprep.subr.bf16.mxu0 0
  %197 = vmatpush1.bf16.msra.mxu0 %v157
  %198 = vmatprep.subr.bf16.mxu0 0
  %199 = vmatpush1.bf16.msra.mxu0 %v158
  %200 = vmatprep.subr.bf16.mxu0 0
  %201 = vmatpush1.bf16.msra.mxu0 %v159
  %202 = vmatprep.subr.bf16.mxu0 0
  %203 = vmatpush1.bf16.msra.mxu0 %v160
  %204 = vmatprep.subr.bf16.mxu0 0
  %205 = vmatpush1.bf16.msra.mxu0 %v161
  %206 = vmatprep.subr.bf16.mxu0 0
  %207 = vmatpush1.bf16.msra.mxu0 %v162
  %208 = vmatprep.subr.bf16.mxu0 0
  %209 = vmatpush1.bf16.msra.mxu0 %v163
  %210 = vmatprep.subr.bf16.mxu0 0
  %211 = vmatpush1.bf16.msra.mxu0 %v164
  %212 = vmatprep.subr.bf16.mxu0 0
  %213 = vmatpush1.bf16.msra.mxu0 %v165
  %214 = vmatprep.mubr.bf16.mxu0 %v79
  %215 = vmatmul.mubr.bf16.gmra.mrb[0].mxu0 %v78
  %v216 = vpop.f32.mrb[0].mxu0
  %v217 = vadd.f32 0.0, %v216
  %v218 = vpop.f32.mrb[0].mxu0
  %v219 = vpop.f32.mrb[0].mxu0
  %v220 = vadd.f32 0.0, %v219
  %v221 = vpop.f32.mrb[0].mxu0
  %222 = vmatprep.mubr.bf16.mxu0 %v81
  %223 = vmatmul.mubr.bf16.gmra.mrb[0].mxu0 %v80
  %v224 = vpop.f32.mrb[0].mxu0
  %v225 = vadd.f32 0.0, %v224
  %v226 = vpop.f32.mrb[0].mxu0
  %v227 = vpop.f32.mrb[0].mxu0
  %v228 = vadd.f32 0.0, %v227
  %v229 = vpop.f32.mrb[0].mxu0
  %230 = vdwg.mxu0
  %v231 = vadd.f32 %v26, %v217
  %v232 = vadd.f32 %v27, %v220
  %v233 = vadd.f32 %v28, %v225
  %v234 = vadd.f32 %v29, %v228
  %235 = vst [vmem:[#allocation2] sm:$0xff] %v231
  %236 = vst [vmem:[#allocation2 + $0x8] sm:$0xff] %v232
  %237 = vst [vmem:[#allocation2 + $0x10] sm:$0xff] %v233
  %238 = vst [vmem:[#allocation2 + $0x18] sm:$0xff] %v234
  // Predicated region
  $region22: #{transformer_forward.28} parent=0 // pred_check
    %p239 = pneg %p18
  $region23: #{transformer_forward.28} parent=0 // pred_check_branch
    %241 = sbr.rel (%p239) target = $region25
  $region24: #{transformer_forward.28} parent=0 // pred_region
    %v242 = vld [vmem:[#allocation2] sm:$0xff]
    %v243 = vld [vmem:[#allocation2 + $0x8] sm:$0xff]
    %v244 = vld [vmem:[#allocation2 + $0x10] sm:$0xff]
    %v245 = vld [vmem:[#allocation2 + $0x18] sm:$0xff]
    %v246 = vld [vmem:[%s2] sm:$0x1]
    %v248 = vlaneseq
    %v249 = vshrl.u32 %v248, 7
    %v250 = vsub.s32 0, %v249
    %v251 = vrot.slane %v246, %v250
    %v253 = vadd.f32 %v242, %v251
    %v254 = vadd.f32 %v243, %v251
    %v255 = vadd.f32 %v244, %v251
    %v256 = vadd.f32 %v245, %v251
    %v257 = vld [vmem:[%s3] sm:$0xff]
    %v258 = vld [vmem:[%s3 + $0x8] sm:$0xff]
    %v259 = vld [vmem:[%s3 + $0x10] sm:$0xff]
    %v260 = vld [vmem:[%s3 + $0x18] sm:$0xff]
    %v261 = vadd.f32 %v253, %v257
    %v262 = vadd.f32 %v254, %v258
    %v263 = vadd.f32 %v255, %v259
    %v264 = vadd.f32 %v256, %v260
    %265 = vst [vmem:[%s4] sm:$0xff] %v261
    %266 = vst [vmem:[%s4 + $0x8] sm:$0xff] %v262
    %267 = vst [vmem:[%s4 + $0x10] sm:$0xff] %v263
    %268 = vst [vmem:[%s4 + $0x18] sm:$0xff] %v264
  $region25: #{transformer_forward.28} parent=0 // pred_fallthru
    _
  // Predicated region
  $region26: #{transformer_forward.28} parent=0 // pred_check
    _
  $region27: #{transformer_forward.28} parent=0 // pred_check_branch
    %270 = sbr.rel (0) target = $region29
  $region28: #{transformer_forward.28} parent=0 // pred_region
    _
  $region29: #{transformer_forward.28} parent=0 // pred_fallthru
    _
  // Predicated region
  $region30: #{transformer_forward.28} parent=0 // pred_check
    _
  $region31: #{transformer_forward.28} parent=0 // pred_check_branch
    %272 = sbr.rel (0) target = $region33
  $region32: #{transformer_forward.28} parent=0 // pred_region
    _
  $region33: #{transformer_forward.28} parent=0 // pred_fallthru
    _

// kernel: transformer_forward.39
$region0: #{transformer_forward.39}
  #allocation0 [shape = 'u32[]', space=smem, size = 0x4, offset = 0x4, fixed_abs, tag = 'smem constant byte address 0x4 - core index']
  #allocation1 [shape = 'u32[144,128]{1,0:T(1,128)}', space=vmem, size = 0x12000, scoped, tag = 'internal scratch']
  #allocation2 [shape = 'f32[32,128]{1,0:T(8,128)}', space=vmem, size = 0x4000, scoped, tag = 'scratch operand']
  %s0 = inlined_call_operand.vmem [shape: bf16[32,128], index: 0, kind: input, shape index: {}]
  %s1 = inlined_call_operand.vmem [shape: bf16[128,128], index: 1, kind: input, shape index: {}]
  %s2 = inlined_call_operand.vmem [shape: f32[1,128], index: 2, kind: input, shape index: {}]
  %s3 = inlined_call_operand.hbm [shape: f32[32,128], index: 3, kind: output, shape index: {}]
  %s4 = sld [smem:[#allocation0]]
  $region30: #{transformer_forward.39} parent=0
    _
  %s6 = ssub.s32 1, %s4
  %s7 = scalar_select 0, %s6, %s4
  $region1: #{transformer_forward.39} parent=0
    #allocation3 [shape = 'u8[16384]{0}', space=vmem, size = 0x4000, scoped, tag = 'output window, operand 0, single buffered']
    #allocation4 [shape = 's32[1]{0}', space=sflag, size = 0x4, scoped, tag = 'scoped memory for transformer_forward.39']
    %8 = vsyncpa [#allocation4], 0
    // Predicated region
    $region2: #{transformer_forward.39} parent=1 // pred_check
      _
    $region3: #{transformer_forward.39} parent=1 // pred_check_branch
      %10 = sbr.rel (0) target = $region5
    $region4: #{transformer_forward.39} parent=1 // pred_region
      _
    $region5: #{transformer_forward.39} parent=1 // pred_fallthru
      _
    // Predicated region
    $region6: #{transformer_forward.39} parent=1 // pred_check
      _
    $region7: #{transformer_forward.39} parent=1 // pred_check_branch
      %12 = sbr.rel (0) target = $region9
    $region8: #{transformer_forward.39} parent=1 // pred_region
      _
    $region9: #{transformer_forward.39} parent=1 // pred_fallthru
      _
    // Predicated region
    $region10: #{transformer_forward.39} parent=1 // pred_check
      _
    $region11: #{transformer_forward.39} parent=1 // pred_check_branch
      %14 = sbr.rel (0) target = $region13
    $region12: #{transformer_forward.39} parent=1 // pred_region
      _
    $region13: #{transformer_forward.39} parent=1 // pred_fallthru
      _
    %p16 = scmp.eq.s32.totalorder 0, 0
    // Predicated region
    $region14: #{transformer_forward.39} parent=1 // pred_check
      %p17 = pneg %p16
    $region15: #{transformer_forward.39} parent=1 // pred_check_branch
      %19 = sbr.rel (%p17) target = $region17
    $region16: #{transformer_forward.39} parent=1 // pred_region
      %20 = vst [vmem:[#allocation2] sm:$0xff] 0.0
      %21 = vst [vmem:[#allocation2 + $0x8] sm:$0xff] 0.0
      %22 = vst [vmem:[#allocation2 + $0x10] sm:$0xff] 0.0
      %23 = vst [vmem:[#allocation2 + $0x18] sm:$0xff] 0.0
    $region17: #{transformer_forward.39} parent=1 // pred_fallthru
      _
    %v24 = vld [vmem:[#allocation2] sm:$0xff]
    %v25 = vld [vmem:[#allocation2 + $0x8] sm:$0xff]
    %v26 = vld [vmem:[#allocation2 + $0x10] sm:$0xff]
    %v27 = vld [vmem:[#allocation2 + $0x18] sm:$0xff]
    %v28 = vld [vmem:[%s0] sm:$0xf]
    %v29 = vld [vmem:[%s0 + $0x4] sm:$0xf]
    %v30 = vld [vmem:[%s0 + $0x8] sm:$0xf]
    %v31 = vld [vmem:[%s0 + $0xc] sm:$0xf]
    %v32 = vld [vmem:[%s1] sm:$0xf]
    %v33 = vld [vmem:[%s1 + $0x4] sm:$0xf]
    %v34 = vld [vmem:[%s1 + $0x8] sm:$0xf]
    %v35 = vld [vmem:[%s1 + $0xc] sm:$0xf]
    %v36 = vld [vmem:[%s1 + $0x10] sm:$0xf]
    %v37 = vld [vmem:[%s1 + $0x14] sm:$0xf]
    %v38 = vld [vmem:[%s1 + $0x18] sm:$0xf]
    %v39 = vld [vmem:[%s1 + $0x1c] sm:$0xf]
    %v40 = vld [vmem:[%s1 + $0x20] sm:$0xf]
    %v41 = vld [vmem:[%s1 + $0x24] sm:$0xf]
    %v42 = vld [vmem:[%s1 + $0x28] sm:$0xf]
    %v43 = vld [vmem:[%s1 + $0x2c] sm:$0xf]
    %v44 = vld [vmem:[%s1 + $0x30] sm:$0xf]
    %v45 = vld [vmem:[%s1 + $0x34] sm:$0xf]
    %v46 = vld [vmem:[%s1 + $0x38] sm:$0xf]
    %v47 = vld [vmem:[%s1 + $0x3c] sm:$0xf]
    %v52 = vunpack.c.l.b16 %v28
    %v53 = vunpack.c.l.b16 %v29
    %v54 = vunpack.c.l.b16 %v30
    %v55 = vunpack.c.l.b16 %v31
    %v56 = vpack.c.b16 %v53, %v52
    %v57 = vpack.c.b16 %v55, %v54
    %v76 = vunpack.c.l.b16 %v32
    %v77 = vunpack.c.l.b16 %v33
    %v78 = vunpack.c.l.b16 %v34
    %v79 = vunpack.c.l.b16 %v35
    %v80 = vunpack.c.l.b16 %v36
    %v81 = vunpack.c.l.b16 %v37
    %v82 = vunpack.c.l.b16 %v38
    %v83 = vunpack.c.l.b16 %v39
    %v84 = vunpack.c.l.b16 %v40
    %v85 = vunpack.c.l.b16 %v41
    %v86 = vunpack.c.l.b16 %v42
    %v87 = vunpack.c.l.b16 %v43
    %v88 = vunpack.c.l.b16 %v44
    %v89 = vunpack.c.l.b16 %v45
    %v90 = vunpack.c.l.b16 %v46
    %v91 = vunpack.c.l.b16 %v47
    %v92 = vpack.c.b16 %v77, %v76
    %v93 = vpack.c.b16 %v79, %v78
    %v94 = vpack.c.b16 %v81, %v80
    %v95 = vpack.c.b16 %v83, %v82
    %v96 = vpack.c.b16 %v85, %v84
    %v97 = vpack.c.b16 %v87, %v86
    %v98 = vpack.c.b16 %v89, %v88
    %v99 = vpack.c.b16 %v91, %v90
    %108 = vmatprep.subr.bf16.mxu0 0
    %109 = vmatpush1.bf16.msra.mxu0 %v92
    %110 = vmatprep.subr.bf16.mxu0 0
    %111 = vmatpush1.bf16.msra.mxu0 %v93
    %112 = vmatprep.subr.bf16.mxu0 0
    %113 = vmatpush1.bf16.msra.mxu0 %v94
    %114 = vmatprep.subr.bf16.mxu0 0
    %115 = vmatpush1.bf16.msra.mxu0 %v95
    %116 = vmatprep.subr.bf16.mxu0 0
    %117 = vmatpush1.bf16.msra.mxu0 %v96
    %118 = vmatprep.subr.bf16.mxu0 0
    %119 = vmatpush1.bf16.msra.mxu0 %v97
    %120 = vmatprep.subr.bf16.mxu0 0
    %121 = vmatpush1.bf16.msra.mxu0 %v98
    %122 = vmatprep.subr.bf16.mxu0 0
    %123 = vmatpush1.bf16.msra.mxu0 %v99
    %124 = vmatprep.subr.bf16.mxu0 0
    %125 = vmatpush1.bf16.msra.mxu0 0
    %126 = vmatprep.subr.bf16.mxu0 0
    %127 = vmatpush1.bf16.msra.mxu0 0
    %128 = vmatprep.subr.bf16.mxu0 0
    %129 = vmatpush1.bf16.msra.mxu0 0
    %130 = vmatprep.subr.bf16.mxu0 0
    %131 = vmatpush1.bf16.msra.mxu0 0
    %132 = vmatprep.subr.bf16.mxu0 0
    %133 = vmatpush1.bf16.msra.mxu0 0
    %134 = vmatprep.subr.bf16.mxu0 0
    %135 = vmatpush1.bf16.msra.mxu0 0
    %136 = vmatprep.subr.bf16.mxu0 0
    %137 = vmatpush1.bf16.msra.mxu0 0
    %138 = vmatprep.subr.bf16.mxu0 0
    %139 = vmatpush1.bf16.msra.mxu0 0
    %140 = vmatprep.mubr.bf16.mxu0 0
    %141 = vmatmul.mubr.bf16.gmra.mrb[0].mxu0 %v56
    %v142 = vpop.f32.mrb[0].mxu0
    %v143 = vadd.f32 0.0, %v142
    %v144 = vpop.f32.mrb[0].mxu0
    %v145 = vpop.f32.mrb[0].mxu0
    %v146 = vadd.f32 0.0, %v145
    %v147 = vpop.f32.mrb[0].mxu0
    %148 = vmatprep.mubr.bf16.mxu0 0
    %149 = vmatmul.mubr.bf16.gmra.mrb[0].mxu0 %v57
    %v150 = vpop.f32.mrb[0].mxu0
    %v151 = vadd.f32 0.0, %v150
    %v152 = vpop.f32.mrb[0].mxu0
    %v153 = vpop.f32.mrb[0].mxu0
    %v154 = vadd.f32 0.0, %v153
    %v155 = vpop.f32.mrb[0].mxu0
    %156 = vdwg.mxu0
    %v157 = vadd.f32 %v24, %v143
    %v158 = vadd.f32 %v25, %v146
    %v159 = vadd.f32 %v26, %v151
    %v160 = vadd.f32 %v27, %v154
    %161 = vst [vmem:[#allocation2] sm:$0xff] %v157
    %162 = vst [vmem:[#allocation2 + $0x8] sm:$0xff] %v158
    %163 = vst [vmem:[#allocation2 + $0x10] sm:$0xff] %v159
    %164 = vst [vmem:[#allocation2 + $0x18] sm:$0xff] %v160
    // Predicated region
    $region18: #{transformer_forward.39} parent=1 // pred_check
      %p165 = pneg %p16
    $region19: #{transformer_forward.39} parent=1 // pred_check_branch
      %167 = sbr.rel (%p165) target = $region21
    $region20: #{transformer_forward.39} parent=1 // pred_region
      %v168 = vld [vmem:[#allocation2] sm:$0xff]
      %v169 = vld [vmem:[#allocation2 + $0x8] sm:$0xff]
      %v170 = vld [vmem:[#allocation2 + $0x10] sm:$0xff]
      %v171 = vld [vmem:[#allocation2 + $0x18] sm:$0xff]
      %v172 = vld [vmem:[%s2] sm:$0x1]
      %v174 = vlaneseq
      %v175 = vshrl.u32 %v174, 7
      %v176 = vsub.s32 0, %v175
      %v177 = vrot.slane %v172, %v176
      %v179 = vadd.f32 %v168, %v177
      %v180 = vadd.f32 %v169, %v177
      %v181 = vadd.f32 %v170, %v177
      %v182 = vadd.f32 %v171, %v177
      %183 = vst [vmem:[#allocation3] sm:$0xff] %v179
      %184 = vst [vmem:[#allocation3 + $0x8] sm:$0xff] %v180
      %185 = vst [vmem:[#allocation3 + $0x10] sm:$0xff] %v181
      %186 = vst [vmem:[#allocation3 + $0x18] sm:$0xff] %v182
    $region21: #{transformer_forward.39} parent=1 // pred_fallthru
      _
    // Predicated region
    $region22: #{transformer_forward.39} parent=1 // pred_check
      _
    $region23: #{transformer_forward.39} parent=1 // pred_check_branch
      %188 = sbr.rel (0) target = $region25
    $region24: #{transformer_forward.39} parent=1 // pred_region
      %s190 = ssub.s32 512, 512
      %191 = vsyncadd [#allocation4], %s190
      %s192 = sshll.u32 [#allocation3], 4
      %s193 = int_to_ptr.vmem [resolvable:$true] %s192
      %198 = dma.vmem_to_hbm [thread:$0]  %s193, 512, %s3, [#allocation4], 128, 128, 8
    $region25: #{transformer_forward.39} parent=1 // pred_fallthru
      _
    // Predicated region
    $region26: #{transformer_forward.39} parent=1 // pred_check
      _
    $region27: #{transformer_forward.39} parent=1 // pred_check_branch
      %200 = sbr.rel (0) target = $region29
    $region28: #{transformer_forward.39} parent=1 // pred_region
      %201 = dma.done [#allocation4], 512
    $region29: #{transformer_forward.39} parent=1 // pred_fallthru
      _
    %202 = vsyncpa [#allocation4], 1

</llo_original>
